<compile_context>
chip_gen: v6e
topology: v6e:2x2x1
jax: 0.10.0
libtpu: 0.0.40
codegen_flags: <defaults>
</compile_context>

<pallas_src>
import jax
import jax.numpy as jnp
from jax.experimental import pallas as pl
from jax.experimental.pallas import tpu as pltpu


# ---------------------------------------------------------------------------
# In-kernel building blocks (operate on plain arrays already loaded from refs)
# ---------------------------------------------------------------------------
def _masked_softmax(e, mask):
    # Rows with zero in-degree would become uniform; self-loops guarantee
    # in-degree >= 1 (documented invariant), matching DGL's reducer.
    logits = jnp.where(mask > 0.0, e, jnp.float32(-1e30))
    m = jnp.max(logits, axis=-1, keepdims=True)
    p = jnp.exp(logits - m)
    inv = pl.reciprocal(jnp.sum(p, axis=-1, keepdims=True), approx=True)
    return p * inv


def _multihead_block(x, adj_tiled, w, b, num_heads, f_out):
    """H GCN_Attention heads sharing one fused projection.

    Returns ([attn_h @ z_h for h in heads], res_all) with res_all = [N, H*f_out].
    """
    n = x.shape[0]
    hf = num_heads * f_out
    # One fused MXU pass: [ z_all | res_all | z_all @ A_head ]
    # (the A-projection + its bias were folded into w/b at pack time).
    zr = jnp.dot(x, w, preferred_element_type=jnp.float32) + b
    z_all = zr[:, :hf]                               # [N, H*f_out]
    res_all = zr[:, hf:2 * hf]                       # [N, H*f_out]
    ds = zr[:, 2 * hf:2 * hf + 2 * num_heads]        # [N, 2H]
    ds_t = jnp.transpose(ds)                         # [2H, N]  (single XLU op)

    # Batched attention logits for all heads: [H*N, N].
    e_blocks = [ds[:, 2 * h + 1:2 * h + 2] + ds_t[2 * h:2 * h + 1, :]
                for h in range(num_heads)]
    e_all = jax.nn.gelu(jnp.concatenate(e_blocks, axis=0), approximate=True)
    attn_all = _masked_softmax(e_all, adj_tiled)     # one softmax over [H*N, N]

    heads = [jnp.dot(attn_all[h * n:(h + 1) * n, :],
                     z_all[:, h * f_out:(h + 1) * f_out],
                     preferred_element_type=jnp.float32)
             for h in range(num_heads)]
    return heads, res_all


def _single_gcn_block(x, adj, w, b, f_out):
    """One GCN_Attention (the per-layer head_linear in 'concate' mode)."""
    zr = jnp.dot(x, w, preferred_element_type=jnp.float32) + b
    z = zr[:, :f_out]
    res = zr[:, f_out:2 * f_out]
    ds = zr[:, 2 * f_out:2 * f_out + 2]              # [N, 2] (src, dst terms)
    ds_t = jnp.transpose(ds)
    e = jax.nn.gelu(ds[:, 1:2] + ds_t[0:1, :], approximate=True)
    attn = _masked_softmax(e, adj)
    return jnp.dot(attn, z, preferred_element_type=jnp.float32) + res


# ---------------------------------------------------------------------------
# Whole-network fused kernel
# ---------------------------------------------------------------------------
def _make_gcnnet_kernel(num_layers, num_heads, hid_dim, out_dim):
    def kernel(*refs):
        x_ref, adj_ref = refs[0], refs[1]
        out_ref = refs[-1]
        pr = refs[2:-1]

        x = x_ref[...]
        adj = adj_ref[...]
        # Hoisted once, reused by every multihead block in the network.
        adj_tiled = jnp.concatenate([adj] * num_heads, axis=0)   # [H*N, N]

        feat = x
        for layer in range(num_layers):
            w_h, b_h, w_f, b_f = (r[...] for r in pr[4 * layer:4 * layer + 4])
            heads, res_all = _multihead_block(feat, adj_tiled, w_h, b_h,
                                              num_heads, hid_dim)
            # Keep the head concat in vregs (no VMEM scratch round-trip).
            cat = jnp.concatenate(heads, axis=1) + res_all       # [N, H*hid]
            feat = _single_gcn_block(cat, adj, w_f, b_f, hid_dim)

        # 'mean'-mode output layer + nn.Linear(7,7) + class softmax.
        w_m, b_m, w_l, b_l = (r[...] for r in pr[4 * num_layers:4 * num_layers + 4])
        heads, res_all = _multihead_block(feat, adj_tiled, w_m, b_m,
                                          num_heads, out_dim)
        n = feat.shape[0]
        acc = jnp.zeros((n, out_dim), jnp.float32)
        for h in range(num_heads):
            acc = acc + heads[h] + res_all[:, h * out_dim:(h + 1) * out_dim]
        mean = acc * jnp.float32(1.0 / num_heads)
        logits = jnp.dot(mean, w_l, preferred_element_type=jnp.float32) + b_l
        # Exact divide for the final class probabilities (rows sum to 1).
        m = jnp.max(logits, axis=-1, keepdims=True)
        p = jnp.exp(logits - m)
        out_ref[...] = p / jnp.sum(p, axis=-1, keepdims=True)

    return kernel


def gcnnet_forward(x, adj, concate_layers, mean_layer):
    """Full GCNNet forward (dense_net=False) as a single pallas_call."""
    n, f_in = x.shape
    num_layers = len(concate_layers)
    hid_dim = (concate_layers[0]["W_fin"].shape[1] - 2) // 2
    num_heads = concate_layers[0]["W_head"].shape[1] // (2 * hid_dim + 2)
    out_dim = mean_layer["W_lin"].shape[1]

    inputs = [x, adj]
    for lp in concate_layers:
        inputs += [lp["W_head"], lp["B_head"], lp["W_fin"], lp["B_fin"]]
    inputs += [mean_layer["W_head"], mean_layer["B_head"],
               mean_layer["W_lin"], mean_layer["B_lin"]]

    # Advisory cost estimate for the XLA scheduler.
    flops, trans = 0, 0
    f = f_in
    for _ in range(num_layers):
        hf = num_heads * hid_dim
        flops += 2 * n * f * (2 * hf + 2 * num_heads)
        flops += num_heads * (2 * n * n * hid_dim + 4 * n * n)
        flops += 2 * n * hf * (2 * hid_dim + 2) + 2 * n * n * hid_dim
        trans += (num_heads + 1) * (2 * n * n + n)
        f = hid_dim
    hfm = num_heads * out_dim
    flops += 2 * n * f * (2 * hfm + 2 * num_heads)
    flops += num_heads * (2 * n * n * out_dim + 4 * n * n)
    flops += 2 * n * out_dim * out_dim
    trans += num_heads * (2 * n * n + n) + n * out_dim
    bytes_accessed = 4 * (sum(int(a.size) for a in inputs) + n * out_dim)

    full = lambda i: (0, 0)
    in_specs = [pl.BlockSpec(a.shape, full) for a in inputs]

    return pl.pallas_call(
        _make_gcnnet_kernel(num_layers, num_heads, hid_dim, out_dim),
        out_shape=jax.ShapeDtypeStruct((n, out_dim), jnp.float32),
        grid=(1,),
        in_specs=in_specs,
        out_specs=pl.BlockSpec((n, out_dim), full),
        compiler_params=pltpu.CompilerParams(dimension_semantics=("arbitrary",)),
        cost_estimate=pl.CostEstimate(flops=flops, transcendentals=trans,
                                      bytes_accessed=bytes_accessed),
    )(*inputs)


# ---------------------------------------------------------------------------
# Parameter init (torch nn.Linear-style) and packing into fused layouts.
# ---------------------------------------------------------------------------
def init_gcn_attention_params(key, in_feat, out_feat):
    k1, k2, k3, k4, k5 = jax.random.split(key, 5)
    lim = 1.0 / jnp.sqrt(jnp.float32(in_feat))
    w_out = jax.random.uniform(k1, (in_feat, out_feat), jnp.float32, -lim, lim)
    b_out = jax.random.uniform(k2, (1, out_feat), jnp.float32, -lim, lim)
    lim_a = 1.0 / jnp.sqrt(jnp.float32(2 * out_feat))
    a = jax.random.uniform(k3, (2 * out_feat, 1), jnp.float32, -lim_a, lim_a)
    w_res = jax.random.uniform(k4, (in_feat, out_feat), jnp.float32, -lim, lim)
    b_res = jax.random.uniform(k5, (1, out_feat), jnp.float32, -lim, lim)
    return dict(w_out=w_out, b_out=b_out,
                a_src=a[:out_feat], a_dst=a[out_feat:],
                w_res=w_res, b_res=b_res)


def _block_diag_attn(head_list):
    num_heads = len(head_list)
    f_out = head_list[0]["w_out"].shape[1]
    blocks = []
    for h, p in enumerate(head_list):
        blk = jnp.zeros((f_out, 2 * num_heads), jnp.float32)
        blk = blk.at[:, 2 * h].set(p["a_src"][:, 0])
        blk = blk.at[:, 2 * h + 1].set(p["a_dst"][:, 0])
        blocks.append(blk)
    return jnp.concatenate(blocks, axis=0)            # [H*f_out, 2H]


def _pack_multihead(head_list):
    w_out_all = jnp.concatenate([p["w_out"] for p in head_list], axis=1)
    w_res_all = jnp.concatenate([p["w_res"] for p in head_list], axis=1)
    b_out_all = jnp.concatenate([p["b_out"] for p in head_list], axis=1)
    b_res_all = jnp.concatenate([p["b_res"] for p in head_list], axis=1)
    a_head = _block_diag_attn(head_list)
    # Fold attention projection: z_all @ A = x @ (W_out_all @ A) + b_out_all @ A
    w = jnp.concatenate([w_out_all, w_res_all, w_out_all @ a_head], axis=1)
    b = jnp.concatenate([b_out_all, b_res_all, b_out_all @ a_head], axis=1)
    return w, b


def _pack_single_gcn(p):
    a = jnp.concatenate([p["a_src"], p["a_dst"]], axis=1)     # [f_out, 2]
    w = jnp.concatenate([p["w_out"], p["w_res"], p["w_out"] @ a], axis=1)
    b = jnp.concatenate([p["b_out"], p["b_res"], p["b_out"] @ a], axis=1)
    return w, b


def pack_concate_layer(head_list, final_p):
    w_head, b_head = _pack_multihead(head_list)
    w_fin, b_fin = _pack_single_gcn(final_p)
    return dict(W_head=w_head, B_head=b_head, W_fin=w_fin, B_fin=b_fin)


def pack_mean_layer(head_list, lin_w, lin_b):
    w_head, b_head = _pack_multihead(head_list)
    return dict(W_head=w_head, B_head=b_head, W_lin=lin_w, B_lin=lin_b)


# ---------------------------------------------------------------------------
# Pure-JAX reference (unpacked per-head params) used to check the kernel.
# ---------------------------------------------------------------------------
def _gcn_attention_ref(x, adj, p):
    z = x @ p["w_out"] + p["b_out"][0]
    e = jax.nn.gelu((z @ p["a_dst"]) + (z @ p["a_src"]).T, approximate=True)
    logits = jnp.where(adj > 0.0, e, -1e30)
    attn = jax.nn.softmax(logits, axis=-1)
    return attn @ z + x @ p["w_res"] + p["b_res"][0]


def gcnnet_ref(x, adj, unpacked_layers, out_heads, lin_w, lin_b):
    feat = x
    for heads, final in unpacked_layers:
        outs = [_gcn_attention_ref(feat, adj, p) for p in heads]
        feat = _gcn_attention_ref(jnp.concatenate(outs, axis=1), adj, final)
    outs = [_gcn_attention_ref(feat, adj, p) for p in out_heads]
    mean = jnp.mean(jnp.stack(outs, axis=0), axis=0)
    return jax.nn.softmax(mean @ lin_w + lin_b[0], axis=-1)


if __name__ == "__main__":
    N, in_feat, hid_dim, out_dim = 8, 16, 32, 7
    num_heads, num_layers = 4, 2

    key = jax.random.PRNGKey(0)
    k_feat, k_adj, k_params = jax.random.split(key, 3)

    feature = jax.random.normal(k_feat, (N, in_feat), jnp.float32)

    # deterministic graph; self-loops guarantee in-degree >= 1
    adj = jax.random.bernoulli(k_adj, 0.4, (N, N)).astype(jnp.float32)
    adj = jnp.maximum(adj, jnp.eye(N, dtype=jnp.float32))

    layer_dims = [(in_feat, hid_dim)] + [(hid_dim, hid_dim)] * (num_layers - 1)
    keys = jax.random.split(k_params, len(layer_dims) + 1)

    unpacked_layers, packed_layers = [], []
    for (fi, fo), kk in zip(layer_dims, keys[:-1]):
        hk = jax.random.split(kk, num_heads + 1)
        heads = [init_gcn_attention_params(hk[h], fi, fo) for h in range(num_heads)]
        final = init_gcn_attention_params(hk[-1], fo * num_heads, fo)
        unpacked_layers.append((heads, final))
        packed_layers.append(pack_concate_layer(heads, final))

    ok = jax.random.split(keys[-1], num_heads + 2)
    out_heads = [init_gcn_attention_params(ok[h], hid_dim, out_dim)
                 for h in range(num_heads)]
    lim = 1.0 / jnp.sqrt(jnp.float32(out_dim))
    lin_w = jax.random.uniform(ok[-2], (out_dim, out_dim), jnp.float32, -lim, lim)
    lin_b = jax.random.uniform(ok[-1], (1, out_dim), jnp.float32, -lim, lim)
    packed_mean = pack_mean_layer(out_heads, lin_w, lin_b)

    fwd = jax.jit(gcnnet_forward)
    out = jax.block_until_ready(fwd(feature, adj, tuple(packed_layers), packed_mean))

    ref = gcnnet_ref(feature, adj, unpacked_layers, out_heads, lin_w, lin_b)
    assert out.shape == (N, out_dim)
    max_err = float(jnp.max(jnp.abs(out - ref)))
    assert jnp.allclose(out, ref, rtol=3e-3, atol=3e-3), max_err
    assert jnp.allclose(jnp.sum(out, axis=1), 1.0, atol=1e-5)

    print("KERNEL_OK")
</pallas_src>

<mosaic_0001>
module attributes {stable_mosaic.version = 11 : i64} {
  func.func @kernel(%arg0: i32, %arg1: memref<8x16xf32, #tpu.memory_space<vmem>>, %arg2: memref<8x8xf32, #tpu.memory_space<vmem>>, %arg3: memref<16x264xf32, #tpu.memory_space<vmem>>, %arg4: memref<1x264xf32, #tpu.memory_space<vmem>>, %arg5: memref<128x66xf32, #tpu.memory_space<vmem>>, %arg6: memref<1x66xf32, #tpu.memory_space<vmem>>, %arg7: memref<32x264xf32, #tpu.memory_space<vmem>>, %arg8: memref<1x264xf32, #tpu.memory_space<vmem>>, %arg9: memref<128x66xf32, #tpu.memory_space<vmem>>, %arg10: memref<1x66xf32, #tpu.memory_space<vmem>>, %arg11: memref<32x64xf32, #tpu.memory_space<vmem>>, %arg12: memref<1x64xf32, #tpu.memory_space<vmem>>, %arg13: memref<7x7xf32, #tpu.memory_space<vmem>>, %arg14: memref<1x7xf32, #tpu.memory_space<vmem>>, %arg15: memref<8x7xf32, #tpu.memory_space<vmem>>) attributes {dimension_semantics = [#tpu.dimension_semantics<arbitrary>], iteration_bounds = array<i64: 1>, scalar_prefetch = 0 : i64, scratch_operands = 0 : i64, tpu.core_type = #tpu.core_type<tc>, window_params = [{pipeline_mode = #tpu.pipeline_mode<synchronous>, transform_indices = @transform_0, window_bounds = array<i64: 8, 16>}, {pipeline_mode = #tpu.pipeline_mode<synchronous>, transform_indices = @transform_1, window_bounds = array<i64: 8, 8>}, {pipeline_mode = #tpu.pipeline_mode<synchronous>, transform_indices = @transform_2, window_bounds = array<i64: 16, 264>}, {pipeline_mode = #tpu.pipeline_mode<synchronous>, transform_indices = @transform_3, window_bounds = array<i64: 1, 264>}, {pipeline_mode = #tpu.pipeline_mode<synchronous>, transform_indices = @transform_4, window_bounds = array<i64: 128, 66>}, {pipeline_mode = #tpu.pipeline_mode<synchronous>, transform_indices = @transform_5, window_bounds = array<i64: 1, 66>}, {pipeline_mode = #tpu.pipeline_mode<synchronous>, transform_indices = @transform_6, window_bounds = array<i64: 32, 264>}, {pipeline_mode = #tpu.pipeline_mode<synchronous>, transform_indices = @transform_7, window_bounds = array<i64: 1, 264>}, {pipeline_mode = #tpu.pipeline_mode<synchronous>, transform_indices = @transform_8, window_bounds = array<i64: 128, 66>}, {pipeline_mode = #tpu.pipeline_mode<synchronous>, transform_indices = @transform_9, window_bounds = array<i64: 1, 66>}, {pipeline_mode = #tpu.pipeline_mode<synchronous>, transform_indices = @transform_10, window_bounds = array<i64: 32, 64>}, {pipeline_mode = #tpu.pipeline_mode<synchronous>, transform_indices = @transform_11, window_bounds = array<i64: 1, 64>}, {pipeline_mode = #tpu.pipeline_mode<synchronous>, transform_indices = @transform_12, window_bounds = array<i64: 7, 7>}, {pipeline_mode = #tpu.pipeline_mode<synchronous>, transform_indices = @transform_13, window_bounds = array<i64: 1, 7>}, {pipeline_mode = #tpu.pipeline_mode<synchronous>, transform_indices = @transform_14, window_bounds = array<i64: 8, 7>}]} {
    %c0 = arith.constant 0 : index
    %c0_0 = arith.constant 0 : index
    %0 = vector.load %arg1[%c0, %c0_0] : memref<8x16xf32, #tpu.memory_space<vmem>>, vector<8x16xf32>
    %c0_1 = arith.constant 0 : index
    %c0_2 = arith.constant 0 : index
    %1 = vector.load %arg2[%c0_1, %c0_2] : memref<8x8xf32, #tpu.memory_space<vmem>>, vector<8x8xf32>
    %2 = tpu.concatenate %1, %1, %1, %1 in 0 : vector<8x8xf32>, vector<8x8xf32>, vector<8x8xf32>, vector<8x8xf32> -> vector<32x8xf32>
    %c0_3 = arith.constant 0 : index
    %c0_4 = arith.constant 0 : index
    %3 = vector.load %arg3[%c0_3, %c0_4] : memref<16x264xf32, #tpu.memory_space<vmem>>, vector<16x264xf32>
    %c0_5 = arith.constant 0 : index
    %c0_6 = arith.constant 0 : index
    %4 = vector.load %arg4[%c0_5, %c0_6] : memref<1x264xf32, #tpu.memory_space<vmem>>, vector<1x264xf32>
    %c0_7 = arith.constant 0 : index
    %c0_8 = arith.constant 0 : index
    %5 = vector.load %arg5[%c0_7, %c0_8] : memref<128x66xf32, #tpu.memory_space<vmem>>, vector<128x66xf32>
    %c0_9 = arith.constant 0 : index
    %c0_10 = arith.constant 0 : index
    %6 = vector.load %arg6[%c0_9, %c0_10] : memref<1x66xf32, #tpu.memory_space<vmem>>, vector<1x66xf32>
    %cst = arith.constant dense<0.000000e+00> : vector<8x264xf32>
    %7 = tpu.matmul %0, %3, %cst {dimension_numbers = #tpu.dot_dimension_numbers<[1], [0], [0], [1], [0, 0, 1, 1], [], []>} : vector<8x16xf32>, vector<16x264xf32>, vector<8x264xf32> -> vector<8x264xf32>
    %8 = vector.broadcast %4 : vector<1x264xf32> to vector<8x264xf32>
    %9 = arith.addf %7, %8 : vector<8x264xf32>
    %10 = vector.extract_strided_slice %9 {offsets = [0, 0], sizes = [8, 128], strides = [1, 1]} : vector<8x264xf32> to vector<8x128xf32>
    %11 = vector.extract_strided_slice %9 {offsets = [0, 128], sizes = [8, 128], strides = [1, 1]} : vector<8x264xf32> to vector<8x128xf32>
    %12 = vector.extract_strided_slice %9 {offsets = [0, 256], sizes = [8, 8], strides = [1, 1]} : vector<8x264xf32> to vector<8x8xf32>
    %13 = tpu.transpose %12, [1, 0] : vector<8x8xf32> -> vector<8x8xf32>
    %14 = vector.extract_strided_slice %12 {offsets = [0, 1], sizes = [8, 1], strides = [1, 1]} : vector<8x8xf32> to vector<8x1xf32>
    %15 = vector.extract_strided_slice %13 {offsets = [0, 0], sizes = [1, 8], strides = [1, 1]} : vector<8x8xf32> to vector<1x8xf32>
    %16 = vector.broadcast %14 : vector<8x1xf32> to vector<8x8xf32>
    %17 = vector.broadcast %15 : vector<1x8xf32> to vector<8x8xf32>
    %18 = arith.addf %16, %17 : vector<8x8xf32>
    %19 = vector.extract_strided_slice %12 {offsets = [0, 3], sizes = [8, 1], strides = [1, 1]} : vector<8x8xf32> to vector<8x1xf32>
    %20 = vector.extract_strided_slice %13 {offsets = [2, 0], sizes = [1, 8], strides = [1, 1]} : vector<8x8xf32> to vector<1x8xf32>
    %21 = vector.broadcast %19 : vector<8x1xf32> to vector<8x8xf32>
    %22 = vector.broadcast %20 : vector<1x8xf32> to vector<8x8xf32>
    %23 = arith.addf %21, %22 : vector<8x8xf32>
    %24 = vector.extract_strided_slice %12 {offsets = [0, 5], sizes = [8, 1], strides = [1, 1]} : vector<8x8xf32> to vector<8x1xf32>
    %25 = vector.extract_strided_slice %13 {offsets = [4, 0], sizes = [1, 8], strides = [1, 1]} : vector<8x8xf32> to vector<1x8xf32>
    %26 = vector.broadcast %24 : vector<8x1xf32> to vector<8x8xf32>
    %27 = vector.broadcast %25 : vector<1x8xf32> to vector<8x8xf32>
    %28 = arith.addf %26, %27 : vector<8x8xf32>
    %29 = vector.extract_strided_slice %12 {offsets = [0, 7], sizes = [8, 1], strides = [1, 1]} : vector<8x8xf32> to vector<8x1xf32>
    %30 = vector.extract_strided_slice %13 {offsets = [6, 0], sizes = [1, 8], strides = [1, 1]} : vector<8x8xf32> to vector<1x8xf32>
    %31 = vector.broadcast %29 : vector<8x1xf32> to vector<8x8xf32>
    %32 = vector.broadcast %30 : vector<1x8xf32> to vector<8x8xf32>
    %33 = arith.addf %31, %32 : vector<8x8xf32>
    %34 = tpu.concatenate %18, %23, %28, %33 in 0 : vector<8x8xf32>, vector<8x8xf32>, vector<8x8xf32>, vector<8x8xf32> -> vector<32x8xf32>
    %35 = arith.mulf %34, %34 : vector<32x8xf32>
    %36 = arith.mulf %34, %35 : vector<32x8xf32>
    %cst_11 = arith.constant 4.471500e-02 : f32
    %37 = vector.broadcast %cst_11 : f32 to vector<32x8xf32>
    %38 = arith.mulf %37, %36 : vector<32x8xf32>
    %39 = arith.addf %34, %38 : vector<32x8xf32>
    %cst_12 = arith.constant 0.797884583 : f32
    %40 = vector.broadcast %cst_12 : f32 to vector<32x8xf32>
    %41 = arith.mulf %40, %39 : vector<32x8xf32>
    %42 = math.tanh %41 : vector<32x8xf32>
    %cst_13 = arith.constant 1.000000e+00 : f32
    %43 = vector.broadcast %cst_13 : f32 to vector<32x8xf32>
    %44 = arith.addf %43, %42 : vector<32x8xf32>
    %cst_14 = arith.constant 5.000000e-01 : f32
    %45 = vector.broadcast %cst_14 : f32 to vector<32x8xf32>
    %46 = arith.mulf %45, %44 : vector<32x8xf32>
    %47 = arith.mulf %34, %46 : vector<32x8xf32>
    %cst_15 = arith.constant 0.000000e+00 : f32
    %48 = vector.broadcast %cst_15 : f32 to vector<32x8xf32>
    %49 = arith.cmpf ogt, %2, %48 : vector<32x8xf32>
    %cst_16 = arith.constant -1.000000e+30 : f32
    %50 = vector.broadcast %cst_16 : f32 to vector<32x8xf32>
    %51 = arith.select %49, %47, %50 : vector<32x8xi1>, vector<32x8xf32>
    %cst_17 = arith.constant dense<0xFF800000> : vector<32xf32>
    %52 = vector.multi_reduction <maximumf>, %51, %cst_17 [1] : vector<32x8xf32> to vector<32xf32>
    %53 = vector.shape_cast %52 : vector<32xf32> to vector<32x1xf32>
    %54 = vector.broadcast %53 : vector<32x1xf32> to vector<32x8xf32>
    %55 = arith.subf %51, %54 : vector<32x8xf32>
    %56 = math.exp %55 : vector<32x8xf32>
    %cst_18 = arith.constant dense<0.000000e+00> : vector<32xf32>
    %57 = vector.multi_reduction <add>, %56, %cst_18 [1] : vector<32x8xf32> to vector<32xf32>
    %58 = vector.shape_cast %57 : vector<32xf32> to vector<32x1xf32>
    %59 = tpu.reciprocal %58 {approx = true} : vector<32x1xf32> -> vector<32x1xf32>
    %60 = vector.broadcast %59 : vector<32x1xf32> to vector<32x8xf32>
    %61 = arith.mulf %56, %60 : vector<32x8xf32>
    %62 = vector.extract_strided_slice %61 {offsets = [0, 0], sizes = [8, 8], strides = [1, 1]} : vector<32x8xf32> to vector<8x8xf32>
    %63 = vector.extract_strided_slice %10 {offsets = [0, 0], sizes = [8, 32], strides = [1, 1]} : vector<8x128xf32> to vector<8x32xf32>
    %cst_19 = arith.constant dense<0.000000e+00> : vector<8x32xf32>
    %64 = tpu.matmul %62, %63, %cst_19 {dimension_numbers = #tpu.dot_dimension_numbers<[1], [0], [0], [1], [0, 0, 1, 1], [], []>} : vector<8x8xf32>, vector<8x32xf32>, vector<8x32xf32> -> vector<8x32xf32>
    %65 = vector.extract_strided_slice %61 {offsets = [8, 0], sizes = [8, 8], strides = [1, 1]} : vector<32x8xf32> to vector<8x8xf32>
    %66 = vector.extract_strided_slice %10 {offsets = [0, 32], sizes = [8, 32], strides = [1, 1]} : vector<8x128xf32> to vector<8x32xf32>
    %cst_20 = arith.constant dense<0.000000e+00> : vector<8x32xf32>
    %67 = tpu.matmul %65, %66, %cst_20 {dimension_numbers = #tpu.dot_dimension_numbers<[1], [0], [0], [1], [0, 0, 1, 1], [], []>} : vector<8x8xf32>, vector<8x32xf32>, vector<8x32xf32> -> vector<8x32xf32>
    %68 = vector.extract_strided_slice %61 {offsets = [16, 0], sizes = [8, 8], strides = [1, 1]} : vector<32x8xf32> to vector<8x8xf32>
    %69 = vector.extract_strided_slice %10 {offsets = [0, 64], sizes = [8, 32], strides = [1, 1]} : vector<8x128xf32> to vector<8x32xf32>
    %cst_21 = arith.constant dense<0.000000e+00> : vector<8x32xf32>
    %70 = tpu.matmul %68, %69, %cst_21 {dimension_numbers = #tpu.dot_dimension_numbers<[1], [0], [0], [1], [0, 0, 1, 1], [], []>} : vector<8x8xf32>, vector<8x32xf32>, vector<8x32xf32> -> vector<8x32xf32>
    %71 = vector.extract_strided_slice %61 {offsets = [24, 0], sizes = [8, 8], strides = [1, 1]} : vector<32x8xf32> to vector<8x8xf32>
    %72 = vector.extract_strided_slice %10 {offsets = [0, 96], sizes = [8, 32], strides = [1, 1]} : vector<8x128xf32> to vector<8x32xf32>
    %cst_22 = arith.constant dense<0.000000e+00> : vector<8x32xf32>
    %73 = tpu.matmul %71, %72, %cst_22 {dimension_numbers = #tpu.dot_dimension_numbers<[1], [0], [0], [1], [0, 0, 1, 1], [], []>} : vector<8x8xf32>, vector<8x32xf32>, vector<8x32xf32> -> vector<8x32xf32>
    %74 = tpu.concatenate %64, %67, %70, %73 in 1 : vector<8x32xf32>, vector<8x32xf32>, vector<8x32xf32>, vector<8x32xf32> -> vector<8x128xf32>
    %75 = arith.addf %74, %11 : vector<8x128xf32>
    %cst_23 = arith.constant dense<0.000000e+00> : vector<8x66xf32>
    %76 = tpu.matmul %75, %5, %cst_23 {dimension_numbers = #tpu.dot_dimension_numbers<[1], [0], [0], [1], [0, 0, 1, 1], [], []>} : vector<8x128xf32>, vector<128x66xf32>, vector<8x66xf32> -> vector<8x66xf32>
    %77 = vector.broadcast %6 : vector<1x66xf32> to vector<8x66xf32>
    %78 = arith.addf %76, %77 : vector<8x66xf32>
    %79 = vector.extract_strided_slice %78 {offsets = [0, 0], sizes = [8, 32], strides = [1, 1]} : vector<8x66xf32> to vector<8x32xf32>
    %80 = vector.extract_strided_slice %78 {offsets = [0, 32], sizes = [8, 32], strides = [1, 1]} : vector<8x66xf32> to vector<8x32xf32>
    %81 = vector.extract_strided_slice %78 {offsets = [0, 64], sizes = [8, 2], strides = [1, 1]} : vector<8x66xf32> to vector<8x2xf32>
    %82 = tpu.transpose %81, [1, 0] : vector<8x2xf32> -> vector<2x8xf32>
    %83 = vector.extract_strided_slice %81 {offsets = [0, 1], sizes = [8, 1], strides = [1, 1]} : vector<8x2xf32> to vector<8x1xf32>
    %84 = vector.extract_strided_slice %82 {offsets = [0, 0], sizes = [1, 8], strides = [1, 1]} : vector<2x8xf32> to vector<1x8xf32>
    %85 = vector.broadcast %83 : vector<8x1xf32> to vector<8x8xf32>
    %86 = vector.broadcast %84 : vector<1x8xf32> to vector<8x8xf32>
    %87 = arith.addf %85, %86 : vector<8x8xf32>
    %88 = arith.mulf %87, %87 : vector<8x8xf32>
    %89 = arith.mulf %87, %88 : vector<8x8xf32>
    %cst_24 = arith.constant 4.471500e-02 : f32
    %90 = vector.broadcast %cst_24 : f32 to vector<8x8xf32>
    %91 = arith.mulf %90, %89 : vector<8x8xf32>
    %92 = arith.addf %87, %91 : vector<8x8xf32>
    %cst_25 = arith.constant 0.797884583 : f32
    %93 = vector.broadcast %cst_25 : f32 to vector<8x8xf32>
    %94 = arith.mulf %93, %92 : vector<8x8xf32>
    %95 = math.tanh %94 : vector<8x8xf32>
    %cst_26 = arith.constant 1.000000e+00 : f32
    %96 = vector.broadcast %cst_26 : f32 to vector<8x8xf32>
    %97 = arith.addf %96, %95 : vector<8x8xf32>
    %cst_27 = arith.constant 5.000000e-01 : f32
    %98 = vector.broadcast %cst_27 : f32 to vector<8x8xf32>
    %99 = arith.mulf %98, %97 : vector<8x8xf32>
    %100 = arith.mulf %87, %99 : vector<8x8xf32>
    %cst_28 = arith.constant 0.000000e+00 : f32
    %101 = vector.broadcast %cst_28 : f32 to vector<8x8xf32>
    %102 = arith.cmpf ogt, %1, %101 : vector<8x8xf32>
    %cst_29 = arith.constant -1.000000e+30 : f32
    %103 = vector.broadcast %cst_29 : f32 to vector<8x8xf32>
    %104 = arith.select %102, %100, %103 : vector<8x8xi1>, vector<8x8xf32>
    %cst_30 = arith.constant dense<0xFF800000> : vector<8xf32>
    %105 = vector.multi_reduction <maximumf>, %104, %cst_30 [1] : vector<8x8xf32> to vector<8xf32>
    %106 = vector.shape_cast %105 : vector<8xf32> to vector<8x1xf32>
    %107 = vector.broadcast %106 : vector<8x1xf32> to vector<8x8xf32>
    %108 = arith.subf %104, %107 : vector<8x8xf32>
    %109 = math.exp %108 : vector<8x8xf32>
    %cst_31 = arith.constant dense<0.000000e+00> : vector<8xf32>
    %110 = vector.multi_reduction <add>, %109, %cst_31 [1] : vector<8x8xf32> to vector<8xf32>
    %111 = vector.shape_cast %110 : vector<8xf32> to vector<8x1xf32>
    %112 = tpu.reciprocal %111 {approx = true} : vector<8x1xf32> -> vector<8x1xf32>
    %113 = vector.broadcast %112 : vector<8x1xf32> to vector<8x8xf32>
    %114 = arith.mulf %109, %113 : vector<8x8xf32>
    %cst_32 = arith.constant dense<0.000000e+00> : vector<8x32xf32>
    %115 = tpu.matmul %114, %79, %cst_32 {dimension_numbers = #tpu.dot_dimension_numbers<[1], [0], [0], [1], [0, 0, 1, 1], [], []>} : vector<8x8xf32>, vector<8x32xf32>, vector<8x32xf32> -> vector<8x32xf32>
    %116 = arith.addf %115, %80 : vector<8x32xf32>
    %c0_33 = arith.constant 0 : index
    %c0_34 = arith.constant 0 : index
    %117 = vector.load %arg7[%c0_33, %c0_34] : memref<32x264xf32, #tpu.memory_space<vmem>>, vector<32x264xf32>
    %c0_35 = arith.constant 0 : index
    %c0_36 = arith.constant 0 : index
    %118 = vector.load %arg8[%c0_35, %c0_36] : memref<1x264xf32, #tpu.memory_space<vmem>>, vector<1x264xf32>
    %c0_37 = arith.constant 0 : index
    %c0_38 = arith.constant 0 : index
    %119 = vector.load %arg9[%c0_37, %c0_38] : memref<128x66xf32, #tpu.memory_space<vmem>>, vector<128x66xf32>
    %c0_39 = arith.constant 0 : index
    %c0_40 = arith.constant 0 : index
    %120 = vector.load %arg10[%c0_39, %c0_40] : memref<1x66xf32, #tpu.memory_space<vmem>>, vector<1x66xf32>
    %cst_41 = arith.constant dense<0.000000e+00> : vector<8x264xf32>
    %121 = tpu.matmul %116, %117, %cst_41 {dimension_numbers = #tpu.dot_dimension_numbers<[1], [0], [0], [1], [0, 0, 1, 1], [], []>} : vector<8x32xf32>, vector<32x264xf32>, vector<8x264xf32> -> vector<8x264xf32>
    %122 = vector.broadcast %118 : vector<1x264xf32> to vector<8x264xf32>
    %123 = arith.addf %121, %122 : vector<8x264xf32>
    %124 = vector.extract_strided_slice %123 {offsets = [0, 0], sizes = [8, 128], strides = [1, 1]} : vector<8x264xf32> to vector<8x128xf32>
    %125 = vector.extract_strided_slice %123 {offsets = [0, 128], sizes = [8, 128], strides = [1, 1]} : vector<8x264xf32> to vector<8x128xf32>
    %126 = vector.extract_strided_slice %123 {offsets = [0, 256], sizes = [8, 8], strides = [1, 1]} : vector<8x264xf32> to vector<8x8xf32>
    %127 = tpu.transpose %126, [1, 0] : vector<8x8xf32> -> vector<8x8xf32>
    %128 = vector.extract_strided_slice %126 {offsets = [0, 1], sizes = [8, 1], strides = [1, 1]} : vector<8x8xf32> to vector<8x1xf32>
    %129 = vector.extract_strided_slice %127 {offsets = [0, 0], sizes = [1, 8], strides = [1, 1]} : vector<8x8xf32> to vector<1x8xf32>
    %130 = vector.broadcast %128 : vector<8x1xf32> to vector<8x8xf32>
    %131 = vector.broadcast %129 : vector<1x8xf32> to vector<8x8xf32>
    %132 = arith.addf %130, %131 : vector<8x8xf32>
    %133 = vector.extract_strided_slice %126 {offsets = [0, 3], sizes = [8, 1], strides = [1, 1]} : vector<8x8xf32> to vector<8x1xf32>
    %134 = vector.extract_strided_slice %127 {offsets = [2, 0], sizes = [1, 8], strides = [1, 1]} : vector<8x8xf32> to vector<1x8xf32>
    %135 = vector.broadcast %133 : vector<8x1xf32> to vector<8x8xf32>
    %136 = vector.broadcast %134 : vector<1x8xf32> to vector<8x8xf32>
    %137 = arith.addf %135, %136 : vector<8x8xf32>
    %138 = vector.extract_strided_slice %126 {offsets = [0, 5], sizes = [8, 1], strides = [1, 1]} : vector<8x8xf32> to vector<8x1xf32>
    %139 = vector.extract_strided_slice %127 {offsets = [4, 0], sizes = [1, 8], strides = [1, 1]} : vector<8x8xf32> to vector<1x8xf32>
    %140 = vector.broadcast %138 : vector<8x1xf32> to vector<8x8xf32>
    %141 = vector.broadcast %139 : vector<1x8xf32> to vector<8x8xf32>
    %142 = arith.addf %140, %141 : vector<8x8xf32>
    %143 = vector.extract_strided_slice %126 {offsets = [0, 7], sizes = [8, 1], strides = [1, 1]} : vector<8x8xf32> to vector<8x1xf32>
    %144 = vector.extract_strided_slice %127 {offsets = [6, 0], sizes = [1, 8], strides = [1, 1]} : vector<8x8xf32> to vector<1x8xf32>
    %145 = vector.broadcast %143 : vector<8x1xf32> to vector<8x8xf32>
    %146 = vector.broadcast %144 : vector<1x8xf32> to vector<8x8xf32>
    %147 = arith.addf %145, %146 : vector<8x8xf32>
    %148 = tpu.concatenate %132, %137, %142, %147 in 0 : vector<8x8xf32>, vector<8x8xf32>, vector<8x8xf32>, vector<8x8xf32> -> vector<32x8xf32>
    %149 = arith.mulf %148, %148 : vector<32x8xf32>
    %150 = arith.mulf %148, %149 : vector<32x8xf32>
    %cst_42 = arith.constant 4.471500e-02 : f32
    %151 = vector.broadcast %cst_42 : f32 to vector<32x8xf32>
    %152 = arith.mulf %151, %150 : vector<32x8xf32>
    %153 = arith.addf %148, %152 : vector<32x8xf32>
    %cst_43 = arith.constant 0.797884583 : f32
    %154 = vector.broadcast %cst_43 : f32 to vector<32x8xf32>
    %155 = arith.mulf %154, %153 : vector<32x8xf32>
    %156 = math.tanh %155 : vector<32x8xf32>
    %cst_44 = arith.constant 1.000000e+00 : f32
    %157 = vector.broadcast %cst_44 : f32 to vector<32x8xf32>
    %158 = arith.addf %157, %156 : vector<32x8xf32>
    %cst_45 = arith.constant 5.000000e-01 : f32
    %159 = vector.broadcast %cst_45 : f32 to vector<32x8xf32>
    %160 = arith.mulf %159, %158 : vector<32x8xf32>
    %161 = arith.mulf %148, %160 : vector<32x8xf32>
    %cst_46 = arith.constant 0.000000e+00 : f32
    %162 = vector.broadcast %cst_46 : f32 to vector<32x8xf32>
    %163 = arith.cmpf ogt, %2, %162 : vector<32x8xf32>
    %cst_47 = arith.constant -1.000000e+30 : f32
    %164 = vector.broadcast %cst_47 : f32 to vector<32x8xf32>
    %165 = arith.select %163, %161, %164 : vector<32x8xi1>, vector<32x8xf32>
    %cst_48 = arith.constant dense<0xFF800000> : vector<32xf32>
    %166 = vector.multi_reduction <maximumf>, %165, %cst_48 [1] : vector<32x8xf32> to vector<32xf32>
    %167 = vector.shape_cast %166 : vector<32xf32> to vector<32x1xf32>
    %168 = vector.broadcast %167 : vector<32x1xf32> to vector<32x8xf32>
    %169 = arith.subf %165, %168 : vector<32x8xf32>
    %170 = math.exp %169 : vector<32x8xf32>
    %cst_49 = arith.constant dense<0.000000e+00> : vector<32xf32>
    %171 = vector.multi_reduction <add>, %170, %cst_49 [1] : vector<32x8xf32> to vector<32xf32>
    %172 = vector.shape_cast %171 : vector<32xf32> to vector<32x1xf32>
    %173 = tpu.reciprocal %172 {approx = true} : vector<32x1xf32> -> vector<32x1xf32>
    %174 = vector.broadcast %173 : vector<32x1xf32> to vector<32x8xf32>
    %175 = arith.mulf %170, %174 : vector<32x8xf32>
    %176 = vector.extract_strided_slice %175 {offsets = [0, 0], sizes = [8, 8], strides = [1, 1]} : vector<32x8xf32> to vector<8x8xf32>
    %177 = vector.extract_strided_slice %124 {offsets = [0, 0], sizes = [8, 32], strides = [1, 1]} : vector<8x128xf32> to vector<8x32xf32>
    %cst_50 = arith.constant dense<0.000000e+00> : vector<8x32xf32>
    %178 = tpu.matmul %176, %177, %cst_50 {dimension_numbers = #tpu.dot_dimension_numbers<[1], [0], [0], [1], [0, 0, 1, 1], [], []>} : vector<8x8xf32>, vector<8x32xf32>, vector<8x32xf32> -> vector<8x32xf32>
    %179 = vector.extract_strided_slice %175 {offsets = [8, 0], sizes = [8, 8], strides = [1, 1]} : vector<32x8xf32> to vector<8x8xf32>
    %180 = vector.extract_strided_slice %124 {offsets = [0, 32], sizes = [8, 32], strides = [1, 1]} : vector<8x128xf32> to vector<8x32xf32>
    %cst_51 = arith.constant dense<0.000000e+00> : vector<8x32xf32>
    %181 = tpu.matmul %179, %180, %cst_51 {dimension_numbers = #tpu.dot_dimension_numbers<[1], [0], [0], [1], [0, 0, 1, 1], [], []>} : vector<8x8xf32>, vector<8x32xf32>, vector<8x32xf32> -> vector<8x32xf32>
    %182 = vector.extract_strided_slice %175 {offsets = [16, 0], sizes = [8, 8], strides = [1, 1]} : vector<32x8xf32> to vector<8x8xf32>
    %183 = vector.extract_strided_slice %124 {offsets = [0, 64], sizes = [8, 32], strides = [1, 1]} : vector<8x128xf32> to vector<8x32xf32>
    %cst_52 = arith.constant dense<0.000000e+00> : vector<8x32xf32>
    %184 = tpu.matmul %182, %183, %cst_52 {dimension_numbers = #tpu.dot_dimension_numbers<[1], [0], [0], [1], [0, 0, 1, 1], [], []>} : vector<8x8xf32>, vector<8x32xf32>, vector<8x32xf32> -> vector<8x32xf32>
    %185 = vector.extract_strided_slice %175 {offsets = [24, 0], sizes = [8, 8], strides = [1, 1]} : vector<32x8xf32> to vector<8x8xf32>
    %186 = vector.extract_strided_slice %124 {offsets = [0, 96], sizes = [8, 32], strides = [1, 1]} : vector<8x128xf32> to vector<8x32xf32>
    %cst_53 = arith.constant dense<0.000000e+00> : vector<8x32xf32>
    %187 = tpu.matmul %185, %186, %cst_53 {dimension_numbers = #tpu.dot_dimension_numbers<[1], [0], [0], [1], [0, 0, 1, 1], [], []>} : vector<8x8xf32>, vector<8x32xf32>, vector<8x32xf32> -> vector<8x32xf32>
    %188 = tpu.concatenate %178, %181, %184, %187 in 1 : vector<8x32xf32>, vector<8x32xf32>, vector<8x32xf32>, vector<8x32xf32> -> vector<8x128xf32>
    %189 = arith.addf %188, %125 : vector<8x128xf32>
    %cst_54 = arith.constant dense<0.000000e+00> : vector<8x66xf32>
    %190 = tpu.matmul %189, %119, %cst_54 {dimension_numbers = #tpu.dot_dimension_numbers<[1], [0], [0], [1], [0, 0, 1, 1], [], []>} : vector<8x128xf32>, vector<128x66xf32>, vector<8x66xf32> -> vector<8x66xf32>
    %191 = vector.broadcast %120 : vector<1x66xf32> to vector<8x66xf32>
    %192 = arith.addf %190, %191 : vector<8x66xf32>
    %193 = vector.extract_strided_slice %192 {offsets = [0, 0], sizes = [8, 32], strides = [1, 1]} : vector<8x66xf32> to vector<8x32xf32>
    %194 = vector.extract_strided_slice %192 {offsets = [0, 32], sizes = [8, 32], strides = [1, 1]} : vector<8x66xf32> to vector<8x32xf32>
    %195 = vector.extract_strided_slice %192 {offsets = [0, 64], sizes = [8, 2], strides = [1, 1]} : vector<8x66xf32> to vector<8x2xf32>
    %196 = tpu.transpose %195, [1, 0] : vector<8x2xf32> -> vector<2x8xf32>
    %197 = vector.extract_strided_slice %195 {offsets = [0, 1], sizes = [8, 1], strides = [1, 1]} : vector<8x2xf32> to vector<8x1xf32>
    %198 = vector.extract_strided_slice %196 {offsets = [0, 0], sizes = [1, 8], strides = [1, 1]} : vector<2x8xf32> to vector<1x8xf32>
    %199 = vector.broadcast %197 : vector<8x1xf32> to vector<8x8xf32>
    %200 = vector.broadcast %198 : vector<1x8xf32> to vector<8x8xf32>
    %201 = arith.addf %199, %200 : vector<8x8xf32>
    %202 = arith.mulf %201, %201 : vector<8x8xf32>
    %203 = arith.mulf %201, %202 : vector<8x8xf32>
    %cst_55 = arith.constant 4.471500e-02 : f32
    %204 = vector.broadcast %cst_55 : f32 to vector<8x8xf32>
    %205 = arith.mulf %204, %203 : vector<8x8xf32>
    %206 = arith.addf %201, %205 : vector<8x8xf32>
    %cst_56 = arith.constant 0.797884583 : f32
    %207 = vector.broadcast %cst_56 : f32 to vector<8x8xf32>
    %208 = arith.mulf %207, %206 : vector<8x8xf32>
    %209 = math.tanh %208 : vector<8x8xf32>
    %cst_57 = arith.constant 1.000000e+00 : f32
    %210 = vector.broadcast %cst_57 : f32 to vector<8x8xf32>
    %211 = arith.addf %210, %209 : vector<8x8xf32>
    %cst_58 = arith.constant 5.000000e-01 : f32
    %212 = vector.broadcast %cst_58 : f32 to vector<8x8xf32>
    %213 = arith.mulf %212, %211 : vector<8x8xf32>
    %214 = arith.mulf %201, %213 : vector<8x8xf32>
    %cst_59 = arith.constant 0.000000e+00 : f32
    %215 = vector.broadcast %cst_59 : f32 to vector<8x8xf32>
    %216 = arith.cmpf ogt, %1, %215 : vector<8x8xf32>
    %cst_60 = arith.constant -1.000000e+30 : f32
    %217 = vector.broadcast %cst_60 : f32 to vector<8x8xf32>
    %218 = arith.select %216, %214, %217 : vector<8x8xi1>, vector<8x8xf32>
    %cst_61 = arith.constant dense<0xFF800000> : vector<8xf32>
    %219 = vector.multi_reduction <maximumf>, %218, %cst_61 [1] : vector<8x8xf32> to vector<8xf32>
    %220 = vector.shape_cast %219 : vector<8xf32> to vector<8x1xf32>
    %221 = vector.broadcast %220 : vector<8x1xf32> to vector<8x8xf32>
    %222 = arith.subf %218, %221 : vector<8x8xf32>
    %223 = math.exp %222 : vector<8x8xf32>
    %cst_62 = arith.constant dense<0.000000e+00> : vector<8xf32>
    %224 = vector.multi_reduction <add>, %223, %cst_62 [1] : vector<8x8xf32> to vector<8xf32>
    %225 = vector.shape_cast %224 : vector<8xf32> to vector<8x1xf32>
    %226 = tpu.reciprocal %225 {approx = true} : vector<8x1xf32> -> vector<8x1xf32>
    %227 = vector.broadcast %226 : vector<8x1xf32> to vector<8x8xf32>
    %228 = arith.mulf %223, %227 : vector<8x8xf32>
    %cst_63 = arith.constant dense<0.000000e+00> : vector<8x32xf32>
    %229 = tpu.matmul %228, %193, %cst_63 {dimension_numbers = #tpu.dot_dimension_numbers<[1], [0], [0], [1], [0, 0, 1, 1], [], []>} : vector<8x8xf32>, vector<8x32xf32>, vector<8x32xf32> -> vector<8x32xf32>
    %230 = arith.addf %229, %194 : vector<8x32xf32>
    %c0_64 = arith.constant 0 : index
    %c0_65 = arith.constant 0 : index
    %231 = vector.load %arg11[%c0_64, %c0_65] : memref<32x64xf32, #tpu.memory_space<vmem>>, vector<32x64xf32>
    %c0_66 = arith.constant 0 : index
    %c0_67 = arith.constant 0 : index
    %232 = vector.load %arg12[%c0_66, %c0_67] : memref<1x64xf32, #tpu.memory_space<vmem>>, vector<1x64xf32>
    %c0_68 = arith.constant 0 : index
    %c0_69 = arith.constant 0 : index
    %233 = vector.load %arg13[%c0_68, %c0_69] : memref<7x7xf32, #tpu.memory_space<vmem>>, vector<7x7xf32>
    %c0_70 = arith.constant 0 : index
    %c0_71 = arith.constant 0 : index
    %234 = vector.load %arg14[%c0_70, %c0_71] : memref<1x7xf32, #tpu.memory_space<vmem>>, vector<1x7xf32>
    %cst_72 = arith.constant dense<0.000000e+00> : vector<8x64xf32>
    %235 = tpu.matmul %230, %231, %cst_72 {dimension_numbers = #tpu.dot_dimension_numbers<[1], [0], [0], [1], [0, 0, 1, 1], [], []>} : vector<8x32xf32>, vector<32x64xf32>, vector<8x64xf32> -> vector<8x64xf32>
    %236 = vector.broadcast %232 : vector<1x64xf32> to vector<8x64xf32>
    %237 = arith.addf %235, %236 : vector<8x64xf32>
    %238 = vector.extract_strided_slice %237 {offsets = [0, 0], sizes = [8, 28], strides = [1, 1]} : vector<8x64xf32> to vector<8x28xf32>
    %239 = vector.extract_strided_slice %237 {offsets = [0, 28], sizes = [8, 28], strides = [1, 1]} : vector<8x64xf32> to vector<8x28xf32>
    %240 = vector.extract_strided_slice %237 {offsets = [0, 56], sizes = [8, 8], strides = [1, 1]} : vector<8x64xf32> to vector<8x8xf32>
    %241 = tpu.transpose %240, [1, 0] : vector<8x8xf32> -> vector<8x8xf32>
    %242 = vector.extract_strided_slice %240 {offsets = [0, 1], sizes = [8, 1], strides = [1, 1]} : vector<8x8xf32> to vector<8x1xf32>
    %243 = vector.extract_strided_slice %241 {offsets = [0, 0], sizes = [1, 8], strides = [1, 1]} : vector<8x8xf32> to vector<1x8xf32>
    %244 = vector.broadcast %242 : vector<8x1xf32> to vector<8x8xf32>
    %245 = vector.broadcast %243 : vector<1x8xf32> to vector<8x8xf32>
    %246 = arith.addf %244, %245 : vector<8x8xf32>
    %247 = vector.extract_strided_slice %240 {offsets = [0, 3], sizes = [8, 1], strides = [1, 1]} : vector<8x8xf32> to vector<8x1xf32>
    %248 = vector.extract_strided_slice %241 {offsets = [2, 0], sizes = [1, 8], strides = [1, 1]} : vector<8x8xf32> to vector<1x8xf32>
    %249 = vector.broadcast %247 : vector<8x1xf32> to vector<8x8xf32>
    %250 = vector.broadcast %248 : vector<1x8xf32> to vector<8x8xf32>
    %251 = arith.addf %249, %250 : vector<8x8xf32>
    %252 = vector.extract_strided_slice %240 {offsets = [0, 5], sizes = [8, 1], strides = [1, 1]} : vector<8x8xf32> to vector<8x1xf32>
    %253 = vector.extract_strided_slice %241 {offsets = [4, 0], sizes = [1, 8], strides = [1, 1]} : vector<8x8xf32> to vector<1x8xf32>
    %254 = vector.broadcast %252 : vector<8x1xf32> to vector<8x8xf32>
    %255 = vector.broadcast %253 : vector<1x8xf32> to vector<8x8xf32>
    %256 = arith.addf %254, %255 : vector<8x8xf32>
    %257 = vector.extract_strided_slice %240 {offsets = [0, 7], sizes = [8, 1], strides = [1, 1]} : vector<8x8xf32> to vector<8x1xf32>
    %258 = vector.extract_strided_slice %241 {offsets = [6, 0], sizes = [1, 8], strides = [1, 1]} : vector<8x8xf32> to vector<1x8xf32>
    %259 = vector.broadcast %257 : vector<8x1xf32> to vector<8x8xf32>
    %260 = vector.broadcast %258 : vector<1x8xf32> to vector<8x8xf32>
    %261 = arith.addf %259, %260 : vector<8x8xf32>
    %262 = tpu.concatenate %246, %251, %256, %261 in 0 : vector<8x8xf32>, vector<8x8xf32>, vector<8x8xf32>, vector<8x8xf32> -> vector<32x8xf32>
    %263 = arith.mulf %262, %262 : vector<32x8xf32>
    %264 = arith.mulf %262, %263 : vector<32x8xf32>
    %cst_73 = arith.constant 4.471500e-02 : f32
    %265 = vector.broadcast %cst_73 : f32 to vector<32x8xf32>
    %266 = arith.mulf %265, %264 : vector<32x8xf32>
    %267 = arith.addf %262, %266 : vector<32x8xf32>
    %cst_74 = arith.constant 0.797884583 : f32
    %268 = vector.broadcast %cst_74 : f32 to vector<32x8xf32>
    %269 = arith.mulf %268, %267 : vector<32x8xf32>
    %270 = math.tanh %269 : vector<32x8xf32>
    %cst_75 = arith.constant 1.000000e+00 : f32
    %271 = vector.broadcast %cst_75 : f32 to vector<32x8xf32>
    %272 = arith.addf %271, %270 : vector<32x8xf32>
    %cst_76 = arith.constant 5.000000e-01 : f32
    %273 = vector.broadcast %cst_76 : f32 to vector<32x8xf32>
    %274 = arith.mulf %273, %272 : vector<32x8xf32>
    %275 = arith.mulf %262, %274 : vector<32x8xf32>
    %cst_77 = arith.constant 0.000000e+00 : f32
    %276 = vector.broadcast %cst_77 : f32 to vector<32x8xf32>
    %277 = arith.cmpf ogt, %2, %276 : vector<32x8xf32>
    %cst_78 = arith.constant -1.000000e+30 : f32
    %278 = vector.broadcast %cst_78 : f32 to vector<32x8xf32>
    %279 = arith.select %277, %275, %278 : vector<32x8xi1>, vector<32x8xf32>
    %cst_79 = arith.constant dense<0xFF800000> : vector<32xf32>
    %280 = vector.multi_reduction <maximumf>, %279, %cst_79 [1] : vector<32x8xf32> to vector<32xf32>
    %281 = vector.shape_cast %280 : vector<32xf32> to vector<32x1xf32>
    %282 = vector.broadcast %281 : vector<32x1xf32> to vector<32x8xf32>
    %283 = arith.subf %279, %282 : vector<32x8xf32>
    %284 = math.exp %283 : vector<32x8xf32>
    %cst_80 = arith.constant dense<0.000000e+00> : vector<32xf32>
    %285 = vector.multi_reduction <add>, %284, %cst_80 [1] : vector<32x8xf32> to vector<32xf32>
    %286 = vector.shape_cast %285 : vector<32xf32> to vector<32x1xf32>
    %287 = tpu.reciprocal %286 {approx = true} : vector<32x1xf32> -> vector<32x1xf32>
    %288 = vector.broadcast %287 : vector<32x1xf32> to vector<32x8xf32>
    %289 = arith.mulf %284, %288 : vector<32x8xf32>
    %290 = vector.extract_strided_slice %289 {offsets = [0, 0], sizes = [8, 8], strides = [1, 1]} : vector<32x8xf32> to vector<8x8xf32>
    %291 = vector.extract_strided_slice %238 {offsets = [0, 0], sizes = [8, 7], strides = [1, 1]} : vector<8x28xf32> to vector<8x7xf32>
    %cst_81 = arith.constant dense<0.000000e+00> : vector<8x7xf32>
    %292 = tpu.matmul %290, %291, %cst_81 {dimension_numbers = #tpu.dot_dimension_numbers<[1], [0], [0], [1], [0, 0, 1, 1], [], []>} : vector<8x8xf32>, vector<8x7xf32>, vector<8x7xf32> -> vector<8x7xf32>
    %293 = vector.extract_strided_slice %289 {offsets = [8, 0], sizes = [8, 8], strides = [1, 1]} : vector<32x8xf32> to vector<8x8xf32>
    %294 = vector.extract_strided_slice %238 {offsets = [0, 7], sizes = [8, 7], strides = [1, 1]} : vector<8x28xf32> to vector<8x7xf32>
    %cst_82 = arith.constant dense<0.000000e+00> : vector<8x7xf32>
    %295 = tpu.matmul %293, %294, %cst_82 {dimension_numbers = #tpu.dot_dimension_numbers<[1], [0], [0], [1], [0, 0, 1, 1], [], []>} : vector<8x8xf32>, vector<8x7xf32>, vector<8x7xf32> -> vector<8x7xf32>
    %296 = vector.extract_strided_slice %289 {offsets = [16, 0], sizes = [8, 8], strides = [1, 1]} : vector<32x8xf32> to vector<8x8xf32>
    %297 = vector.extract_strided_slice %238 {offsets = [0, 14], sizes = [8, 7], strides = [1, 1]} : vector<8x28xf32> to vector<8x7xf32>
    %cst_83 = arith.constant dense<0.000000e+00> : vector<8x7xf32>
    %298 = tpu.matmul %296, %297, %cst_83 {dimension_numbers = #tpu.dot_dimension_numbers<[1], [0], [0], [1], [0, 0, 1, 1], [], []>} : vector<8x8xf32>, vector<8x7xf32>, vector<8x7xf32> -> vector<8x7xf32>
    %299 = vector.extract_strided_slice %289 {offsets = [24, 0], sizes = [8, 8], strides = [1, 1]} : vector<32x8xf32> to vector<8x8xf32>
    %300 = vector.extract_strided_slice %238 {offsets = [0, 21], sizes = [8, 7], strides = [1, 1]} : vector<8x28xf32> to vector<8x7xf32>
    %cst_84 = arith.constant dense<0.000000e+00> : vector<8x7xf32>
    %301 = tpu.matmul %299, %300, %cst_84 {dimension_numbers = #tpu.dot_dimension_numbers<[1], [0], [0], [1], [0, 0, 1, 1], [], []>} : vector<8x8xf32>, vector<8x7xf32>, vector<8x7xf32> -> vector<8x7xf32>
    %cst_85 = arith.constant 0.000000e+00 : f32
    %302 = vector.broadcast %cst_85 : f32 to vector<8x7xf32>
    %303 = arith.addf %302, %292 : vector<8x7xf32>
    %304 = vector.extract_strided_slice %239 {offsets = [0, 0], sizes = [8, 7], strides = [1, 1]} : vector<8x28xf32> to vector<8x7xf32>
    %305 = arith.addf %303, %304 : vector<8x7xf32>
    %306 = arith.addf %305, %295 : vector<8x7xf32>
    %307 = vector.extract_strided_slice %239 {offsets = [0, 7], sizes = [8, 7], strides = [1, 1]} : vector<8x28xf32> to vector<8x7xf32>
    %308 = arith.addf %306, %307 : vector<8x7xf32>
    %309 = arith.addf %308, %298 : vector<8x7xf32>
    %310 = vector.extract_strided_slice %239 {offsets = [0, 14], sizes = [8, 7], strides = [1, 1]} : vector<8x28xf32> to vector<8x7xf32>
    %311 = arith.addf %309, %310 : vector<8x7xf32>
    %312 = arith.addf %311, %301 : vector<8x7xf32>
    %313 = vector.extract_strided_slice %239 {offsets = [0, 21], sizes = [8, 7], strides = [1, 1]} : vector<8x28xf32> to vector<8x7xf32>
    %314 = arith.addf %312, %313 : vector<8x7xf32>
    %cst_86 = arith.constant 2.500000e-01 : f32
    %315 = vector.broadcast %cst_86 : f32 to vector<8x7xf32>
    %316 = arith.mulf %314, %315 : vector<8x7xf32>
    %cst_87 = arith.constant dense<0.000000e+00> : vector<8x7xf32>
    %317 = tpu.matmul %316, %233, %cst_87 {dimension_numbers = #tpu.dot_dimension_numbers<[1], [0], [0], [1], [0, 0, 1, 1], [], []>} : vector<8x7xf32>, vector<7x7xf32>, vector<8x7xf32> -> vector<8x7xf32>
    %318 = vector.broadcast %234 : vector<1x7xf32> to vector<8x7xf32>
    %319 = arith.addf %317, %318 : vector<8x7xf32>
    %cst_88 = arith.constant dense<0xFF800000> : vector<8xf32>
    %320 = vector.multi_reduction <maximumf>, %319, %cst_88 [1] : vector<8x7xf32> to vector<8xf32>
    %321 = vector.shape_cast %320 : vector<8xf32> to vector<8x1xf32>
    %322 = vector.broadcast %321 : vector<8x1xf32> to vector<8x7xf32>
    %323 = arith.subf %319, %322 : vector<8x7xf32>
    %324 = math.exp %323 : vector<8x7xf32>
    %cst_89 = arith.constant dense<0.000000e+00> : vector<8xf32>
    %325 = vector.multi_reduction <add>, %324, %cst_89 [1] : vector<8x7xf32> to vector<8xf32>
    %326 = vector.shape_cast %325 : vector<8xf32> to vector<8x1xf32>
    %327 = vector.broadcast %326 : vector<8x1xf32> to vector<8x7xf32>
    %328 = arith.divf %324, %327 : vector<8x7xf32>
    %c0_90 = arith.constant 0 : index
    %c0_91 = arith.constant 0 : index
    %329 = vector.load %arg15[%c0_90, %c0_91] : memref<8x7xf32, #tpu.memory_space<vmem>>, vector<8x7xf32>
    tpu.vector_store %arg15[%c0_90, %c0_91], %328 {strides = array<i32>} : memref<8x7xf32, #tpu.memory_space<vmem>>, vector<8x7xf32>,
    return
  }
  func.func @transform_0(%arg0: i32) -> (i32, i32) {
    %c0_i32 = arith.constant 0 : i32
    %c0_i32_0 = arith.constant 0 : i32
    %c0_i32_1 = arith.constant 0 : i32
    return %c0_i32, %c0_i32_0 : i32, i32
  }
  func.func @transform_1(%arg0: i32) -> (i32, i32) {
    %c0_i32 = arith.constant 0 : i32
    %c0_i32_0 = arith.constant 0 : i32
    %c0_i32_1 = arith.constant 0 : i32
    return %c0_i32, %c0_i32_0 : i32, i32
  }
  func.func @transform_2(%arg0: i32) -> (i32, i32) {
    %c0_i32 = arith.constant 0 : i32
    %c0_i32_0 = arith.constant 0 : i32
    %c0_i32_1 = arith.constant 0 : i32
    return %c0_i32, %c0_i32_0 : i32, i32
  }
  func.func @transform_3(%arg0: i32) -> (i32, i32) {
    %c0_i32 = arith.constant 0 : i32
    %c0_i32_0 = arith.constant 0 : i32
    %c0_i32_1 = arith.constant 0 : i32
    return %c0_i32, %c0_i32_0 : i32, i32
  }
  func.func @transform_4(%arg0: i32) -> (i32, i32) {
    %c0_i32 = arith.constant 0 : i32
    %c0_i32_0 = arith.constant 0 : i32
    %c0_i32_1 = arith.constant 0 : i32
    return %c0_i32, %c0_i32_0 : i32, i32
  }
  func.func @transform_5(%arg0: i32) -> (i32, i32) {
    %c0_i32 = arith.constant 0 : i32
    %c0_i32_0 = arith.constant 0 : i32
    %c0_i32_1 = arith.constant 0 : i32
    return %c0_i32, %c0_i32_0 : i32, i32
  }
  func.func @transform_6(%arg0: i32) -> (i32, i32) {
    %c0_i32 = arith.constant 0 : i32
    %c0_i32_0 = arith.constant 0 : i32
    %c0_i32_1 = arith.constant 0 : i32
    return %c0_i32, %c0_i32_0 : i32, i32
  }
  func.func @transform_7(%arg0: i32) -> (i32, i32) {
    %c0_i32 = arith.constant 0 : i32
    %c0_i32_0 = arith.constant 0 : i32
    %c0_i32_1 = arith.constant 0 : i32
    return %c0_i32, %c0_i32_0 : i32, i32
  }
  func.func @transform_8(%arg0: i32) -> (i32, i32) {
    %c0_i32 = arith.constant 0 : i32
    %c0_i32_0 = arith.constant 0 : i32
    %c0_i32_1 = arith.constant 0 : i32
    return %c0_i32, %c0_i32_0 : i32, i32
  }
  func.func @transform_9(%arg0: i32) -> (i32, i32) {
    %c0_i32 = arith.constant 0 : i32
    %c0_i32_0 = arith.constant 0 : i32
    %c0_i32_1 = arith.constant 0 : i32
    return %c0_i32, %c0_i32_0 : i32, i32
  }
  func.func @transform_10(%arg0: i32) -> (i32, i32) {
    %c0_i32 = arith.constant 0 : i32
    %c0_i32_0 = arith.constant 0 : i32
    %c0_i32_1 = arith.constant 0 : i32
    return %c0_i32, %c0_i32_0 : i32, i32
  }
  func.func @transform_11(%arg0: i32) -> (i32, i32) {
    %c0_i32 = arith.constant 0 : i32
    %c0_i32_0 = arith.constant 0 : i32
    %c0_i32_1 = arith.constant 0 : i32
    return %c0_i32, %c0_i32_0 : i32, i32
  }
  func.func @transform_12(%arg0: i32) -> (i32, i32) {
    %c0_i32 = arith.constant 0 : i32
    %c0_i32_0 = arith.constant 0 : i32
    %c0_i32_1 = arith.constant 0 : i32
    return %c0_i32, %c0_i32_0 : i32, i32
  }
  func.func @transform_13(%arg0: i32) -> (i32, i32) {
    %c0_i32 = arith.constant 0 : i32
    %c0_i32_0 = arith.constant 0 : i32
    %c0_i32_1 = arith.constant 0 : i32
    return %c0_i32, %c0_i32_0 : i32, i32
  }
  func.func @transform_14(%arg0: i32) -> (i32, i32) {
    %c0_i32 = arith.constant 0 : i32
    %c0_i32_0 = arith.constant 0 : i32
    %c0_i32_1 = arith.constant 0 : i32
    return %c0_i32, %c0_i32_0 : i32, i32
  }
}

</mosaic_0001>

<llo_original>
// kernel: gcnnet_forward.1
$region0: #{gcnnet_forward.1}
  #allocation0 [shape = 'u32[]', space=smem, size = 0x4, offset = 0x4, fixed_abs, tag = 'smem constant byte address 0x4 - core index']
  #allocation1 [shape = 'u32[144,128]{1,0:T(1,128)}', space=vmem, size = 0x12000, scoped, tag = 'internal scratch']
  %s0 = inlined_call_operand.vmem [shape: f32[8,16], index: 0, kind: input, shape index: {}]
  %s1 = inlined_call_operand.vmem [shape: f32[8,8], index: 1, kind: input, shape index: {}]
  %s2 = inlined_call_operand.vmem [shape: f32[16,264], index: 2, kind: input, shape index: {}]
  %s3 = inlined_call_operand.vmem [shape: f32[1,264], index: 3, kind: input, shape index: {}]
  %s4 = inlined_call_operand.vmem [shape: f32[128,66], index: 4, kind: input, shape index: {}]
  %s5 = inlined_call_operand.vmem [shape: f32[1,66], index: 5, kind: input, shape index: {}]
  %s6 = inlined_call_operand.vmem [shape: f32[32,264], index: 6, kind: input, shape index: {}]
  %s7 = inlined_call_operand.vmem [shape: f32[1,264], index: 7, kind: input, shape index: {}]
  %s8 = inlined_call_operand.vmem [shape: f32[128,66], index: 8, kind: input, shape index: {}]
  %s9 = inlined_call_operand.vmem [shape: f32[1,66], index: 9, kind: input, shape index: {}]
  %s10 = inlined_call_operand.vmem [shape: f32[32,64], index: 10, kind: input, shape index: {}]
  %s11 = inlined_call_operand.vmem [shape: f32[1,64], index: 11, kind: input, shape index: {}]
  %s12 = inlined_call_operand.vmem [shape: f32[7,7], index: 12, kind: input, shape index: {}]
  %s13 = inlined_call_operand.vmem [shape: f32[1,7], index: 13, kind: input, shape index: {}]
  %s14 = inlined_call_operand.hbm [shape: f32[8,7], index: 14, kind: output, shape index: {}]
  %s15 = sld [smem:[#allocation0]]
  $region66: #{gcnnet_forward.1} parent=0
    _
  %s17 = ssub.s32 1, %s15
  %s18 = scalar_select 0, %s17, %s15
  $region1: #{gcnnet_forward.1} parent=0
    #allocation2 [shape = 'u8[4096]{0}', space=vmem, size = 0x1000, scoped, tag = 'output window, operand 0, single buffered']
    #allocation3 [shape = 's32[1]{0}', space=sflag, size = 0x4, scoped, tag = 'scoped memory for gcnnet_forward.1']
    %19 = vsyncpa [#allocation3], 0
    // Predicated region
    $region2: #{gcnnet_forward.1} parent=1 // pred_check
      _
    $region3: #{gcnnet_forward.1} parent=1 // pred_check_branch
      %21 = sbr.rel (0) target = $region5
    $region4: #{gcnnet_forward.1} parent=1 // pred_region
      _
    $region5: #{gcnnet_forward.1} parent=1 // pred_fallthru
      _
    // Predicated region
    $region6: #{gcnnet_forward.1} parent=1 // pred_check
      _
    $region7: #{gcnnet_forward.1} parent=1 // pred_check_branch
      %23 = sbr.rel (0) target = $region9
    $region8: #{gcnnet_forward.1} parent=1 // pred_region
      _
    $region9: #{gcnnet_forward.1} parent=1 // pred_fallthru
      _
    // Predicated region
    $region10: #{gcnnet_forward.1} parent=1 // pred_check
      _
    $region11: #{gcnnet_forward.1} parent=1 // pred_check_branch
      %25 = sbr.rel (0) target = $region13
    $region12: #{gcnnet_forward.1} parent=1 // pred_region
      _
    $region13: #{gcnnet_forward.1} parent=1 // pred_fallthru
      _
    // Predicated region
    $region14: #{gcnnet_forward.1} parent=1 // pred_check
      _
    $region15: #{gcnnet_forward.1} parent=1 // pred_check_branch
      %27 = sbr.rel (0) target = $region17
    $region16: #{gcnnet_forward.1} parent=1 // pred_region
      _
    $region17: #{gcnnet_forward.1} parent=1 // pred_fallthru
      _
    // Predicated region
    $region18: #{gcnnet_forward.1} parent=1 // pred_check
      _
    $region19: #{gcnnet_forward.1} parent=1 // pred_check_branch
      %29 = sbr.rel (0) target = $region21
    $region20: #{gcnnet_forward.1} parent=1 // pred_region
      _
    $region21: #{gcnnet_forward.1} parent=1 // pred_fallthru
      _
    // Predicated region
    $region22: #{gcnnet_forward.1} parent=1 // pred_check
      _
    $region23: #{gcnnet_forward.1} parent=1 // pred_check_branch
      %31 = sbr.rel (0) target = $region25
    $region24: #{gcnnet_forward.1} parent=1 // pred_region
      _
    $region25: #{gcnnet_forward.1} parent=1 // pred_fallthru
      _
    // Predicated region
    $region26: #{gcnnet_forward.1} parent=1 // pred_check
      _
    $region27: #{gcnnet_forward.1} parent=1 // pred_check_branch
      %33 = sbr.rel (0) target = $region29
    $region28: #{gcnnet_forward.1} parent=1 // pred_region
      _
    $region29: #{gcnnet_forward.1} parent=1 // pred_fallthru
      _
    // Predicated region
    $region30: #{gcnnet_forward.1} parent=1 // pred_check
      _
    $region31: #{gcnnet_forward.1} parent=1 // pred_check_branch
      %35 = sbr.rel (0) target = $region33
    $region32: #{gcnnet_forward.1} parent=1 // pred_region
      _
    $region33: #{gcnnet_forward.1} parent=1 // pred_fallthru
      _
    // Predicated region
    $region34: #{gcnnet_forward.1} parent=1 // pred_check
      _
    $region35: #{gcnnet_forward.1} parent=1 // pred_check_branch
      %37 = sbr.rel (0) target = $region37
    $region36: #{gcnnet_forward.1} parent=1 // pred_region
      _
    $region37: #{gcnnet_forward.1} parent=1 // pred_fallthru
      _
    // Predicated region
    $region38: #{gcnnet_forward.1} parent=1 // pred_check
      _
    $region39: #{gcnnet_forward.1} parent=1 // pred_check_branch
      %39 = sbr.rel (0) target = $region41
    $region40: #{gcnnet_forward.1} parent=1 // pred_region
      _
    $region41: #{gcnnet_forward.1} parent=1 // pred_fallthru
      _
    // Predicated region
    $region42: #{gcnnet_forward.1} parent=1 // pred_check
      _
    $region43: #{gcnnet_forward.1} parent=1 // pred_check_branch
      %41 = sbr.rel (0) target = $region45
    $region44: #{gcnnet_forward.1} parent=1 // pred_region
      _
    $region45: #{gcnnet_forward.1} parent=1 // pred_fallthru
      _
    // Predicated region
    $region46: #{gcnnet_forward.1} parent=1 // pred_check
      _
    $region47: #{gcnnet_forward.1} parent=1 // pred_check_branch
      %43 = sbr.rel (0) target = $region49
    $region48: #{gcnnet_forward.1} parent=1 // pred_region
      _
    $region49: #{gcnnet_forward.1} parent=1 // pred_fallthru
      _
    // Predicated region
    $region50: #{gcnnet_forward.1} parent=1 // pred_check
      _
    $region51: #{gcnnet_forward.1} parent=1 // pred_check_branch
      %45 = sbr.rel (0) target = $region53
    $region52: #{gcnnet_forward.1} parent=1 // pred_region
      _
    $region53: #{gcnnet_forward.1} parent=1 // pred_fallthru
      _
    // Predicated region
    $region54: #{gcnnet_forward.1} parent=1 // pred_check
      _
    $region55: #{gcnnet_forward.1} parent=1 // pred_check_branch
      %47 = sbr.rel (0) target = $region57
    $region56: #{gcnnet_forward.1} parent=1 // pred_region
      _
    $region57: #{gcnnet_forward.1} parent=1 // pred_fallthru
      _
    %v48 = vld [vmem:[%s0] sm:$0xff]
    %v49 = vld [vmem:[%s1] sm:$0xff]
    %v50 = vld [vmem:[%s2] sm:$0xff]
    %v51 = vld [vmem:[%s2 + $0x8] sm:$0xff]
    %v52 = vld [vmem:[%s2 + $0x10] sm:$0xff]
    %v53 = vld [vmem:[%s2 + $0x18] sm:$0xff]
    %v54 = vld [vmem:[%s2 + $0x20] sm:$0xff]
    %v55 = vld [vmem:[%s2 + $0x28] sm:$0xff]
    %v56 = vld [vmem:[%s3] sm:$0x7]
    %v57 = vld [vmem:[%s4] sm:$0xff]
    %v58 = vld [vmem:[%s4 + $0x8] sm:$0xff]
    %v59 = vld [vmem:[%s4 + $0x10] sm:$0xff]
    %v60 = vld [vmem:[%s4 + $0x18] sm:$0xff]
    %v61 = vld [vmem:[%s4 + $0x20] sm:$0xff]
    %v62 = vld [vmem:[%s4 + $0x28] sm:$0xff]
    %v63 = vld [vmem:[%s4 + $0x30] sm:$0xff]
    %v64 = vld [vmem:[%s4 + $0x38] sm:$0xff]
    %v65 = vld [vmem:[%s4 + $0x40] sm:$0xff]
    %v66 = vld [vmem:[%s4 + $0x48] sm:$0xff]
    %v67 = vld [vmem:[%s4 + $0x50] sm:$0xff]
    %v68 = vld [vmem:[%s4 + $0x58] sm:$0xff]
    %v69 = vld [vmem:[%s4 + $0x60] sm:$0xff]
    %v70 = vld [vmem:[%s4 + $0x68] sm:$0xff]
    %v71 = vld [vmem:[%s4 + $0x70] sm:$0xff]
    %v72 = vld [vmem:[%s4 + $0x78] sm:$0xff]
    %v73 = vld [vmem:[%s5] sm:$0x1]
    %v75 = vlaneseq
    %v76 = vshrl.u32 %v75, 7
    %v77 = vsub.s32 0, %v76
    %v78 = vrot.slane %v56, %v77
    %v79 = vlaneseq
    %v80 = vshrl.u32 %v79, 7
    %v81 = vsub.s32 1, %v80
    %v82 = vrot.slane %v56, %v81
    %v83 = vlaneseq
    %v84 = vshrl.u32 %v83, 7
    %v85 = vsub.s32 2, %v84
    %v86 = vrot.slane %v56, %v85
    %vm90 = vcmask 130048
    %v92 = vsel %vm90, %v48, 0
    %94 = vmatprep.subr.mxu0 0.0
    %95 = vmatpush1.msra.mxu0 0.0
    %96 = vmatprep.subr.mxu0 0.0
    %97 = vmatpush1.msra.mxu0 0.0
    %98 = vmatprep.subr.mxu0 0.0
    %99 = vmatpush1.msra.mxu0 0.0
    %100 = vmatprep.subr.mxu0 0.0
    %101 = vmatpush1.msra.mxu0 0.0
    %102 = vmatprep.subr.mxu0 0.0
    %103 = vmatpush1.msra.mxu0 0.0
    %104 = vmatprep.subr.mxu0 0.0
    %105 = vmatpush1.msra.mxu0 0.0
    %106 = vmatprep.subr.mxu0 0.0
    %107 = vmatpush1.msra.mxu0 0.0
    %108 = vmatprep.subr.mxu0 0.0
    %109 = vmatpush1.msra.mxu0 0.0
    %110 = vmatprep.subr.mxu0 0.0
    %111 = vmatpush1.msra.mxu0 0.0
    %112 = vmatprep.subr.mxu0 0.0
    %113 = vmatpush1.msra.mxu0 0.0
    %114 = vmatprep.subr.mxu0 0.0
    %115 = vmatpush1.msra.mxu0 0.0
    %116 = vmatprep.subr.mxu0 0.0
    %117 = vmatpush1.msra.mxu0 0.0
    %118 = vmatprep.subr.mxu0 0.0
    %119 = vmatpush1.msra.mxu0 0.0
    %120 = vmatprep.subr.mxu0 0.0
    %121 = vmatpush1.msra.mxu0 0.0
    %122 = vmatprep.subr.mxu0 %v54
    %123 = vmatpush1.msra.mxu0 %v53
    %124 = vmatprep.subr.mxu0 %v51
    %125 = vmatpush1.msra.mxu0 %v50
    %126 = vmatprep.subr.mxu0 0.0
    %127 = vmatpush2.msra.mxu0 0.0
    %128 = vmatprep.subr.mxu0 0.0
    %129 = vmatpush2.msra.mxu0 0.0
    %130 = vmatprep.subr.mxu0 0.0
    %131 = vmatpush2.msra.mxu0 0.0
    %132 = vmatprep.subr.mxu0 0.0
    %133 = vmatpush2.msra.mxu0 0.0
    %134 = vmatprep.subr.mxu0 0.0
    %135 = vmatpush2.msra.mxu0 0.0
    %136 = vmatprep.subr.mxu0 0.0
    %137 = vmatpush2.msra.mxu0 0.0
    %138 = vmatprep.subr.mxu0 0.0
    %139 = vmatpush2.msra.mxu0 0.0
    %140 = vmatprep.subr.mxu0 0.0
    %141 = vmatpush2.msra.mxu0 0.0
    %142 = vmatprep.subr.mxu0 0.0
    %143 = vmatpush2.msra.mxu0 0.0
    %144 = vmatprep.subr.mxu0 0.0
    %145 = vmatpush2.msra.mxu0 0.0
    %146 = vmatprep.subr.mxu0 0.0
    %147 = vmatpush2.msra.mxu0 0.0
    %148 = vmatprep.subr.mxu0 0.0
    %149 = vmatpush2.msra.mxu0 0.0
    %150 = vmatprep.subr.mxu0 0.0
    %151 = vmatpush2.msra.mxu0 0.0
    %152 = vmatprep.subr.mxu0 0.0
    %153 = vmatpush2.msra.mxu0 0.0
    %154 = vmatprep.subr.mxu0 0.0
    %155 = vmatpush2.msra.mxu0 0.0
    %156 = vmatprep.subr.mxu0 0.0
    %157 = vmatpush2.msra.mxu0 0.0
    %158 = vmatprep.mubr.f32.mxu0 0.0
    %159 = vmatmul.mubr.f32.gmra.mxu0 %v92
    %v160 = vpop.f32.mrf.mxu0
    %v161 = vadd.f32 %v78, %v160
    %v162 = vpop.f32.mrf.mxu0
    %v163 = vadd.f32 %v82, %v162
    %164 = vdwg.mxu0
    %165 = vmatprep.subr.mxu0 0.0
    %166 = vmatpush1.msra.mxu0 0.0
    %167 = vmatprep.subr.mxu0 0.0
    %168 = vmatpush1.msra.mxu0 0.0
    %169 = vmatprep.subr.mxu0 0.0
    %170 = vmatpush1.msra.mxu0 0.0
    %171 = vmatprep.subr.mxu0 0.0
    %172 = vmatpush1.msra.mxu0 0.0
    %173 = vmatprep.subr.mxu0 0.0
    %174 = vmatpush1.msra.mxu0 0.0
    %175 = vmatprep.subr.mxu0 0.0
    %176 = vmatpush1.msra.mxu0 0.0
    %177 = vmatprep.subr.mxu0 0.0
    %178 = vmatpush1.msra.mxu0 0.0
    %179 = vmatprep.subr.mxu0 0.0
    %180 = vmatpush1.msra.mxu0 0.0
    %181 = vmatprep.subr.mxu0 0.0
    %182 = vmatpush1.msra.mxu0 0.0
    %183 = vmatprep.subr.mxu0 0.0
    %184 = vmatpush1.msra.mxu0 0.0
    %185 = vmatprep.subr.mxu0 0.0
    %186 = vmatpush1.msra.mxu0 0.0
    %187 = vmatprep.subr.mxu0 0.0
    %188 = vmatpush1.msra.mxu0 0.0
    %189 = vmatprep.subr.mxu0 0.0
    %190 = vmatpush1.msra.mxu0 0.0
    %191 = vmatprep.subr.mxu0 0.0
    %192 = vmatpush1.msra.mxu0 0.0
    %193 = vmatprep.subr.mxu0 0.0
    %194 = vmatpush1.msra.mxu0 %v55
    %195 = vmatprep.subr.mxu0 0.0
    %196 = vmatpush1.msra.mxu0 %v52
    %197 = vmatprep.subr.mxu0 0.0
    %198 = vmatpush2.msra.mxu0 0.0
    %199 = vmatprep.subr.mxu0 0.0
    %200 = vmatpush2.msra.mxu0 0.0
    %201 = vmatprep.subr.mxu0 0.0
    %202 = vmatpush2.msra.mxu0 0.0
    %203 = vmatprep.subr.mxu0 0.0
    %204 = vmatpush2.msra.mxu0 0.0
    %205 = vmatprep.subr.mxu0 0.0
    %206 = vmatpush2.msra.mxu0 0.0
    %207 = vmatprep.subr.mxu0 0.0
    %208 = vmatpush2.msra.mxu0 0.0
    %209 = vmatprep.subr.mxu0 0.0
    %210 = vmatpush2.msra.mxu0 0.0
    %211 = vmatprep.subr.mxu0 0.0
    %212 = vmatpush2.msra.mxu0 0.0
    %213 = vmatprep.subr.mxu0 0.0
    %214 = vmatpush2.msra.mxu0 0.0
    %215 = vmatprep.subr.mxu0 0.0
    %216 = vmatpush2.msra.mxu0 0.0
    %217 = vmatprep.subr.mxu0 0.0
    %218 = vmatpush2.msra.mxu0 0.0
    %219 = vmatprep.subr.mxu0 0.0
    %220 = vmatpush2.msra.mxu0 0.0
    %221 = vmatprep.subr.mxu0 0.0
    %222 = vmatpush2.msra.mxu0 0.0
    %223 = vmatprep.subr.mxu0 0.0
    %224 = vmatpush2.msra.mxu0 0.0
    %225 = vmatprep.subr.mxu0 0.0
    %226 = vmatpush2.msra.mxu0 0.0
    %227 = vmatprep.subr.mxu0 0.0
    %228 = vmatpush2.msra.mxu0 0.0
    %229 = vmatprep.mubr.f32.mxu0 0.0
    %230 = vmatmul.mubr.f32.gmra.mxu0 %v92
    %v231 = vpop.f32.mrf.mxu0
    %v232 = vadd.f32 %v86, %v231
    %v233 = vpop.f32.mrf.mxu0
    %234 = vdwg.mxu0
    %235 = vxpose.xlu0.b32.start [1/16] %v232, 128
    %236 = vxpose.xlu0.b32.cont [2/16] 0.0, 128
    %237 = vxpose.xlu0.b32.cont [3/16] 0.0, 128
    %238 = vxpose.xlu0.b32.cont [4/16] 0.0, 128
    %239 = vxpose.xlu0.b32.cont [5/16] 0.0, 128
    %240 = vxpose.xlu0.b32.cont [6/16] 0.0, 128
    %241 = vxpose.xlu0.b32.cont [7/16] 0.0, 128
    %242 = vxpose.xlu0.b32.cont [8/16] 0.0, 128
    %243 = vxpose.xlu0.b32.cont [9/16] 0.0, 128
    %244 = vxpose.xlu0.b32.cont [10/16] 0.0, 128
    %245 = vxpose.xlu0.b32.cont [11/16] 0.0, 128
    %246 = vxpose.xlu0.b32.cont [12/16] 0.0, 128
    %247 = vxpose.xlu0.b32.cont [13/16] 0.0, 128
    %248 = vxpose.xlu0.b32.cont [14/16] 0.0, 128
    %249 = vxpose.xlu0.b32.cont [15/16] 0.0, 128
    %250 = vxpose.xlu0.b32.end [16/16] 0.0, 128
    %v251 = vpop.trf.xlu0
    %v252 = vpop.trf.xlu0
    %v253 = vpop.trf.xlu0
    %v254 = vpop.trf.xlu0
    %v255 = vpop.trf.xlu0
    %v256 = vpop.trf.xlu0
    %v257 = vpop.trf.xlu0
    %v258 = vpop.trf.xlu0
    %v259 = vpop.trf.xlu0
    %v260 = vpop.trf.xlu0
    %v261 = vpop.trf.xlu0
    %v262 = vpop.trf.xlu0
    %v263 = vpop.trf.xlu0
    %v264 = vpop.trf.xlu0
    %v265 = vpop.trf.xlu0
    %v266 = vpop.trf.xlu0
    %268 = vset.pattern.permute.xlu0 1
    %269 = vperm.xlu0 %268, %v232
    %v270 = vpop.permute.xlu0 %269
    %v272 = vlaneseq
    %v273 = vshrl.u32 %v272, 7
    %v274 = vsub.s32 0, %v273
    %v275 = vrot.slane %v251, %v274
    %v276 = vadd.f32 %v270, %v275
    %277 = vset.pattern.permute.xlu0 3
    %278 = vperm.xlu0 %277, %v232
    %v279 = vpop.permute.xlu0 %278
    %v281 = vlaneseq
    %v282 = vshrl.u32 %v281, 7
    %v283 = vsub.s32 2, %v282
    %v284 = vrot.slane %v251, %v283
    %v285 = vadd.f32 %v279, %v284
    %286 = vset.pattern.permute.xlu0 5
    %287 = vperm.xlu0 %286, %v232
    %v288 = vpop.permute.xlu0 %287
    %v290 = vlaneseq
    %v291 = vshrl.u32 %v290, 7
    %v292 = vsub.s32 4, %v291
    %v293 = vrot.slane %v251, %v292
    %v294 = vadd.f32 %v288, %v293
    %295 = vset.pattern.permute.xlu0 7
    %296 = vperm.xlu0 %295, %v232
    %v297 = vpop.permute.xlu0 %296
    %v299 = vlaneseq
    %v300 = vshrl.u32 %v299, 7
    %v301 = vsub.s32 6, %v300
    %v302 = vrot.slane %v251, %v301
    %v303 = vadd.f32 %v297, %v302
    %v304 = vmul.f32 %v276, %v276
    %v305 = vmul.f32 %v285, %v285
    %v306 = vmul.f32 %v294, %v294
    %v307 = vmul.f32 %v303, %v303
    %v308 = vmul.f32 %v276, %v304
    %v309 = vmul.f32 %v285, %v305
    %v310 = vmul.f32 %v294, %v306
    %v311 = vmul.f32 %v303, %v307
    %v312 = vmul.f32 %v308, 0.044715
    %v313 = vmul.f32 %v309, 0.044715
    %v314 = vmul.f32 %v310, 0.044715
    %v315 = vmul.f32 %v311, 0.044715
    %v316 = vadd.f32 %v276, %v312
    %v317 = vadd.f32 %v285, %v313
    %v318 = vadd.f32 %v294, %v314
    %v319 = vadd.f32 %v303, %v315
    %v320 = vmul.f32 %v316, 0.7978846
    %v321 = vmul.f32 %v317, 0.7978846
    %v322 = vmul.f32 %v318, 0.7978846
    %v323 = vmul.f32 %v319, 0.7978846
    %v324 = vtanh.pop %v320
    %v325 = vtanh.pop %v321
    %v326 = vtanh.pop %v322
    %v327 = vtanh.pop %v323
    %v328 = vadd.f32 %v324, 1.0
    %v329 = vadd.f32 %v325, 1.0
    %v330 = vadd.f32 %v326, 1.0
    %v331 = vadd.f32 %v327, 1.0
    %v332 = vmul.f32 %v328, 0.5
    %v333 = vmul.f32 %v329, 0.5
    %v334 = vmul.f32 %v330, 0.5
    %v335 = vmul.f32 %v331, 0.5
    %v336 = vmul.f32 %v276, %v332
    %v337 = vmul.f32 %v285, %v333
    %v338 = vmul.f32 %v294, %v334
    %v339 = vmul.f32 %v303, %v335
    %vm340 = vcmp.gt.f32.partialorder %v49, 0.0
    %v341 = vsel %vm340, %v336, -1e+30
    %v342 = vsel %vm340, %v337, -1e+30
    %v343 = vsel %vm340, %v338, -1e+30
    %v344 = vsel %vm340, %v339, -1e+30
    %vm345 = vcmask 64512
    %v346 = vsel %vm345, %v341, -inf
    %347 = vmax.xlane.f32.xlu0 %v346
    %v348 = vpop.xlane.xlu0 %347
    %v349 = vsel %vm345, %v342, -inf
    %350 = vmax.xlane.f32.xlu0 %v349
    %v351 = vpop.xlane.xlu0 %350
    %v352 = vsel %vm345, %v343, -inf
    %353 = vmax.xlane.f32.xlu0 %v352
    %v354 = vpop.xlane.xlu0 %353
    %v355 = vsel %vm345, %v344, -inf
    %356 = vmax.xlane.f32.xlu0 %v355
    %v357 = vpop.xlane.xlu0 %356
    %v358 = vsub.f32 %v341, %v348
    %v359 = vsub.f32 %v342, %v351
    %v360 = vsub.f32 %v343, %v354
    %v361 = vsub.f32 %v344, %v357
    %v362 = vmul.f32 %v358, 1.442695
    %v363 = vpow.pop %v362
    %v364 = vmul.f32 %v359, 1.442695
    %v365 = vpow.pop %v364
    %v366 = vmul.f32 %v360, 1.442695
    %v367 = vpow.pop %v366
    %v368 = vmul.f32 %v361, 1.442695
    %v369 = vpow.pop %v368
    %v370 = vsel %vm345, %v363, 0.0
    %371 = vadd.xlane.f32.xlu0 %v370
    %v372 = vpop.xlane.xlu0 %371
    %v373 = vsel %vm345, %v365, 0.0
    %374 = vadd.xlane.f32.xlu0 %v373
    %v375 = vpop.xlane.xlu0 %374
    %v376 = vsel %vm345, %v367, 0.0
    %377 = vadd.xlane.f32.xlu0 %v376
    %v378 = vpop.xlane.xlu0 %377
    %v379 = vsel %vm345, %v369, 0.0
    %380 = vadd.xlane.f32.xlu0 %v379
    %v381 = vpop.xlane.xlu0 %380
    %v382 = vrcp.pop %v372
    %v383 = vrcp.pop %v375
    %v384 = vrcp.pop %v378
    %v385 = vrcp.pop %v381
    %v386 = vmul.f32 %v363, %v382
    %v387 = vmul.f32 %v365, %v383
    %v388 = vmul.f32 %v367, %v384
    %v389 = vmul.f32 %v369, %v385
    %v391 = vsel %vm345, %v386, 0
    %393 = vmatprep.subr.mxu0 0.0
    %394 = vmatpush1.msra.mxu0 0.0
    %395 = vmatprep.subr.mxu0 0.0
    %396 = vmatpush1.msra.mxu0 0.0
    %397 = vmatprep.subr.mxu0 0.0
    %398 = vmatpush1.msra.mxu0 0.0
    %399 = vmatprep.subr.mxu0 0.0
    %400 = vmatpush1.msra.mxu0 0.0
    %401 = vmatprep.subr.mxu0 0.0
    %402 = vmatpush1.msra.mxu0 0.0
    %403 = vmatprep.subr.mxu0 0.0
    %404 = vmatpush1.msra.mxu0 0.0
    %405 = vmatprep.subr.mxu0 0.0
    %406 = vmatpush1.msra.mxu0 0.0
    %407 = vmatprep.subr.mxu0 0.0
    %408 = vmatpush1.msra.mxu0 0.0
    %409 = vmatprep.subr.mxu0 0.0
    %410 = vmatpush1.msra.mxu0 0.0
    %411 = vmatprep.subr.mxu0 0.0
    %412 = vmatpush1.msra.mxu0 0.0
    %413 = vmatprep.subr.mxu0 0.0
    %414 = vmatpush1.msra.mxu0 0.0
    %415 = vmatprep.subr.mxu0 0.0
    %416 = vmatpush1.msra.mxu0 0.0
    %417 = vmatprep.subr.mxu0 0.0
    %418 = vmatpush1.msra.mxu0 0.0
    %419 = vmatprep.subr.mxu0 0.0
    %420 = vmatpush1.msra.mxu0 0.0
    %421 = vmatprep.subr.mxu0 0.0
    %422 = vmatpush1.msra.mxu0 0.0
    %423 = vmatprep.subr.mxu0 0.0
    %424 = vmatpush1.msra.mxu0 %v161
    %425 = vmatprep.subr.mxu0 0.0
    %426 = vmatpush2.msra.mxu0 0.0
    %427 = vmatprep.subr.mxu0 0.0
    %428 = vmatpush2.msra.mxu0 0.0
    %429 = vmatprep.subr.mxu0 0.0
    %430 = vmatpush2.msra.mxu0 0.0
    %431 = vmatprep.subr.mxu0 0.0
    %432 = vmatpush2.msra.mxu0 0.0
    %433 = vmatprep.subr.mxu0 0.0
    %434 = vmatpush2.msra.mxu0 0.0
    %435 = vmatprep.subr.mxu0 0.0
    %436 = vmatpush2.msra.mxu0 0.0
    %437 = vmatprep.subr.mxu0 0.0
    %438 = vmatpush2.msra.mxu0 0.0
    %439 = vmatprep.subr.mxu0 0.0
    %440 = vmatpush2.msra.mxu0 0.0
    %441 = vmatprep.subr.mxu0 0.0
    %442 = vmatpush2.msra.mxu0 0.0
    %443 = vmatprep.subr.mxu0 0.0
    %444 = vmatpush2.msra.mxu0 0.0
    %445 = vmatprep.subr.mxu0 0.0
    %446 = vmatpush2.msra.mxu0 0.0
    %447 = vmatprep.subr.mxu0 0.0
    %448 = vmatpush2.msra.mxu0 0.0
    %449 = vmatprep.subr.mxu0 0.0
    %450 = vmatpush2.msra.mxu0 0.0
    %451 = vmatprep.subr.mxu0 0.0
    %452 = vmatpush2.msra.mxu0 0.0
    %453 = vmatprep.subr.mxu0 0.0
    %454 = vmatpush2.msra.mxu0 0.0
    %455 = vmatprep.subr.mxu0 0.0
    %456 = vmatpush2.msra.mxu0 0.0
    %457 = vmatprep.mubr.f32.mxu0 0.0
    %458 = vmatmul.mubr.f32.gmra.mxu0 %v391
    %v459 = vpop.f32.mrf.mxu0
    %v460 = vadd.f32 0.0, %v459
    %v461 = vpop.f32.mrf.mxu0
    %462 = vdwg.mxu0
    %464 = vrot.lane.b32.xlu0 %v161, 96
    %v465 = vpop.permute.xlu0 %464
    %v468 = vsel %vm345, %v387, 0
    %470 = vmatprep.subr.mxu0 0.0
    %471 = vmatpush1.msra.mxu0 0.0
    %472 = vmatprep.subr.mxu0 0.0
    %473 = vmatpush1.msra.mxu0 0.0
    %474 = vmatprep.subr.mxu0 0.0
    %475 = vmatpush1.msra.mxu0 0.0
    %476 = vmatprep.subr.mxu0 0.0
    %477 = vmatpush1.msra.mxu0 0.0
    %478 = vmatprep.subr.mxu0 0.0
    %479 = vmatpush1.msra.mxu0 0.0
    %480 = vmatprep.subr.mxu0 0.0
    %481 = vmatpush1.msra.mxu0 0.0
    %482 = vmatprep.subr.mxu0 0.0
    %483 = vmatpush1.msra.mxu0 0.0
    %484 = vmatprep.subr.mxu0 0.0
    %485 = vmatpush1.msra.mxu0 0.0
    %486 = vmatprep.subr.mxu0 0.0
    %487 = vmatpush1.msra.mxu0 0.0
    %488 = vmatprep.subr.mxu0 0.0
    %489 = vmatpush1.msra.mxu0 0.0
    %490 = vmatprep.subr.mxu0 0.0
    %491 = vmatpush1.msra.mxu0 0.0
    %492 = vmatprep.subr.mxu0 0.0
    %493 = vmatpush1.msra.mxu0 0.0
    %494 = vmatprep.subr.mxu0 0.0
    %495 = vmatpush1.msra.mxu0 0.0
    %496 = vmatprep.subr.mxu0 0.0
    %497 = vmatpush1.msra.mxu0 0.0
    %498 = vmatprep.subr.mxu0 0.0
    %499 = vmatpush1.msra.mxu0 0.0
    %500 = vmatprep.subr.mxu0 0.0
    %501 = vmatpush1.msra.mxu0 %v465
    %502 = vmatprep.subr.mxu0 0.0
    %503 = vmatpush2.msra.mxu0 0.0
    %504 = vmatprep.subr.mxu0 0.0
    %505 = vmatpush2.msra.mxu0 0.0
    %506 = vmatprep.subr.mxu0 0.0
    %507 = vmatpush2.msra.mxu0 0.0
    %508 = vmatprep.subr.mxu0 0.0
    %509 = vmatpush2.msra.mxu0 0.0
    %510 = vmatprep.subr.mxu0 0.0
    %511 = vmatpush2.msra.mxu0 0.0
    %512 = vmatprep.subr.mxu0 0.0
    %513 = vmatpush2.msra.mxu0 0.0
    %514 = vmatprep.subr.mxu0 0.0
    %515 = vmatpush2.msra.mxu0 0.0
    %516 = vmatprep.subr.mxu0 0.0
    %517 = vmatpush2.msra.mxu0 0.0
    %518 = vmatprep.subr.mxu0 0.0
    %519 = vmatpush2.msra.mxu0 0.0
    %520 = vmatprep.subr.mxu0 0.0
    %521 = vmatpush2.msra.mxu0 0.0
    %522 = vmatprep.subr.mxu0 0.0
    %523 = vmatpush2.msra.mxu0 0.0
    %524 = vmatprep.subr.mxu0 0.0
    %525 = vmatpush2.msra.mxu0 0.0
    %526 = vmatprep.subr.mxu0 0.0
    %527 = vmatpush2.msra.mxu0 0.0
    %528 = vmatprep.subr.mxu0 0.0
    %529 = vmatpush2.msra.mxu0 0.0
    %530 = vmatprep.subr.mxu0 0.0
    %531 = vmatpush2.msra.mxu0 0.0
    %532 = vmatprep.subr.mxu0 0.0
    %533 = vmatpush2.msra.mxu0 0.0
    %534 = vmatprep.mubr.f32.mxu0 0.0
    %535 = vmatmul.mubr.f32.gmra.mxu0 %v468
    %v536 = vpop.f32.mrf.mxu0
    %v537 = vadd.f32 0.0, %v536
    %v538 = vpop.f32.mrf.mxu0
    %539 = vdwg.mxu0
    %540 = vrot.lane.b32.xlu0 %v161, 64
    %v541 = vpop.permute.xlu0 %540
    %v544 = vsel %vm345, %v388, 0
    %546 = vmatprep.subr.mxu0 0.0
    %547 = vmatpush1.msra.mxu0 0.0
    %548 = vmatprep.subr.mxu0 0.0
    %549 = vmatpush1.msra.mxu0 0.0
    %550 = vmatprep.subr.mxu0 0.0
    %551 = vmatpush1.msra.mxu0 0.0
    %552 = vmatprep.subr.mxu0 0.0
    %553 = vmatpush1.msra.mxu0 0.0
    %554 = vmatprep.subr.mxu0 0.0
    %555 = vmatpush1.msra.mxu0 0.0
    %556 = vmatprep.subr.mxu0 0.0
    %557 = vmatpush1.msra.mxu0 0.0
    %558 = vmatprep.subr.mxu0 0.0
    %559 = vmatpush1.msra.mxu0 0.0
    %560 = vmatprep.subr.mxu0 0.0
    %561 = vmatpush1.msra.mxu0 0.0
    %562 = vmatprep.subr.mxu0 0.0
    %563 = vmatpush1.msra.mxu0 0.0
    %564 = vmatprep.subr.mxu0 0.0
    %565 = vmatpush1.msra.mxu0 0.0
    %566 = vmatprep.subr.mxu0 0.0
    %567 = vmatpush1.msra.mxu0 0.0
    %568 = vmatprep.subr.mxu0 0.0
    %569 = vmatpush1.msra.mxu0 0.0
    %570 = vmatprep.subr.mxu0 0.0
    %571 = vmatpush1.msra.mxu0 0.0
    %572 = vmatprep.subr.mxu0 0.0
    %573 = vmatpush1.msra.mxu0 0.0
    %574 = vmatprep.subr.mxu0 0.0
    %575 = vmatpush1.msra.mxu0 0.0
    %576 = vmatprep.subr.mxu0 0.0
    %577 = vmatpush1.msra.mxu0 %v541
    %578 = vmatprep.subr.mxu0 0.0
    %579 = vmatpush2.msra.mxu0 0.0
    %580 = vmatprep.subr.mxu0 0.0
    %581 = vmatpush2.msra.mxu0 0.0
    %582 = vmatprep.subr.mxu0 0.0
    %583 = vmatpush2.msra.mxu0 0.0
    %584 = vmatprep.subr.mxu0 0.0
    %585 = vmatpush2.msra.mxu0 0.0
    %586 = vmatprep.subr.mxu0 0.0
    %587 = vmatpush2.msra.mxu0 0.0
    %588 = vmatprep.subr.mxu0 0.0
    %589 = vmatpush2.msra.mxu0 0.0
    %590 = vmatprep.subr.mxu0 0.0
    %591 = vmatpush2.msra.mxu0 0.0
    %592 = vmatprep.subr.mxu0 0.0
    %593 = vmatpush2.msra.mxu0 0.0
    %594 = vmatprep.subr.mxu0 0.0
    %595 = vmatpush2.msra.mxu0 0.0
    %596 = vmatprep.subr.mxu0 0.0
    %597 = vmatpush2.msra.mxu0 0.0
    %598 = vmatprep.subr.mxu0 0.0
    %599 = vmatpush2.msra.mxu0 0.0
    %600 = vmatprep.subr.mxu0 0.0
    %601 = vmatpush2.msra.mxu0 0.0
    %602 = vmatprep.subr.mxu0 0.0
    %603 = vmatpush2.msra.mxu0 0.0
    %604 = vmatprep.subr.mxu0 0.0
    %605 = vmatpush2.msra.mxu0 0.0
    %606 = vmatprep.subr.mxu0 0.0
    %607 = vmatpush2.msra.mxu0 0.0
    %608 = vmatprep.subr.mxu0 0.0
    %609 = vmatpush2.msra.mxu0 0.0
    %610 = vmatprep.mubr.f32.mxu0 0.0
    %611 = vmatmul.mubr.f32.gmra.mxu0 %v544
    %v612 = vpop.f32.mrf.mxu0
    %v613 = vadd.f32 0.0, %v612
    %v614 = vpop.f32.mrf.mxu0
    %615 = vdwg.mxu0
    %616 = vrot.lane.b32.xlu0 %v161, 32
    %v617 = vpop.permute.xlu0 %616
    %v620 = vsel %vm345, %v389, 0
    %622 = vmatprep.subr.mxu0 0.0
    %623 = vmatpush1.msra.mxu0 0.0
    %624 = vmatprep.subr.mxu0 0.0
    %625 = vmatpush1.msra.mxu0 0.0
    %626 = vmatprep.subr.mxu0 0.0
    %627 = vmatpush1.msra.mxu0 0.0
    %628 = vmatprep.subr.mxu0 0.0
    %629 = vmatpush1.msra.mxu0 0.0
    %630 = vmatprep.subr.mxu0 0.0
    %631 = vmatpush1.msra.mxu0 0.0
    %632 = vmatprep.subr.mxu0 0.0
    %633 = vmatpush1.msra.mxu0 0.0
    %634 = vmatprep.subr.mxu0 0.0
    %635 = vmatpush1.msra.mxu0 0.0
    %636 = vmatprep.subr.mxu0 0.0
    %637 = vmatpush1.msra.mxu0 0.0
    %638 = vmatprep.subr.mxu0 0.0
    %639 = vmatpush1.msra.mxu0 0.0
    %640 = vmatprep.subr.mxu0 0.0
    %641 = vmatpush1.msra.mxu0 0.0
    %642 = vmatprep.subr.mxu0 0.0
    %643 = vmatpush1.msra.mxu0 0.0
    %644 = vmatprep.subr.mxu0 0.0
    %645 = vmatpush1.msra.mxu0 0.0
    %646 = vmatprep.subr.mxu0 0.0
    %647 = vmatpush1.msra.mxu0 0.0
    %648 = vmatprep.subr.mxu0 0.0
    %649 = vmatpush1.msra.mxu0 0.0
    %650 = vmatprep.subr.mxu0 0.0
    %651 = vmatpush1.msra.mxu0 0.0
    %652 = vmatprep.subr.mxu0 0.0
    %653 = vmatpush1.msra.mxu0 %v617
    %654 = vmatprep.subr.mxu0 0.0
    %655 = vmatpush2.msra.mxu0 0.0
    %656 = vmatprep.subr.mxu0 0.0
    %657 = vmatpush2.msra.mxu0 0.0
    %658 = vmatprep.subr.mxu0 0.0
    %659 = vmatpush2.msra.mxu0 0.0
    %660 = vmatprep.subr.mxu0 0.0
    %661 = vmatpush2.msra.mxu0 0.0
    %662 = vmatprep.subr.mxu0 0.0
    %663 = vmatpush2.msra.mxu0 0.0
    %664 = vmatprep.subr.mxu0 0.0
    %665 = vmatpush2.msra.mxu0 0.0
    %666 = vmatprep.subr.mxu0 0.0
    %667 = vmatpush2.msra.mxu0 0.0
    %668 = vmatprep.subr.mxu0 0.0
    %669 = vmatpush2.msra.mxu0 0.0
    %670 = vmatprep.subr.mxu0 0.0
    %671 = vmatpush2.msra.mxu0 0.0
    %672 = vmatprep.subr.mxu0 0.0
    %673 = vmatpush2.msra.mxu0 0.0
    %674 = vmatprep.subr.mxu0 0.0
    %675 = vmatpush2.msra.mxu0 0.0
    %676 = vmatprep.subr.mxu0 0.0
    %677 = vmatpush2.msra.mxu0 0.0
    %678 = vmatprep.subr.mxu0 0.0
    %679 = vmatpush2.msra.mxu0 0.0
    %680 = vmatprep.subr.mxu0 0.0
    %681 = vmatpush2.msra.mxu0 0.0
    %682 = vmatprep.subr.mxu0 0.0
    %683 = vmatpush2.msra.mxu0 0.0
    %684 = vmatprep.subr.mxu0 0.0
    %685 = vmatpush2.msra.mxu0 0.0
    %686 = vmatprep.mubr.f32.mxu0 0.0
    %687 = vmatmul.mubr.f32.gmra.mxu0 %v620
    %v688 = vpop.f32.mrf.mxu0
    %v689 = vadd.f32 0.0, %v688
    %v690 = vpop.f32.mrf.mxu0
    %691 = vdwg.mxu0
    %693 = vrot.lane.b32.xlu0 %v537, 32
    %v694 = vpop.permute.xlu0 %693
    %697 = vrot.lane.b32.xlu0 %v613, 64
    %v698 = vpop.permute.xlu0 %697
    %701 = vrot.lane.b32.xlu0 %v689, 96
    %v702 = vpop.permute.xlu0 %701
    %vm704 = vcmask 261120
    %v705 = vsel %vm704, %v460, %v694
    %vm706 = vcmask 523264
    %v707 = vsel %vm706, %v705, %v698
    %vm708 = vcmask 785408
    %v709 = vsel %vm708, %v707, %v702
    %v710 = vadd.f32 %v709, %v163
    %v712 = vlaneseq
    %v713 = vshrl.u32 %v712, 7
    %v714 = vsub.s32 0, %v713
    %v715 = vrot.slane %v73, %v714
    %717 = vmatprep.subr.mxu0 0.0
    %718 = vmatpush1.msra.mxu0 %v72
    %719 = vmatprep.subr.mxu0 0.0
    %720 = vmatpush1.msra.mxu0 %v71
    %721 = vmatprep.subr.mxu0 0.0
    %722 = vmatpush1.msra.mxu0 %v70
    %723 = vmatprep.subr.mxu0 0.0
    %724 = vmatpush1.msra.mxu0 %v69
    %725 = vmatprep.subr.mxu0 0.0
    %726 = vmatpush1.msra.mxu0 %v68
    %727 = vmatprep.subr.mxu0 0.0
    %728 = vmatpush1.msra.mxu0 %v67
    %729 = vmatprep.subr.mxu0 0.0
    %730 = vmatpush1.msra.mxu0 %v66
    %731 = vmatprep.subr.mxu0 0.0
    %732 = vmatpush1.msra.mxu0 %v65
    %733 = vmatprep.subr.mxu0 0.0
    %734 = vmatpush1.msra.mxu0 %v64
    %735 = vmatprep.subr.mxu0 0.0
    %736 = vmatpush1.msra.mxu0 %v63
    %737 = vmatprep.subr.mxu0 0.0
    %738 = vmatpush1.msra.mxu0 %v62
    %739 = vmatprep.subr.mxu0 0.0
    %740 = vmatpush1.msra.mxu0 %v61
    %741 = vmatprep.subr.mxu0 0.0
    %742 = vmatpush1.msra.mxu0 %v60
    %743 = vmatprep.subr.mxu0 0.0
    %744 = vmatpush1.msra.mxu0 %v59
    %745 = vmatprep.subr.mxu0 0.0
    %746 = vmatpush1.msra.mxu0 %v58
    %747 = vmatprep.subr.mxu0 0.0
    %748 = vmatpush1.msra.mxu0 %v57
    %749 = vmatprep.subr.mxu0 0.0
    %750 = vmatpush2.msra.mxu0 0.0
    %751 = vmatprep.subr.mxu0 0.0
    %752 = vmatpush2.msra.mxu0 0.0
    %753 = vmatprep.subr.mxu0 0.0
    %754 = vmatpush2.msra.mxu0 0.0
    %755 = vmatprep.subr.mxu0 0.0
    %756 = vmatpush2.msra.mxu0 0.0
    %757 = vmatprep.subr.mxu0 0.0
    %758 = vmatpush2.msra.mxu0 0.0
    %759 = vmatprep.subr.mxu0 0.0
    %760 = vmatpush2.msra.mxu0 0.0
    %761 = vmatprep.subr.mxu0 0.0
    %762 = vmatpush2.msra.mxu0 0.0
    %763 = vmatprep.subr.mxu0 0.0
    %764 = vmatpush2.msra.mxu0 0.0
    %765 = vmatprep.subr.mxu0 0.0
    %766 = vmatpush2.msra.mxu0 0.0
    %767 = vmatprep.subr.mxu0 0.0
    %768 = vmatpush2.msra.mxu0 0.0
    %769 = vmatprep.subr.mxu0 0.0
    %770 = vmatpush2.msra.mxu0 0.0
    %771 = vmatprep.subr.mxu0 0.0
    %772 = vmatpush2.msra.mxu0 0.0
    %773 = vmatprep.subr.mxu0 0.0
    %774 = vmatpush2.msra.mxu0 0.0
    %775 = vmatprep.subr.mxu0 0.0
    %776 = vmatpush2.msra.mxu0 0.0
    %777 = vmatprep.subr.mxu0 0.0
    %778 = vmatpush2.msra.mxu0 0.0
    %779 = vmatprep.subr.mxu0 0.0
    %780 = vmatpush2.msra.mxu0 0.0
    %781 = vmatprep.mubr.f32.mxu0 0.0
    %782 = vmatmul.mubr.f32.gmra.mxu0 %v710
    %v783 = vpop.f32.mrf.mxu0
    %v784 = vadd.f32 %v715, %v783
    %v785 = vpop.f32.mrf.mxu0
    %786 = vdwg.mxu0
    %788 = vrot.lane.b32.xlu0 %v784, 64
    %v789 = vpop.permute.xlu0 %788
    %791 = vxpose.xlu0.b32.start [1/16] %v789, 128
    %792 = vxpose.xlu0.b32.cont [2/16] 0.0, 128
    %793 = vxpose.xlu0.b32.cont [3/16] 0.0, 128
    %794 = vxpose.xlu0.b32.cont [4/16] 0.0, 128
    %795 = vxpose.xlu0.b32.cont [5/16] 0.0, 128
    %796 = vxpose.xlu0.b32.cont [6/16] 0.0, 128
    %797 = vxpose.xlu0.b32.cont [7/16] 0.0, 128
    %798 = vxpose.xlu0.b32.cont [8/16] 0.0, 128
    %799 = vxpose.xlu0.b32.cont [9/16] 0.0, 128
    %800 = vxpose.xlu0.b32.cont [10/16] 0.0, 128
    %801 = vxpose.xlu0.b32.cont [11/16] 0.0, 128
    %802 = vxpose.xlu0.b32.cont [12/16] 0.0, 128
    %803 = vxpose.xlu0.b32.cont [13/16] 0.0, 128
    %804 = vxpose.xlu0.b32.cont [14/16] 0.0, 128
    %805 = vxpose.xlu0.b32.cont [15/16] 0.0, 128
    %806 = vxpose.xlu0.b32.end [16/16] 0.0, 128
    %v807 = vpop.trf.xlu0
    %v808 = vpop.trf.xlu0
    %v809 = vpop.trf.xlu0
    %v810 = vpop.trf.xlu0
    %v811 = vpop.trf.xlu0
    %v812 = vpop.trf.xlu0
    %v813 = vpop.trf.xlu0
    %v814 = vpop.trf.xlu0
    %v815 = vpop.trf.xlu0
    %v816 = vpop.trf.xlu0
    %v817 = vpop.trf.xlu0
    %v818 = vpop.trf.xlu0
    %v819 = vpop.trf.xlu0
    %v820 = vpop.trf.xlu0
    %v821 = vpop.trf.xlu0
    %v822 = vpop.trf.xlu0
    %823 = vset.pattern.permute.xlu0 65
    %824 = vperm.xlu0 %823, %v784
    %v825 = vpop.permute.xlu0 %824
    %v827 = vlaneseq
    %v828 = vshrl.u32 %v827, 7
    %v829 = vsub.s32 0, %v828
    %v830 = vrot.slane %v807, %v829
    %v831 = vadd.f32 %v825, %v830
    %v832 = vmul.f32 %v831, %v831
    %v833 = vmul.f32 %v831, %v832
    %v834 = vmul.f32 %v833, 0.044715
    %v835 = vadd.f32 %v831, %v834
    %v836 = vmul.f32 %v835, 0.7978846
    %v837 = vtanh.pop %v836
    %v838 = vadd.f32 %v837, 1.0
    %v839 = vmul.f32 %v838, 0.5
    %v840 = vmul.f32 %v831, %v839
    %v841 = vsel %vm340, %v840, -1e+30
    %v842 = vsel %vm345, %v841, -inf
    %843 = vmax.xlane.f32.xlu0 %v842
    %v844 = vpop.xlane.xlu0 %843
    %v845 = vsub.f32 %v841, %v844
    %v846 = vmul.f32 %v845, 1.442695
    %v847 = vpow.pop %v846
    %v848 = vsel %vm345, %v847, 0.0
    %849 = vadd.xlane.f32.xlu0 %v848
    %v850 = vpop.xlane.xlu0 %849
    %v851 = vrcp.pop %v850
    %v852 = vmul.f32 %v847, %v851
    %853 = vrot.lane.b32.xlu0 %v784, 96
    %v854 = vpop.permute.xlu0 %853
    %v857 = vsel %vm345, %v852, 0
    %859 = vmatprep.subr.mxu0 0.0
    %860 = vmatpush1.msra.mxu0 0.0
    %861 = vmatprep.subr.mxu0 0.0
    %862 = vmatpush1.msra.mxu0 0.0
    %863 = vmatprep.subr.mxu0 0.0
    %864 = vmatpush1.msra.mxu0 0.0
    %865 = vmatprep.subr.mxu0 0.0
    %866 = vmatpush1.msra.mxu0 0.0
    %867 = vmatprep.subr.mxu0 0.0
    %868 = vmatpush1.msra.mxu0 0.0
    %869 = vmatprep.subr.mxu0 0.0
    %870 = vmatpush1.msra.mxu0 0.0
    %871 = vmatprep.subr.mxu0 0.0
    %872 = vmatpush1.msra.mxu0 0.0
    %873 = vmatprep.subr.mxu0 0.0
    %874 = vmatpush1.msra.mxu0 0.0
    %875 = vmatprep.subr.mxu0 0.0
    %876 = vmatpush1.msra.mxu0 0.0
    %877 = vmatprep.subr.mxu0 0.0
    %878 = vmatpush1.msra.mxu0 0.0
    %879 = vmatprep.subr.mxu0 0.0
    %880 = vmatpush1.msra.mxu0 0.0
    %881 = vmatprep.subr.mxu0 0.0
    %882 = vmatpush1.msra.mxu0 0.0
    %883 = vmatprep.subr.mxu0 0.0
    %884 = vmatpush1.msra.mxu0 0.0
    %885 = vmatprep.subr.mxu0 0.0
    %886 = vmatpush1.msra.mxu0 0.0
    %887 = vmatprep.subr.mxu0 0.0
    %888 = vmatpush1.msra.mxu0 0.0
    %889 = vmatprep.subr.mxu0 0.0
    %890 = vmatpush1.msra.mxu0 %v784
    %891 = vmatprep.subr.mxu0 0.0
    %892 = vmatpush2.msra.mxu0 0.0
    %893 = vmatprep.subr.mxu0 0.0
    %894 = vmatpush2.msra.mxu0 0.0
    %895 = vmatprep.subr.mxu0 0.0
    %896 = vmatpush2.msra.mxu0 0.0
    %897 = vmatprep.subr.mxu0 0.0
    %898 = vmatpush2.msra.mxu0 0.0
    %899 = vmatprep.subr.mxu0 0.0
    %900 = vmatpush2.msra.mxu0 0.0
    %901 = vmatprep.subr.mxu0 0.0
    %902 = vmatpush2.msra.mxu0 0.0
    %903 = vmatprep.subr.mxu0 0.0
    %904 = vmatpush2.msra.mxu0 0.0
    %905 = vmatprep.subr.mxu0 0.0
    %906 = vmatpush2.msra.mxu0 0.0
    %907 = vmatprep.subr.mxu0 0.0
    %908 = vmatpush2.msra.mxu0 0.0
    %909 = vmatprep.subr.mxu0 0.0
    %910 = vmatpush2.msra.mxu0 0.0
    %911 = vmatprep.subr.mxu0 0.0
    %912 = vmatpush2.msra.mxu0 0.0
    %913 = vmatprep.subr.mxu0 0.0
    %914 = vmatpush2.msra.mxu0 0.0
    %915 = vmatprep.subr.mxu0 0.0
    %916 = vmatpush2.msra.mxu0 0.0
    %917 = vmatprep.subr.mxu0 0.0
    %918 = vmatpush2.msra.mxu0 0.0
    %919 = vmatprep.subr.mxu0 0.0
    %920 = vmatpush2.msra.mxu0 0.0
    %921 = vmatprep.subr.mxu0 0.0
    %922 = vmatpush2.msra.mxu0 0.0
    %923 = vmatprep.mubr.f32.mxu0 0.0
    %924 = vmatmul.mubr.f32.gmra.mxu0 %v857
    %v925 = vpop.f32.mrf.mxu0
    %v926 = vadd.f32 %v854, %v925
    %v927 = vpop.f32.mrf.mxu0
    %928 = vdwg.mxu0
    %v929 = vld [vmem:[%s6] sm:$0xff]
    %v930 = vld [vmem:[%s6 + $0x8] sm:$0xff]
    %v931 = vld [vmem:[%s6 + $0x10] sm:$0xff]
    %v932 = vld [vmem:[%s6 + $0x18] sm:$0xff]
    %v933 = vld [vmem:[%s6 + $0x20] sm:$0xff]
    %v934 = vld [vmem:[%s6 + $0x28] sm:$0xff]
    %v935 = vld [vmem:[%s6 + $0x30] sm:$0xff]
    %v936 = vld [vmem:[%s6 + $0x38] sm:$0xff]
    %v937 = vld [vmem:[%s6 + $0x40] sm:$0xff]
    %v938 = vld [vmem:[%s6 + $0x48] sm:$0xff]
    %v939 = vld [vmem:[%s6 + $0x50] sm:$0xff]
    %v940 = vld [vmem:[%s6 + $0x58] sm:$0xff]
    %v941 = vld [vmem:[%s7] sm:$0x7]
    %v942 = vld [vmem:[%s8] sm:$0xff]
    %v943 = vld [vmem:[%s8 + $0x8] sm:$0xff]
    %v944 = vld [vmem:[%s8 + $0x10] sm:$0xff]
    %v945 = vld [vmem:[%s8 + $0x18] sm:$0xff]
    %v946 = vld [vmem:[%s8 + $0x20] sm:$0xff]
    %v947 = vld [vmem:[%s8 + $0x28] sm:$0xff]
    %v948 = vld [vmem:[%s8 + $0x30] sm:$0xff]
    %v949 = vld [vmem:[%s8 + $0x38] sm:$0xff]
    %v950 = vld [vmem:[%s8 + $0x40] sm:$0xff]
    %v951 = vld [vmem:[%s8 + $0x48] sm:$0xff]
    %v952 = vld [vmem:[%s8 + $0x50] sm:$0xff]
    %v953 = vld [vmem:[%s8 + $0x58] sm:$0xff]
    %v954 = vld [vmem:[%s8 + $0x60] sm:$0xff]
    %v955 = vld [vmem:[%s8 + $0x68] sm:$0xff]
    %v956 = vld [vmem:[%s8 + $0x70] sm:$0xff]
    %v957 = vld [vmem:[%s8 + $0x78] sm:$0xff]
    %v958 = vld [vmem:[%s9] sm:$0x1]
    %v960 = vlaneseq
    %v961 = vshrl.u32 %v960, 7
    %v962 = vsub.s32 0, %v961
    %v963 = vrot.slane %v941, %v962
    %v964 = vlaneseq
    %v965 = vshrl.u32 %v964, 7
    %v966 = vsub.s32 1, %v965
    %v967 = vrot.slane %v941, %v966
    %v968 = vlaneseq
    %v969 = vshrl.u32 %v968, 7
    %v970 = vsub.s32 2, %v969
    %v971 = vrot.slane %v941, %v970
    %v976 = vsel %vm704, %v926, 0
    %978 = vmatprep.subr.mxu0 0.0
    %979 = vmatpush1.msra.mxu0 0.0
    %980 = vmatprep.subr.mxu0 0.0
    %981 = vmatpush1.msra.mxu0 0.0
    %982 = vmatprep.subr.mxu0 0.0
    %983 = vmatpush1.msra.mxu0 0.0
    %984 = vmatprep.subr.mxu0 0.0
    %985 = vmatpush1.msra.mxu0 0.0
    %986 = vmatprep.subr.mxu0 0.0
    %987 = vmatpush1.msra.mxu0 0.0
    %988 = vmatprep.subr.mxu0 0.0
    %989 = vmatpush1.msra.mxu0 0.0
    %990 = vmatprep.subr.mxu0 0.0
    %991 = vmatpush1.msra.mxu0 0.0
    %992 = vmatprep.subr.mxu0 0.0
    %993 = vmatpush1.msra.mxu0 0.0
    %994 = vmatprep.subr.mxu0 0.0
    %995 = vmatpush1.msra.mxu0 0.0
    %996 = vmatprep.subr.mxu0 0.0
    %997 = vmatpush1.msra.mxu0 0.0
    %998 = vmatprep.subr.mxu0 0.0
    %999 = vmatpush1.msra.mxu0 0.0
    %1000 = vmatprep.subr.mxu0 0.0
    %1001 = vmatpush1.msra.mxu0 0.0
    %1002 = vmatprep.subr.mxu0 %v939
    %1003 = vmatpush1.msra.mxu0 %v938
    %1004 = vmatprep.subr.mxu0 %v936
    %1005 = vmatpush1.msra.mxu0 %v935
    %1006 = vmatprep.subr.mxu0 %v933
    %1007 = vmatpush1.msra.mxu0 %v932
    %1008 = vmatprep.subr.mxu0 %v930
    %1009 = vmatpush1.msra.mxu0 %v929
    %1010 = vmatprep.subr.mxu0 0.0
    %1011 = vmatpush2.msra.mxu0 0.0
    %1012 = vmatprep.subr.mxu0 0.0
    %1013 = vmatpush2.msra.mxu0 0.0
    %1014 = vmatprep.subr.mxu0 0.0
    %1015 = vmatpush2.msra.mxu0 0.0
    %1016 = vmatprep.subr.mxu0 0.0
    %1017 = vmatpush2.msra.mxu0 0.0
    %1018 = vmatprep.subr.mxu0 0.0
    %1019 = vmatpush2.msra.mxu0 0.0
    %1020 = vmatprep.subr.mxu0 0.0
    %1021 = vmatpush2.msra.mxu0 0.0
    %1022 = vmatprep.subr.mxu0 0.0
    %1023 = vmatpush2.msra.mxu0 0.0
    %1024 = vmatprep.subr.mxu0 0.0
    %1025 = vmatpush2.msra.mxu0 0.0
    %1026 = vmatprep.subr.mxu0 0.0
    %1027 = vmatpush2.msra.mxu0 0.0
    %1028 = vmatprep.subr.mxu0 0.0
    %1029 = vmatpush2.msra.mxu0 0.0
    %1030 = vmatprep.subr.mxu0 0.0
    %1031 = vmatpush2.msra.mxu0 0.0
    %1032 = vmatprep.subr.mxu0 0.0
    %1033 = vmatpush2.msra.mxu0 0.0
    %1034 = vmatprep.subr.mxu0 0.0
    %1035 = vmatpush2.msra.mxu0 0.0
    %1036 = vmatprep.subr.mxu0 0.0
    %1037 = vmatpush2.msra.mxu0 0.0
    %1038 = vmatprep.subr.mxu0 0.0
    %1039 = vmatpush2.msra.mxu0 0.0
    %1040 = vmatprep.subr.mxu0 0.0
    %1041 = vmatpush2.msra.mxu0 0.0
    %1042 = vmatprep.mubr.f32.mxu0 0.0
    %1043 = vmatmul.mubr.f32.gmra.mxu0 %v976
    %v1044 = vpop.f32.mrf.mxu0
    %v1045 = vadd.f32 %v963, %v1044
    %v1046 = vpop.f32.mrf.mxu0
    %v1047 = vadd.f32 %v967, %v1046
    %1048 = vdwg.mxu0
    %1049 = vmatprep.subr.mxu0 0.0
    %1050 = vmatpush1.msra.mxu0 0.0
    %1051 = vmatprep.subr.mxu0 0.0
    %1052 = vmatpush1.msra.mxu0 0.0
    %1053 = vmatprep.subr.mxu0 0.0
    %1054 = vmatpush1.msra.mxu0 0.0
    %1055 = vmatprep.subr.mxu0 0.0
    %1056 = vmatpush1.msra.mxu0 0.0
    %1057 = vmatprep.subr.mxu0 0.0
    %1058 = vmatpush1.msra.mxu0 0.0
    %1059 = vmatprep.subr.mxu0 0.0
    %1060 = vmatpush1.msra.mxu0 0.0
    %1061 = vmatprep.subr.mxu0 0.0
    %1062 = vmatpush1.msra.mxu0 0.0
    %1063 = vmatprep.subr.mxu0 0.0
    %1064 = vmatpush1.msra.mxu0 0.0
    %1065 = vmatprep.subr.mxu0 0.0
    %1066 = vmatpush1.msra.mxu0 0.0
    %1067 = vmatprep.subr.mxu0 0.0
    %1068 = vmatpush1.msra.mxu0 0.0
    %1069 = vmatprep.subr.mxu0 0.0
    %1070 = vmatpush1.msra.mxu0 0.0
    %1071 = vmatprep.subr.mxu0 0.0
    %1072 = vmatpush1.msra.mxu0 0.0
    %1073 = vmatprep.subr.mxu0 0.0
    %1074 = vmatpush1.msra.mxu0 %v940
    %1075 = vmatprep.subr.mxu0 0.0
    %1076 = vmatpush1.msra.mxu0 %v937
    %1077 = vmatprep.subr.mxu0 0.0
    %1078 = vmatpush1.msra.mxu0 %v934
    %1079 = vmatprep.subr.mxu0 0.0
    %1080 = vmatpush1.msra.mxu0 %v931
    %1081 = vmatprep.subr.mxu0 0.0
    %1082 = vmatpush2.msra.mxu0 0.0
    %1083 = vmatprep.subr.mxu0 0.0
    %1084 = vmatpush2.msra.mxu0 0.0
    %1085 = vmatprep.subr.mxu0 0.0
    %1086 = vmatpush2.msra.mxu0 0.0
    %1087 = vmatprep.subr.mxu0 0.0
    %1088 = vmatpush2.msra.mxu0 0.0
    %1089 = vmatprep.subr.mxu0 0.0
    %1090 = vmatpush2.msra.mxu0 0.0
    %1091 = vmatprep.subr.mxu0 0.0
    %1092 = vmatpush2.msra.mxu0 0.0
    %1093 = vmatprep.subr.mxu0 0.0
    %1094 = vmatpush2.msra.mxu0 0.0
    %1095 = vmatprep.subr.mxu0 0.0
    %1096 = vmatpush2.msra.mxu0 0.0
    %1097 = vmatprep.subr.mxu0 0.0
    %1098 = vmatpush2.msra.mxu0 0.0
    %1099 = vmatprep.subr.mxu0 0.0
    %1100 = vmatpush2.msra.mxu0 0.0
    %1101 = vmatprep.subr.mxu0 0.0
    %1102 = vmatpush2.msra.mxu0 0.0
    %1103 = vmatprep.subr.mxu0 0.0
    %1104 = vmatpush2.msra.mxu0 0.0
    %1105 = vmatprep.subr.mxu0 0.0
    %1106 = vmatpush2.msra.mxu0 0.0
    %1107 = vmatprep.subr.mxu0 0.0
    %1108 = vmatpush2.msra.mxu0 0.0
    %1109 = vmatprep.subr.mxu0 0.0
    %1110 = vmatpush2.msra.mxu0 0.0
    %1111 = vmatprep.subr.mxu0 0.0
    %1112 = vmatpush2.msra.mxu0 0.0
    %1113 = vmatprep.mubr.f32.mxu0 0.0
    %1114 = vmatmul.mubr.f32.gmra.mxu0 %v976
    %v1115 = vpop.f32.mrf.mxu0
    %v1116 = vadd.f32 %v971, %v1115
    %v1117 = vpop.f32.mrf.mxu0
    %1118 = vdwg.mxu0
    %1119 = vxpose.xlu0.b32.start [1/16] %v1116, 128
    %1120 = vxpose.xlu0.b32.cont [2/16] 0.0, 128
    %1121 = vxpose.xlu0.b32.cont [3/16] 0.0, 128
    %1122 = vxpose.xlu0.b32.cont [4/16] 0.0, 128
    %1123 = vxpose.xlu0.b32.cont [5/16] 0.0, 128
    %1124 = vxpose.xlu0.b32.cont [6/16] 0.0, 128
    %1125 = vxpose.xlu0.b32.cont [7/16] 0.0, 128
    %1126 = vxpose.xlu0.b32.cont [8/16] 0.0, 128
    %1127 = vxpose.xlu0.b32.cont [9/16] 0.0, 128
    %1128 = vxpose.xlu0.b32.cont [10/16] 0.0, 128
    %1129 = vxpose.xlu0.b32.cont [11/16] 0.0, 128
    %1130 = vxpose.xlu0.b32.cont [12/16] 0.0, 128
    %1131 = vxpose.xlu0.b32.cont [13/16] 0.0, 128
    %1132 = vxpose.xlu0.b32.cont [14/16] 0.0, 128
    %1133 = vxpose.xlu0.b32.cont [15/16] 0.0, 128
    %1134 = vxpose.xlu0.b32.end [16/16] 0.0, 128
    %v1135 = vpop.trf.xlu0
    %v1136 = vpop.trf.xlu0
    %v1137 = vpop.trf.xlu0
    %v1138 = vpop.trf.xlu0
    %v1139 = vpop.trf.xlu0
    %v1140 = vpop.trf.xlu0
    %v1141 = vpop.trf.xlu0
    %v1142 = vpop.trf.xlu0
    %v1143 = vpop.trf.xlu0
    %v1144 = vpop.trf.xlu0
    %v1145 = vpop.trf.xlu0
    %v1146 = vpop.trf.xlu0
    %v1147 = vpop.trf.xlu0
    %v1148 = vpop.trf.xlu0
    %v1149 = vpop.trf.xlu0
    %v1150 = vpop.trf.xlu0
    %1152 = vset.pattern.permute.xlu0 1
    %1153 = vperm.xlu0 %1152, %v1116
    %v1154 = vpop.permute.xlu0 %1153
    %v1156 = vlaneseq
    %v1157 = vshrl.u32 %v1156, 7
    %v1158 = vsub.s32 0, %v1157
    %v1159 = vrot.slane %v1135, %v1158
    %v1160 = vadd.f32 %v1154, %v1159
    %1161 = vset.pattern.permute.xlu0 3
    %1162 = vperm.xlu0 %1161, %v1116
    %v1163 = vpop.permute.xlu0 %1162
    %v1165 = vlaneseq
    %v1166 = vshrl.u32 %v1165, 7
    %v1167 = vsub.s32 2, %v1166
    %v1168 = vrot.slane %v1135, %v1167
    %v1169 = vadd.f32 %v1163, %v1168
    %1170 = vset.pattern.permute.xlu0 5
    %1171 = vperm.xlu0 %1170, %v1116
    %v1172 = vpop.permute.xlu0 %1171
    %v1174 = vlaneseq
    %v1175 = vshrl.u32 %v1174, 7
    %v1176 = vsub.s32 4, %v1175
    %v1177 = vrot.slane %v1135, %v1176
    %v1178 = vadd.f32 %v1172, %v1177
    %1179 = vset.pattern.permute.xlu0 7
    %1180 = vperm.xlu0 %1179, %v1116
    %v1181 = vpop.permute.xlu0 %1180
    %v1183 = vlaneseq
    %v1184 = vshrl.u32 %v1183, 7
    %v1185 = vsub.s32 6, %v1184
    %v1186 = vrot.slane %v1135, %v1185
    %v1187 = vadd.f32 %v1181, %v1186
    %v1188 = vmul.f32 %v1160, %v1160
    %v1189 = vmul.f32 %v1169, %v1169
    %v1190 = vmul.f32 %v1178, %v1178
    %v1191 = vmul.f32 %v1187, %v1187
    %v1192 = vmul.f32 %v1160, %v1188
    %v1193 = vmul.f32 %v1169, %v1189
    %v1194 = vmul.f32 %v1178, %v1190
    %v1195 = vmul.f32 %v1187, %v1191
    %v1196 = vmul.f32 %v1192, 0.044715
    %v1197 = vmul.f32 %v1193, 0.044715
    %v1198 = vmul.f32 %v1194, 0.044715
    %v1199 = vmul.f32 %v1195, 0.044715
    %v1200 = vadd.f32 %v1160, %v1196
    %v1201 = vadd.f32 %v1169, %v1197
    %v1202 = vadd.f32 %v1178, %v1198
    %v1203 = vadd.f32 %v1187, %v1199
    %v1204 = vmul.f32 %v1200, 0.7978846
    %v1205 = vmul.f32 %v1201, 0.7978846
    %v1206 = vmul.f32 %v1202, 0.7978846
    %v1207 = vmul.f32 %v1203, 0.7978846
    %v1208 = vtanh.pop %v1204
    %v1209 = vtanh.pop %v1205
    %v1210 = vtanh.pop %v1206
    %v1211 = vtanh.pop %v1207
    %v1212 = vadd.f32 %v1208, 1.0
    %v1213 = vadd.f32 %v1209, 1.0
    %v1214 = vadd.f32 %v1210, 1.0
    %v1215 = vadd.f32 %v1211, 1.0
    %v1216 = vmul.f32 %v1212, 0.5
    %v1217 = vmul.f32 %v1213, 0.5
    %v1218 = vmul.f32 %v1214, 0.5
    %v1219 = vmul.f32 %v1215, 0.5
    %v1220 = vmul.f32 %v1160, %v1216
    %v1221 = vmul.f32 %v1169, %v1217
    %v1222 = vmul.f32 %v1178, %v1218
    %v1223 = vmul.f32 %v1187, %v1219
    %v1224 = vsel %vm340, %v1220, -1e+30
    %v1225 = vsel %vm340, %v1221, -1e+30
    %v1226 = vsel %vm340, %v1222, -1e+30
    %v1227 = vsel %vm340, %v1223, -1e+30
    %v1228 = vsel %vm345, %v1224, -inf
    %1229 = vmax.xlane.f32.xlu0 %v1228
    %v1230 = vpop.xlane.xlu0 %1229
    %v1231 = vsel %vm345, %v1225, -inf
    %1232 = vmax.xlane.f32.xlu0 %v1231
    %v1233 = vpop.xlane.xlu0 %1232
    %v1234 = vsel %vm345, %v1226, -inf
    %1235 = vmax.xlane.f32.xlu0 %v1234
    %v1236 = vpop.xlane.xlu0 %1235
    %v1237 = vsel %vm345, %v1227, -inf
    %1238 = vmax.xlane.f32.xlu0 %v1237
    %v1239 = vpop.xlane.xlu0 %1238
    %v1240 = vsub.f32 %v1224, %v1230
    %v1241 = vsub.f32 %v1225, %v1233
    %v1242 = vsub.f32 %v1226, %v1236
    %v1243 = vsub.f32 %v1227, %v1239
    %v1244 = vmul.f32 %v1240, 1.442695
    %v1245 = vpow.pop %v1244
    %v1246 = vmul.f32 %v1241, 1.442695
    %v1247 = vpow.pop %v1246
    %v1248 = vmul.f32 %v1242, 1.442695
    %v1249 = vpow.pop %v1248
    %v1250 = vmul.f32 %v1243, 1.442695
    %v1251 = vpow.pop %v1250
    %v1252 = vsel %vm345, %v1245, 0.0
    %1253 = vadd.xlane.f32.xlu0 %v1252
    %v1254 = vpop.xlane.xlu0 %1253
    %v1255 = vsel %vm345, %v1247, 0.0
    %1256 = vadd.xlane.f32.xlu0 %v1255
    %v1257 = vpop.xlane.xlu0 %1256
    %v1258 = vsel %vm345, %v1249, 0.0
    %1259 = vadd.xlane.f32.xlu0 %v1258
    %v1260 = vpop.xlane.xlu0 %1259
    %v1261 = vsel %vm345, %v1251, 0.0
    %1262 = vadd.xlane.f32.xlu0 %v1261
    %v1263 = vpop.xlane.xlu0 %1262
    %v1264 = vrcp.pop %v1254
    %v1265 = vrcp.pop %v1257
    %v1266 = vrcp.pop %v1260
    %v1267 = vrcp.pop %v1263
    %v1268 = vmul.f32 %v1245, %v1264
    %v1269 = vmul.f32 %v1247, %v1265
    %v1270 = vmul.f32 %v1249, %v1266
    %v1271 = vmul.f32 %v1251, %v1267
    %v1273 = vsel %vm345, %v1268, 0
    %1275 = vmatprep.subr.mxu0 0.0
    %1276 = vmatpush1.msra.mxu0 0.0
    %1277 = vmatprep.subr.mxu0 0.0
    %1278 = vmatpush1.msra.mxu0 0.0
    %1279 = vmatprep.subr.mxu0 0.0
    %1280 = vmatpush1.msra.mxu0 0.0
    %1281 = vmatprep.subr.mxu0 0.0
    %1282 = vmatpush1.msra.mxu0 0.0
    %1283 = vmatprep.subr.mxu0 0.0
    %1284 = vmatpush1.msra.mxu0 0.0
    %1285 = vmatprep.subr.mxu0 0.0
    %1286 = vmatpush1.msra.mxu0 0.0
    %1287 = vmatprep.subr.mxu0 0.0
    %1288 = vmatpush1.msra.mxu0 0.0
    %1289 = vmatprep.subr.mxu0 0.0
    %1290 = vmatpush1.msra.mxu0 0.0
    %1291 = vmatprep.subr.mxu0 0.0
    %1292 = vmatpush1.msra.mxu0 0.0
    %1293 = vmatprep.subr.mxu0 0.0
    %1294 = vmatpush1.msra.mxu0 0.0
    %1295 = vmatprep.subr.mxu0 0.0
    %1296 = vmatpush1.msra.mxu0 0.0
    %1297 = vmatprep.subr.mxu0 0.0
    %1298 = vmatpush1.msra.mxu0 0.0
    %1299 = vmatprep.subr.mxu0 0.0
    %1300 = vmatpush1.msra.mxu0 0.0
    %1301 = vmatprep.subr.mxu0 0.0
    %1302 = vmatpush1.msra.mxu0 0.0
    %1303 = vmatprep.subr.mxu0 0.0
    %1304 = vmatpush1.msra.mxu0 0.0
    %1305 = vmatprep.subr.mxu0 0.0
    %1306 = vmatpush1.msra.mxu0 %v1045
    %1307 = vmatprep.subr.mxu0 0.0
    %1308 = vmatpush2.msra.mxu0 0.0
    %1309 = vmatprep.subr.mxu0 0.0
    %1310 = vmatpush2.msra.mxu0 0.0
    %1311 = vmatprep.subr.mxu0 0.0
    %1312 = vmatpush2.msra.mxu0 0.0
    %1313 = vmatprep.subr.mxu0 0.0
    %1314 = vmatpush2.msra.mxu0 0.0
    %1315 = vmatprep.subr.mxu0 0.0
    %1316 = vmatpush2.msra.mxu0 0.0
    %1317 = vmatprep.subr.mxu0 0.0
    %1318 = vmatpush2.msra.mxu0 0.0
    %1319 = vmatprep.subr.mxu0 0.0
    %1320 = vmatpush2.msra.mxu0 0.0
    %1321 = vmatprep.subr.mxu0 0.0
    %1322 = vmatpush2.msra.mxu0 0.0
    %1323 = vmatprep.subr.mxu0 0.0
    %1324 = vmatpush2.msra.mxu0 0.0
    %1325 = vmatprep.subr.mxu0 0.0
    %1326 = vmatpush2.msra.mxu0 0.0
    %1327 = vmatprep.subr.mxu0 0.0
    %1328 = vmatpush2.msra.mxu0 0.0
    %1329 = vmatprep.subr.mxu0 0.0
    %1330 = vmatpush2.msra.mxu0 0.0
    %1331 = vmatprep.subr.mxu0 0.0
    %1332 = vmatpush2.msra.mxu0 0.0
    %1333 = vmatprep.subr.mxu0 0.0
    %1334 = vmatpush2.msra.mxu0 0.0
    %1335 = vmatprep.subr.mxu0 0.0
    %1336 = vmatpush2.msra.mxu0 0.0
    %1337 = vmatprep.subr.mxu0 0.0
    %1338 = vmatpush2.msra.mxu0 0.0
    %1339 = vmatprep.mubr.f32.mxu0 0.0
    %1340 = vmatmul.mubr.f32.gmra.mxu0 %v1273
    %v1341 = vpop.f32.mrf.mxu0
    %v1342 = vadd.f32 0.0, %v1341
    %v1343 = vpop.f32.mrf.mxu0
    %1344 = vdwg.mxu0
    %1346 = vrot.lane.b32.xlu0 %v1045, 96
    %v1347 = vpop.permute.xlu0 %1346
    %v1350 = vsel %vm345, %v1269, 0
    %1352 = vmatprep.subr.mxu0 0.0
    %1353 = vmatpush1.msra.mxu0 0.0
    %1354 = vmatprep.subr.mxu0 0.0
    %1355 = vmatpush1.msra.mxu0 0.0
    %1356 = vmatprep.subr.mxu0 0.0
    %1357 = vmatpush1.msra.mxu0 0.0
    %1358 = vmatprep.subr.mxu0 0.0
    %1359 = vmatpush1.msra.mxu0 0.0
    %1360 = vmatprep.subr.mxu0 0.0
    %1361 = vmatpush1.msra.mxu0 0.0
    %1362 = vmatprep.subr.mxu0 0.0
    %1363 = vmatpush1.msra.mxu0 0.0
    %1364 = vmatprep.subr.mxu0 0.0
    %1365 = vmatpush1.msra.mxu0 0.0
    %1366 = vmatprep.subr.mxu0 0.0
    %1367 = vmatpush1.msra.mxu0 0.0
    %1368 = vmatprep.subr.mxu0 0.0
    %1369 = vmatpush1.msra.mxu0 0.0
    %1370 = vmatprep.subr.mxu0 0.0
    %1371 = vmatpush1.msra.mxu0 0.0
    %1372 = vmatprep.subr.mxu0 0.0
    %1373 = vmatpush1.msra.mxu0 0.0
    %1374 = vmatprep.subr.mxu0 0.0
    %1375 = vmatpush1.msra.mxu0 0.0
    %1376 = vmatprep.subr.mxu0 0.0
    %1377 = vmatpush1.msra.mxu0 0.0
    %1378 = vmatprep.subr.mxu0 0.0
    %1379 = vmatpush1.msra.mxu0 0.0
    %1380 = vmatprep.subr.mxu0 0.0
    %1381 = vmatpush1.msra.mxu0 0.0
    %1382 = vmatprep.subr.mxu0 0.0
    %1383 = vmatpush1.msra.mxu0 %v1347
    %1384 = vmatprep.subr.mxu0 0.0
    %1385 = vmatpush2.msra.mxu0 0.0
    %1386 = vmatprep.subr.mxu0 0.0
    %1387 = vmatpush2.msra.mxu0 0.0
    %1388 = vmatprep.subr.mxu0 0.0
    %1389 = vmatpush2.msra.mxu0 0.0
    %1390 = vmatprep.subr.mxu0 0.0
    %1391 = vmatpush2.msra.mxu0 0.0
    %1392 = vmatprep.subr.mxu0 0.0
    %1393 = vmatpush2.msra.mxu0 0.0
    %1394 = vmatprep.subr.mxu0 0.0
    %1395 = vmatpush2.msra.mxu0 0.0
    %1396 = vmatprep.subr.mxu0 0.0
    %1397 = vmatpush2.msra.mxu0 0.0
    %1398 = vmatprep.subr.mxu0 0.0
    %1399 = vmatpush2.msra.mxu0 0.0
    %1400 = vmatprep.subr.mxu0 0.0
    %1401 = vmatpush2.msra.mxu0 0.0
    %1402 = vmatprep.subr.mxu0 0.0
    %1403 = vmatpush2.msra.mxu0 0.0
    %1404 = vmatprep.subr.mxu0 0.0
    %1405 = vmatpush2.msra.mxu0 0.0
    %1406 = vmatprep.subr.mxu0 0.0
    %1407 = vmatpush2.msra.mxu0 0.0
    %1408 = vmatprep.subr.mxu0 0.0
    %1409 = vmatpush2.msra.mxu0 0.0
    %1410 = vmatprep.subr.mxu0 0.0
    %1411 = vmatpush2.msra.mxu0 0.0
    %1412 = vmatprep.subr.mxu0 0.0
    %1413 = vmatpush2.msra.mxu0 0.0
    %1414 = vmatprep.subr.mxu0 0.0
    %1415 = vmatpush2.msra.mxu0 0.0
    %1416 = vmatprep.mubr.f32.mxu0 0.0
    %1417 = vmatmul.mubr.f32.gmra.mxu0 %v1350
    %v1418 = vpop.f32.mrf.mxu0
    %v1419 = vadd.f32 0.0, %v1418
    %v1420 = vpop.f32.mrf.mxu0
    %1421 = vdwg.mxu0
    %1422 = vrot.lane.b32.xlu0 %v1045, 64
    %v1423 = vpop.permute.xlu0 %1422
    %v1426 = vsel %vm345, %v1270, 0
    %1428 = vmatprep.subr.mxu0 0.0
    %1429 = vmatpush1.msra.mxu0 0.0
    %1430 = vmatprep.subr.mxu0 0.0
    %1431 = vmatpush1.msra.mxu0 0.0
    %1432 = vmatprep.subr.mxu0 0.0
    %1433 = vmatpush1.msra.mxu0 0.0
    %1434 = vmatprep.subr.mxu0 0.0
    %1435 = vmatpush1.msra.mxu0 0.0
    %1436 = vmatprep.subr.mxu0 0.0
    %1437 = vmatpush1.msra.mxu0 0.0
    %1438 = vmatprep.subr.mxu0 0.0
    %1439 = vmatpush1.msra.mxu0 0.0
    %1440 = vmatprep.subr.mxu0 0.0
    %1441 = vmatpush1.msra.mxu0 0.0
    %1442 = vmatprep.subr.mxu0 0.0
    %1443 = vmatpush1.msra.mxu0 0.0
    %1444 = vmatprep.subr.mxu0 0.0
    %1445 = vmatpush1.msra.mxu0 0.0
    %1446 = vmatprep.subr.mxu0 0.0
    %1447 = vmatpush1.msra.mxu0 0.0
    %1448 = vmatprep.subr.mxu0 0.0
    %1449 = vmatpush1.msra.mxu0 0.0
    %1450 = vmatprep.subr.mxu0 0.0
    %1451 = vmatpush1.msra.mxu0 0.0
    %1452 = vmatprep.subr.mxu0 0.0
    %1453 = vmatpush1.msra.mxu0 0.0
    %1454 = vmatprep.subr.mxu0 0.0
    %1455 = vmatpush1.msra.mxu0 0.0
    %1456 = vmatprep.subr.mxu0 0.0
    %1457 = vmatpush1.msra.mxu0 0.0
    %1458 = vmatprep.subr.mxu0 0.0
    %1459 = vmatpush1.msra.mxu0 %v1423
    %1460 = vmatprep.subr.mxu0 0.0
    %1461 = vmatpush2.msra.mxu0 0.0
    %1462 = vmatprep.subr.mxu0 0.0
    %1463 = vmatpush2.msra.mxu0 0.0
    %1464 = vmatprep.subr.mxu0 0.0
    %1465 = vmatpush2.msra.mxu0 0.0
    %1466 = vmatprep.subr.mxu0 0.0
    %1467 = vmatpush2.msra.mxu0 0.0
    %1468 = vmatprep.subr.mxu0 0.0
    %1469 = vmatpush2.msra.mxu0 0.0
    %1470 = vmatprep.subr.mxu0 0.0
    %1471 = vmatpush2.msra.mxu0 0.0
    %1472 = vmatprep.subr.mxu0 0.0
    %1473 = vmatpush2.msra.mxu0 0.0
    %1474 = vmatprep.subr.mxu0 0.0
    %1475 = vmatpush2.msra.mxu0 0.0
    %1476 = vmatprep.subr.mxu0 0.0
    %1477 = vmatpush2.msra.mxu0 0.0
    %1478 = vmatprep.subr.mxu0 0.0
    %1479 = vmatpush2.msra.mxu0 0.0
    %1480 = vmatprep.subr.mxu0 0.0
    %1481 = vmatpush2.msra.mxu0 0.0
    %1482 = vmatprep.subr.mxu0 0.0
    %1483 = vmatpush2.msra.mxu0 0.0
    %1484 = vmatprep.subr.mxu0 0.0
    %1485 = vmatpush2.msra.mxu0 0.0
    %1486 = vmatprep.subr.mxu0 0.0
    %1487 = vmatpush2.msra.mxu0 0.0
    %1488 = vmatprep.subr.mxu0 0.0
    %1489 = vmatpush2.msra.mxu0 0.0
    %1490 = vmatprep.subr.mxu0 0.0
    %1491 = vmatpush2.msra.mxu0 0.0
    %1492 = vmatprep.mubr.f32.mxu0 0.0
    %1493 = vmatmul.mubr.f32.gmra.mxu0 %v1426
    %v1494 = vpop.f32.mrf.mxu0
    %v1495 = vadd.f32 0.0, %v1494
    %v1496 = vpop.f32.mrf.mxu0
    %1497 = vdwg.mxu0
    %1498 = vrot.lane.b32.xlu0 %v1045, 32
    %v1499 = vpop.permute.xlu0 %1498
    %v1502 = vsel %vm345, %v1271, 0
    %1504 = vmatprep.subr.mxu0 0.0
    %1505 = vmatpush1.msra.mxu0 0.0
    %1506 = vmatprep.subr.mxu0 0.0
    %1507 = vmatpush1.msra.mxu0 0.0
    %1508 = vmatprep.subr.mxu0 0.0
    %1509 = vmatpush1.msra.mxu0 0.0
    %1510 = vmatprep.subr.mxu0 0.0
    %1511 = vmatpush1.msra.mxu0 0.0
    %1512 = vmatprep.subr.mxu0 0.0
    %1513 = vmatpush1.msra.mxu0 0.0
    %1514 = vmatprep.subr.mxu0 0.0
    %1515 = vmatpush1.msra.mxu0 0.0
    %1516 = vmatprep.subr.mxu0 0.0
    %1517 = vmatpush1.msra.mxu0 0.0
    %1518 = vmatprep.subr.mxu0 0.0
    %1519 = vmatpush1.msra.mxu0 0.0
    %1520 = vmatprep.subr.mxu0 0.0
    %1521 = vmatpush1.msra.mxu0 0.0
    %1522 = vmatprep.subr.mxu0 0.0
    %1523 = vmatpush1.msra.mxu0 0.0
    %1524 = vmatprep.subr.mxu0 0.0
    %1525 = vmatpush1.msra.mxu0 0.0
    %1526 = vmatprep.subr.mxu0 0.0
    %1527 = vmatpush1.msra.mxu0 0.0
    %1528 = vmatprep.subr.mxu0 0.0
    %1529 = vmatpush1.msra.mxu0 0.0
    %1530 = vmatprep.subr.mxu0 0.0
    %1531 = vmatpush1.msra.mxu0 0.0
    %1532 = vmatprep.subr.mxu0 0.0
    %1533 = vmatpush1.msra.mxu0 0.0
    %1534 = vmatprep.subr.mxu0 0.0
    %1535 = vmatpush1.msra.mxu0 %v1499
    %1536 = vmatprep.subr.mxu0 0.0
    %1537 = vmatpush2.msra.mxu0 0.0
    %1538 = vmatprep.subr.mxu0 0.0
    %1539 = vmatpush2.msra.mxu0 0.0
    %1540 = vmatprep.subr.mxu0 0.0
    %1541 = vmatpush2.msra.mxu0 0.0
    %1542 = vmatprep.subr.mxu0 0.0
    %1543 = vmatpush2.msra.mxu0 0.0
    %1544 = vmatprep.subr.mxu0 0.0
    %1545 = vmatpush2.msra.mxu0 0.0
    %1546 = vmatprep.subr.mxu0 0.0
    %1547 = vmatpush2.msra.mxu0 0.0
    %1548 = vmatprep.subr.mxu0 0.0
    %1549 = vmatpush2.msra.mxu0 0.0
    %1550 = vmatprep.subr.mxu0 0.0
    %1551 = vmatpush2.msra.mxu0 0.0
    %1552 = vmatprep.subr.mxu0 0.0
    %1553 = vmatpush2.msra.mxu0 0.0
    %1554 = vmatprep.subr.mxu0 0.0
    %1555 = vmatpush2.msra.mxu0 0.0
    %1556 = vmatprep.subr.mxu0 0.0
    %1557 = vmatpush2.msra.mxu0 0.0
    %1558 = vmatprep.subr.mxu0 0.0
    %1559 = vmatpush2.msra.mxu0 0.0
    %1560 = vmatprep.subr.mxu0 0.0
    %1561 = vmatpush2.msra.mxu0 0.0
    %1562 = vmatprep.subr.mxu0 0.0
    %1563 = vmatpush2.msra.mxu0 0.0
    %1564 = vmatprep.subr.mxu0 0.0
    %1565 = vmatpush2.msra.mxu0 0.0
    %1566 = vmatprep.subr.mxu0 0.0
    %1567 = vmatpush2.msra.mxu0 0.0
    %1568 = vmatprep.mubr.f32.mxu0 0.0
    %1569 = vmatmul.mubr.f32.gmra.mxu0 %v1502
    %v1570 = vpop.f32.mrf.mxu0
    %v1571 = vadd.f32 0.0, %v1570
    %v1572 = vpop.f32.mrf.mxu0
    %1573 = vdwg.mxu0
    %1575 = vrot.lane.b32.xlu0 %v1419, 32
    %v1576 = vpop.permute.xlu0 %1575
    %1579 = vrot.lane.b32.xlu0 %v1495, 64
    %v1580 = vpop.permute.xlu0 %1579
    %1583 = vrot.lane.b32.xlu0 %v1571, 96
    %v1584 = vpop.permute.xlu0 %1583
    %v1586 = vsel %vm704, %v1342, %v1576
    %v1587 = vsel %vm706, %v1586, %v1580
    %v1588 = vsel %vm708, %v1587, %v1584
    %v1589 = vadd.f32 %v1588, %v1047
    %v1591 = vlaneseq
    %v1592 = vshrl.u32 %v1591, 7
    %v1593 = vsub.s32 0, %v1592
    %v1594 = vrot.slane %v958, %v1593
    %1596 = vmatprep.subr.mxu0 0.0
    %1597 = vmatpush1.msra.mxu0 %v957
    %1598 = vmatprep.subr.mxu0 0.0
    %1599 = vmatpush1.msra.mxu0 %v956
    %1600 = vmatprep.subr.mxu0 0.0
    %1601 = vmatpush1.msra.mxu0 %v955
    %1602 = vmatprep.subr.mxu0 0.0
    %1603 = vmatpush1.msra.mxu0 %v954
    %1604 = vmatprep.subr.mxu0 0.0
    %1605 = vmatpush1.msra.mxu0 %v953
    %1606 = vmatprep.subr.mxu0 0.0
    %1607 = vmatpush1.msra.mxu0 %v952
    %1608 = vmatprep.subr.mxu0 0.0
    %1609 = vmatpush1.msra.mxu0 %v951
    %1610 = vmatprep.subr.mxu0 0.0
    %1611 = vmatpush1.msra.mxu0 %v950
    %1612 = vmatprep.subr.mxu0 0.0
    %1613 = vmatpush1.msra.mxu0 %v949
    %1614 = vmatprep.subr.mxu0 0.0
    %1615 = vmatpush1.msra.mxu0 %v948
    %1616 = vmatprep.subr.mxu0 0.0
    %1617 = vmatpush1.msra.mxu0 %v947
    %1618 = vmatprep.subr.mxu0 0.0
    %1619 = vmatpush1.msra.mxu0 %v946
    %1620 = vmatprep.subr.mxu0 0.0
    %1621 = vmatpush1.msra.mxu0 %v945
    %1622 = vmatprep.subr.mxu0 0.0
    %1623 = vmatpush1.msra.mxu0 %v944
    %1624 = vmatprep.subr.mxu0 0.0
    %1625 = vmatpush1.msra.mxu0 %v943
    %1626 = vmatprep.subr.mxu0 0.0
    %1627 = vmatpush1.msra.mxu0 %v942
    %1628 = vmatprep.subr.mxu0 0.0
    %1629 = vmatpush2.msra.mxu0 0.0
    %1630 = vmatprep.subr.mxu0 0.0
    %1631 = vmatpush2.msra.mxu0 0.0
    %1632 = vmatprep.subr.mxu0 0.0
    %1633 = vmatpush2.msra.mxu0 0.0
    %1634 = vmatprep.subr.mxu0 0.0
    %1635 = vmatpush2.msra.mxu0 0.0
    %1636 = vmatprep.subr.mxu0 0.0
    %1637 = vmatpush2.msra.mxu0 0.0
    %1638 = vmatprep.subr.mxu0 0.0
    %1639 = vmatpush2.msra.mxu0 0.0
    %1640 = vmatprep.subr.mxu0 0.0
    %1641 = vmatpush2.msra.mxu0 0.0
    %1642 = vmatprep.subr.mxu0 0.0
    %1643 = vmatpush2.msra.mxu0 0.0
    %1644 = vmatprep.subr.mxu0 0.0
    %1645 = vmatpush2.msra.mxu0 0.0
    %1646 = vmatprep.subr.mxu0 0.0
    %1647 = vmatpush2.msra.mxu0 0.0
    %1648 = vmatprep.subr.mxu0 0.0
    %1649 = vmatpush2.msra.mxu0 0.0
    %1650 = vmatprep.subr.mxu0 0.0
    %1651 = vmatpush2.msra.mxu0 0.0
    %1652 = vmatprep.subr.mxu0 0.0
    %1653 = vmatpush2.msra.mxu0 0.0
    %1654 = vmatprep.subr.mxu0 0.0
    %1655 = vmatpush2.msra.mxu0 0.0
    %1656 = vmatprep.subr.mxu0 0.0
    %1657 = vmatpush2.msra.mxu0 0.0
    %1658 = vmatprep.subr.mxu0 0.0
    %1659 = vmatpush2.msra.mxu0 0.0
    %1660 = vmatprep.mubr.f32.mxu0 0.0
    %1661 = vmatmul.mubr.f32.gmra.mxu0 %v1589
    %v1662 = vpop.f32.mrf.mxu0
    %v1663 = vadd.f32 %v1594, %v1662
    %v1664 = vpop.f32.mrf.mxu0
    %1665 = vdwg.mxu0
    %1667 = vrot.lane.b32.xlu0 %v1663, 64
    %v1668 = vpop.permute.xlu0 %1667
    %1670 = vxpose.xlu0.b32.start [1/16] %v1668, 128
    %1671 = vxpose.xlu0.b32.cont [2/16] 0.0, 128
    %1672 = vxpose.xlu0.b32.cont [3/16] 0.0, 128
    %1673 = vxpose.xlu0.b32.cont [4/16] 0.0, 128
    %1674 = vxpose.xlu0.b32.cont [5/16] 0.0, 128
    %1675 = vxpose.xlu0.b32.cont [6/16] 0.0, 128
    %1676 = vxpose.xlu0.b32.cont [7/16] 0.0, 128
    %1677 = vxpose.xlu0.b32.cont [8/16] 0.0, 128
    %1678 = vxpose.xlu0.b32.cont [9/16] 0.0, 128
    %1679 = vxpose.xlu0.b32.cont [10/16] 0.0, 128
    %1680 = vxpose.xlu0.b32.cont [11/16] 0.0, 128
    %1681 = vxpose.xlu0.b32.cont [12/16] 0.0, 128
    %1682 = vxpose.xlu0.b32.cont [13/16] 0.0, 128
    %1683 = vxpose.xlu0.b32.cont [14/16] 0.0, 128
    %1684 = vxpose.xlu0.b32.cont [15/16] 0.0, 128
    %1685 = vxpose.xlu0.b32.end [16/16] 0.0, 128
    %v1686 = vpop.trf.xlu0
    %v1687 = vpop.trf.xlu0
    %v1688 = vpop.trf.xlu0
    %v1689 = vpop.trf.xlu0
    %v1690 = vpop.trf.xlu0
    %v1691 = vpop.trf.xlu0
    %v1692 = vpop.trf.xlu0
    %v1693 = vpop.trf.xlu0
    %v1694 = vpop.trf.xlu0
    %v1695 = vpop.trf.xlu0
    %v1696 = vpop.trf.xlu0
    %v1697 = vpop.trf.xlu0
    %v1698 = vpop.trf.xlu0
    %v1699 = vpop.trf.xlu0
    %v1700 = vpop.trf.xlu0
    %v1701 = vpop.trf.xlu0
    %1702 = vset.pattern.permute.xlu0 65
    %1703 = vperm.xlu0 %1702, %v1663
    %v1704 = vpop.permute.xlu0 %1703
    %v1706 = vlaneseq
    %v1707 = vshrl.u32 %v1706, 7
    %v1708 = vsub.s32 0, %v1707
    %v1709 = vrot.slane %v1686, %v1708
    %v1710 = vadd.f32 %v1704, %v1709
    %v1711 = vmul.f32 %v1710, %v1710
    %v1712 = vmul.f32 %v1710, %v1711
    %v1713 = vmul.f32 %v1712, 0.044715
    %v1714 = vadd.f32 %v1710, %v1713
    %v1715 = vmul.f32 %v1714, 0.7978846
    %v1716 = vtanh.pop %v1715
    %v1717 = vadd.f32 %v1716, 1.0
    %v1718 = vmul.f32 %v1717, 0.5
    %v1719 = vmul.f32 %v1710, %v1718
    %v1720 = vsel %vm340, %v1719, -1e+30
    %v1721 = vsel %vm345, %v1720, -inf
    %1722 = vmax.xlane.f32.xlu0 %v1721
    %v1723 = vpop.xlane.xlu0 %1722
    %v1724 = vsub.f32 %v1720, %v1723
    %v1725 = vmul.f32 %v1724, 1.442695
    %v1726 = vpow.pop %v1725
    %v1727 = vsel %vm345, %v1726, 0.0
    %1728 = vadd.xlane.f32.xlu0 %v1727
    %v1729 = vpop.xlane.xlu0 %1728
    %v1730 = vrcp.pop %v1729
    %v1731 = vmul.f32 %v1726, %v1730
    %1732 = vrot.lane.b32.xlu0 %v1663, 96
    %v1733 = vpop.permute.xlu0 %1732
    %v1736 = vsel %vm345, %v1731, 0
    %1738 = vmatprep.subr.mxu0 0.0
    %1739 = vmatpush1.msra.mxu0 0.0
    %1740 = vmatprep.subr.mxu0 0.0
    %1741 = vmatpush1.msra.mxu0 0.0
    %1742 = vmatprep.subr.mxu0 0.0
    %1743 = vmatpush1.msra.mxu0 0.0
    %1744 = vmatprep.subr.mxu0 0.0
    %1745 = vmatpush1.msra.mxu0 0.0
    %1746 = vmatprep.subr.mxu0 0.0
    %1747 = vmatpush1.msra.mxu0 0.0
    %1748 = vmatprep.subr.mxu0 0.0
    %1749 = vmatpush1.msra.mxu0 0.0
    %1750 = vmatprep.subr.mxu0 0.0
    %1751 = vmatpush1.msra.mxu0 0.0
    %1752 = vmatprep.subr.mxu0 0.0
    %1753 = vmatpush1.msra.mxu0 0.0
    %1754 = vmatprep.subr.mxu0 0.0
    %1755 = vmatpush1.msra.mxu0 0.0
    %1756 = vmatprep.subr.mxu0 0.0
    %1757 = vmatpush1.msra.mxu0 0.0
    %1758 = vmatprep.subr.mxu0 0.0
    %1759 = vmatpush1.msra.mxu0 0.0
    %1760 = vmatprep.subr.mxu0 0.0
    %1761 = vmatpush1.msra.mxu0 0.0
    %1762 = vmatprep.subr.mxu0 0.0
    %1763 = vmatpush1.msra.mxu0 0.0
    %1764 = vmatprep.subr.mxu0 0.0
    %1765 = vmatpush1.msra.mxu0 0.0
    %1766 = vmatprep.subr.mxu0 0.0
    %1767 = vmatpush1.msra.mxu0 0.0
    %1768 = vmatprep.subr.mxu0 0.0
    %1769 = vmatpush1.msra.mxu0 %v1663
    %1770 = vmatprep.subr.mxu0 0.0
    %1771 = vmatpush2.msra.mxu0 0.0
    %1772 = vmatprep.subr.mxu0 0.0
    %1773 = vmatpush2.msra.mxu0 0.0
    %1774 = vmatprep.subr.mxu0 0.0
    %1775 = vmatpush2.msra.mxu0 0.0
    %1776 = vmatprep.subr.mxu0 0.0
    %1777 = vmatpush2.msra.mxu0 0.0
    %1778 = vmatprep.subr.mxu0 0.0
    %1779 = vmatpush2.msra.mxu0 0.0
    %1780 = vmatprep.subr.mxu0 0.0
    %1781 = vmatpush2.msra.mxu0 0.0
    %1782 = vmatprep.subr.mxu0 0.0
    %1783 = vmatpush2.msra.mxu0 0.0
    %1784 = vmatprep.subr.mxu0 0.0
    %1785 = vmatpush2.msra.mxu0 0.0
    %1786 = vmatprep.subr.mxu0 0.0
    %1787 = vmatpush2.msra.mxu0 0.0
    %1788 = vmatprep.subr.mxu0 0.0
    %1789 = vmatpush2.msra.mxu0 0.0
    %1790 = vmatprep.subr.mxu0 0.0
    %1791 = vmatpush2.msra.mxu0 0.0
    %1792 = vmatprep.subr.mxu0 0.0
    %1793 = vmatpush2.msra.mxu0 0.0
    %1794 = vmatprep.subr.mxu0 0.0
    %1795 = vmatpush2.msra.mxu0 0.0
    %1796 = vmatprep.subr.mxu0 0.0
    %1797 = vmatpush2.msra.mxu0 0.0
    %1798 = vmatprep.subr.mxu0 0.0
    %1799 = vmatpush2.msra.mxu0 0.0
    %1800 = vmatprep.subr.mxu0 0.0
    %1801 = vmatpush2.msra.mxu0 0.0
    %1802 = vmatprep.mubr.f32.mxu0 0.0
    %1803 = vmatmul.mubr.f32.gmra.mxu0 %v1736
    %v1804 = vpop.f32.mrf.mxu0
    %v1805 = vadd.f32 %v1733, %v1804
    %v1806 = vpop.f32.mrf.mxu0
    %1807 = vdwg.mxu0
    %v1808 = vld [vmem:[%s10] sm:$0xff]
    %v1809 = vld [vmem:[%s10 + $0x8] sm:$0xff]
    %v1810 = vld [vmem:[%s10 + $0x10] sm:$0xff]
    %v1811 = vld [vmem:[%s10 + $0x18] sm:$0xff]
    %v1812 = vld [vmem:[%s11] sm:$0x1]
    %v1813 = vld [vmem:[%s12] sm:$0x7f]
    %v1814 = vld [vmem:[%s13] sm:$0x1]
    %v1816 = vlaneseq
    %v1817 = vshrl.u32 %v1816, 7
    %v1818 = vsub.s32 0, %v1817
    %v1819 = vrot.slane %v1812, %v1818
    %v1822 = vsel %vm704, %v1805, 0
    %1824 = vmatprep.subr.mxu0 0.0
    %1825 = vmatpush1.msra.mxu0 0.0
    %1826 = vmatprep.subr.mxu0 0.0
    %1827 = vmatpush1.msra.mxu0 0.0
    %1828 = vmatprep.subr.mxu0 0.0
    %1829 = vmatpush1.msra.mxu0 0.0
    %1830 = vmatprep.subr.mxu0 0.0
    %1831 = vmatpush1.msra.mxu0 0.0
    %1832 = vmatprep.subr.mxu0 0.0
    %1833 = vmatpush1.msra.mxu0 0.0
    %1834 = vmatprep.subr.mxu0 0.0
    %1835 = vmatpush1.msra.mxu0 0.0
    %1836 = vmatprep.subr.mxu0 0.0
    %1837 = vmatpush1.msra.mxu0 0.0
    %1838 = vmatprep.subr.mxu0 0.0
    %1839 = vmatpush1.msra.mxu0 0.0
    %1840 = vmatprep.subr.mxu0 0.0
    %1841 = vmatpush1.msra.mxu0 0.0
    %1842 = vmatprep.subr.mxu0 0.0
    %1843 = vmatpush1.msra.mxu0 0.0
    %1844 = vmatprep.subr.mxu0 0.0
    %1845 = vmatpush1.msra.mxu0 0.0
    %1846 = vmatprep.subr.mxu0 0.0
    %1847 = vmatpush1.msra.mxu0 0.0
    %1848 = vmatprep.subr.mxu0 0.0
    %1849 = vmatpush1.msra.mxu0 %v1811
    %1850 = vmatprep.subr.mxu0 0.0
    %1851 = vmatpush1.msra.mxu0 %v1810
    %1852 = vmatprep.subr.mxu0 0.0
    %1853 = vmatpush1.msra.mxu0 %v1809
    %1854 = vmatprep.subr.mxu0 0.0
    %1855 = vmatpush1.msra.mxu0 %v1808
    %1856 = vmatprep.subr.mxu0 0.0
    %1857 = vmatpush2.msra.mxu0 0.0
    %1858 = vmatprep.subr.mxu0 0.0
    %1859 = vmatpush2.msra.mxu0 0.0
    %1860 = vmatprep.subr.mxu0 0.0
    %1861 = vmatpush2.msra.mxu0 0.0
    %1862 = vmatprep.subr.mxu0 0.0
    %1863 = vmatpush2.msra.mxu0 0.0
    %1864 = vmatprep.subr.mxu0 0.0
    %1865 = vmatpush2.msra.mxu0 0.0
    %1866 = vmatprep.subr.mxu0 0.0
    %1867 = vmatpush2.msra.mxu0 0.0
    %1868 = vmatprep.subr.mxu0 0.0
    %1869 = vmatpush2.msra.mxu0 0.0
    %1870 = vmatprep.subr.mxu0 0.0
    %1871 = vmatpush2.msra.mxu0 0.0
    %1872 = vmatprep.subr.mxu0 0.0
    %1873 = vmatpush2.msra.mxu0 0.0
    %1874 = vmatprep.subr.mxu0 0.0
    %1875 = vmatpush2.msra.mxu0 0.0
    %1876 = vmatprep.subr.mxu0 0.0
    %1877 = vmatpush2.msra.mxu0 0.0
    %1878 = vmatprep.subr.mxu0 0.0
    %1879 = vmatpush2.msra.mxu0 0.0
    %1880 = vmatprep.subr.mxu0 0.0
    %1881 = vmatpush2.msra.mxu0 0.0
    %1882 = vmatprep.subr.mxu0 0.0
    %1883 = vmatpush2.msra.mxu0 0.0
    %1884 = vmatprep.subr.mxu0 0.0
    %1885 = vmatpush2.msra.mxu0 0.0
    %1886 = vmatprep.subr.mxu0 0.0
    %1887 = vmatpush2.msra.mxu0 0.0
    %1888 = vmatprep.mubr.f32.mxu0 0.0
    %1889 = vmatmul.mubr.f32.gmra.mxu0 %v1822
    %v1890 = vpop.f32.mrf.mxu0
    %v1891 = vadd.f32 %v1819, %v1890
    %v1892 = vpop.f32.mrf.mxu0
    %1893 = vdwg.mxu0
    %1895 = vrot.lane.b32.xlu0 %v1891, 72
    %v1896 = vpop.permute.xlu0 %1895
    %1898 = vxpose.xlu0.b32.start [1/16] %v1896, 128
    %1899 = vxpose.xlu0.b32.cont [2/16] 0.0, 128
    %1900 = vxpose.xlu0.b32.cont [3/16] 0.0, 128
    %1901 = vxpose.xlu0.b32.cont [4/16] 0.0, 128
    %1902 = vxpose.xlu0.b32.cont [5/16] 0.0, 128
    %1903 = vxpose.xlu0.b32.cont [6/16] 0.0, 128
    %1904 = vxpose.xlu0.b32.cont [7/16] 0.0, 128
    %1905 = vxpose.xlu0.b32.cont [8/16] 0.0, 128
    %1906 = vxpose.xlu0.b32.cont [9/16] 0.0, 128
    %1907 = vxpose.xlu0.b32.cont [10/16] 0.0, 128
    %1908 = vxpose.xlu0.b32.cont [11/16] 0.0, 128
    %1909 = vxpose.xlu0.b32.cont [12/16] 0.0, 128
    %1910 = vxpose.xlu0.b32.cont [13/16] 0.0, 128
    %1911 = vxpose.xlu0.b32.cont [14/16] 0.0, 128
    %1912 = vxpose.xlu0.b32.cont [15/16] 0.0, 128
    %1913 = vxpose.xlu0.b32.end [16/16] 0.0, 128
    %v1914 = vpop.trf.xlu0
    %v1915 = vpop.trf.xlu0
    %v1916 = vpop.trf.xlu0
    %v1917 = vpop.trf.xlu0
    %v1918 = vpop.trf.xlu0
    %v1919 = vpop.trf.xlu0
    %v1920 = vpop.trf.xlu0
    %v1921 = vpop.trf.xlu0
    %v1922 = vpop.trf.xlu0
    %v1923 = vpop.trf.xlu0
    %v1924 = vpop.trf.xlu0
    %v1925 = vpop.trf.xlu0
    %v1926 = vpop.trf.xlu0
    %v1927 = vpop.trf.xlu0
    %v1928 = vpop.trf.xlu0
    %v1929 = vpop.trf.xlu0
    %1930 = vset.pattern.permute.xlu0 57
    %1931 = vperm.xlu0 %1930, %v1891
    %v1932 = vpop.permute.xlu0 %1931
    %v1934 = vlaneseq
    %v1935 = vshrl.u32 %v1934, 7
    %v1936 = vsub.s32 0, %v1935
    %v1937 = vrot.slane %v1914, %v1936
    %v1938 = vadd.f32 %v1932, %v1937
    %1939 = vset.pattern.permute.xlu0 59
    %1940 = vperm.xlu0 %1939, %v1891
    %v1941 = vpop.permute.xlu0 %1940
    %v1943 = vlaneseq
    %v1944 = vshrl.u32 %v1943, 7
    %v1945 = vsub.s32 2, %v1944
    %v1946 = vrot.slane %v1914, %v1945
    %v1947 = vadd.f32 %v1941, %v1946
    %1948 = vset.pattern.permute.xlu0 61
    %1949 = vperm.xlu0 %1948, %v1891
    %v1950 = vpop.permute.xlu0 %1949
    %v1952 = vlaneseq
    %v1953 = vshrl.u32 %v1952, 7
    %v1954 = vsub.s32 4, %v1953
    %v1955 = vrot.slane %v1914, %v1954
    %v1956 = vadd.f32 %v1950, %v1955
    %1957 = vset.pattern.permute.xlu0 63
    %1958 = vperm.xlu0 %1957, %v1891
    %v1959 = vpop.permute.xlu0 %1958
    %v1961 = vlaneseq
    %v1962 = vshrl.u32 %v1961, 7
    %v1963 = vsub.s32 6, %v1962
    %v1964 = vrot.slane %v1914, %v1963
    %v1965 = vadd.f32 %v1959, %v1964
    %v1966 = vmul.f32 %v1938, %v1938
    %v1967 = vmul.f32 %v1947, %v1947
    %v1968 = vmul.f32 %v1956, %v1956
    %v1969 = vmul.f32 %v1965, %v1965
    %v1970 = vmul.f32 %v1938, %v1966
    %v1971 = vmul.f32 %v1947, %v1967
    %v1972 = vmul.f32 %v1956, %v1968
    %v1973 = vmul.f32 %v1965, %v1969
    %v1974 = vmul.f32 %v1970, 0.044715
    %v1975 = vmul.f32 %v1971, 0.044715
    %v1976 = vmul.f32 %v1972, 0.044715
    %v1977 = vmul.f32 %v1973, 0.044715
    %v1978 = vadd.f32 %v1938, %v1974
    %v1979 = vadd.f32 %v1947, %v1975
    %v1980 = vadd.f32 %v1956, %v1976
    %v1981 = vadd.f32 %v1965, %v1977
    %v1982 = vmul.f32 %v1978, 0.7978846
    %v1983 = vmul.f32 %v1979, 0.7978846
    %v1984 = vmul.f32 %v1980, 0.7978846
    %v1985 = vmul.f32 %v1981, 0.7978846
    %v1986 = vtanh.pop %v1982
    %v1987 = vtanh.pop %v1983
    %v1988 = vtanh.pop %v1984
    %v1989 = vtanh.pop %v1985
    %v1990 = vadd.f32 %v1986, 1.0
    %v1991 = vadd.f32 %v1987, 1.0
    %v1992 = vadd.f32 %v1988, 1.0
    %v1993 = vadd.f32 %v1989, 1.0
    %v1994 = vmul.f32 %v1990, 0.5
    %v1995 = vmul.f32 %v1991, 0.5
    %v1996 = vmul.f32 %v1992, 0.5
    %v1997 = vmul.f32 %v1993, 0.5
    %v1998 = vmul.f32 %v1938, %v1994
    %v1999 = vmul.f32 %v1947, %v1995
    %v2000 = vmul.f32 %v1956, %v1996
    %v2001 = vmul.f32 %v1965, %v1997
    %v2002 = vsel %vm340, %v1998, -1e+30
    %v2003 = vsel %vm340, %v1999, -1e+30
    %v2004 = vsel %vm340, %v2000, -1e+30
    %v2005 = vsel %vm340, %v2001, -1e+30
    %v2006 = vsel %vm345, %v2002, -inf
    %2007 = vmax.xlane.f32.xlu0 %v2006
    %v2008 = vpop.xlane.xlu0 %2007
    %v2009 = vsel %vm345, %v2003, -inf
    %2010 = vmax.xlane.f32.xlu0 %v2009
    %v2011 = vpop.xlane.xlu0 %2010
    %v2012 = vsel %vm345, %v2004, -inf
    %2013 = vmax.xlane.f32.xlu0 %v2012
    %v2014 = vpop.xlane.xlu0 %2013
    %v2015 = vsel %vm345, %v2005, -inf
    %2016 = vmax.xlane.f32.xlu0 %v2015
    %v2017 = vpop.xlane.xlu0 %2016
    %v2018 = vsub.f32 %v2002, %v2008
    %v2019 = vsub.f32 %v2003, %v2011
    %v2020 = vsub.f32 %v2004, %v2014
    %v2021 = vsub.f32 %v2005, %v2017
    %v2022 = vmul.f32 %v2018, 1.442695
    %v2023 = vpow.pop %v2022
    %v2024 = vmul.f32 %v2019, 1.442695
    %v2025 = vpow.pop %v2024
    %v2026 = vmul.f32 %v2020, 1.442695
    %v2027 = vpow.pop %v2026
    %v2028 = vmul.f32 %v2021, 1.442695
    %v2029 = vpow.pop %v2028
    %v2030 = vsel %vm345, %v2023, 0.0
    %2031 = vadd.xlane.f32.xlu0 %v2030
    %v2032 = vpop.xlane.xlu0 %2031
    %v2033 = vsel %vm345, %v2025, 0.0
    %2034 = vadd.xlane.f32.xlu0 %v2033
    %v2035 = vpop.xlane.xlu0 %2034
    %v2036 = vsel %vm345, %v2027, 0.0
    %2037 = vadd.xlane.f32.xlu0 %v2036
    %v2038 = vpop.xlane.xlu0 %2037
    %v2039 = vsel %vm345, %v2029, 0.0
    %2040 = vadd.xlane.f32.xlu0 %v2039
    %v2041 = vpop.xlane.xlu0 %2040
    %v2042 = vrcp.pop %v2032
    %v2043 = vrcp.pop %v2035
    %v2044 = vrcp.pop %v2038
    %v2045 = vrcp.pop %v2041
    %v2046 = vmul.f32 %v2023, %v2042
    %v2047 = vmul.f32 %v2025, %v2043
    %v2048 = vmul.f32 %v2027, %v2044
    %v2049 = vmul.f32 %v2029, %v2045
    %2050 = vrot.lane.b32.xlu0 %v1891, 121
    %v2051 = vpop.permute.xlu0 %2050
    %v2054 = vsel %vm345, %v2047, 0
    %2056 = vmatprep.subr.mxu0 0.0
    %2057 = vmatpush1.msra.mxu0 0.0
    %2058 = vmatprep.subr.mxu0 0.0
    %2059 = vmatpush1.msra.mxu0 0.0
    %2060 = vmatprep.subr.mxu0 0.0
    %2061 = vmatpush1.msra.mxu0 0.0
    %2062 = vmatprep.subr.mxu0 0.0
    %2063 = vmatpush1.msra.mxu0 0.0
    %2064 = vmatprep.subr.mxu0 0.0
    %2065 = vmatpush1.msra.mxu0 0.0
    %2066 = vmatprep.subr.mxu0 0.0
    %2067 = vmatpush1.msra.mxu0 0.0
    %2068 = vmatprep.subr.mxu0 0.0
    %2069 = vmatpush1.msra.mxu0 0.0
    %2070 = vmatprep.subr.mxu0 0.0
    %2071 = vmatpush1.msra.mxu0 0.0
    %2072 = vmatprep.subr.mxu0 0.0
    %2073 = vmatpush1.msra.mxu0 0.0
    %2074 = vmatprep.subr.mxu0 0.0
    %2075 = vmatpush1.msra.mxu0 0.0
    %2076 = vmatprep.subr.mxu0 0.0
    %2077 = vmatpush1.msra.mxu0 0.0
    %2078 = vmatprep.subr.mxu0 0.0
    %2079 = vmatpush1.msra.mxu0 0.0
    %2080 = vmatprep.subr.mxu0 0.0
    %2081 = vmatpush1.msra.mxu0 0.0
    %2082 = vmatprep.subr.mxu0 0.0
    %2083 = vmatpush1.msra.mxu0 0.0
    %2084 = vmatprep.subr.mxu0 0.0
    %2085 = vmatpush1.msra.mxu0 0.0
    %2086 = vmatprep.subr.mxu0 0.0
    %2087 = vmatpush1.msra.mxu0 %v2051
    %2088 = vmatprep.subr.mxu0 0.0
    %2089 = vmatpush2.msra.mxu0 0.0
    %2090 = vmatprep.subr.mxu0 0.0
    %2091 = vmatpush2.msra.mxu0 0.0
    %2092 = vmatprep.subr.mxu0 0.0
    %2093 = vmatpush2.msra.mxu0 0.0
    %2094 = vmatprep.subr.mxu0 0.0
    %2095 = vmatpush2.msra.mxu0 0.0
    %2096 = vmatprep.subr.mxu0 0.0
    %2097 = vmatpush2.msra.mxu0 0.0
    %2098 = vmatprep.subr.mxu0 0.0
    %2099 = vmatpush2.msra.mxu0 0.0
    %2100 = vmatprep.subr.mxu0 0.0
    %2101 = vmatpush2.msra.mxu0 0.0
    %2102 = vmatprep.subr.mxu0 0.0
    %2103 = vmatpush2.msra.mxu0 0.0
    %2104 = vmatprep.subr.mxu0 0.0
    %2105 = vmatpush2.msra.mxu0 0.0
    %2106 = vmatprep.subr.mxu0 0.0
    %2107 = vmatpush2.msra.mxu0 0.0
    %2108 = vmatprep.subr.mxu0 0.0
    %2109 = vmatpush2.msra.mxu0 0.0
    %2110 = vmatprep.subr.mxu0 0.0
    %2111 = vmatpush2.msra.mxu0 0.0
    %2112 = vmatprep.subr.mxu0 0.0
    %2113 = vmatpush2.msra.mxu0 0.0
    %2114 = vmatprep.subr.mxu0 0.0
    %2115 = vmatpush2.msra.mxu0 0.0
    %2116 = vmatprep.subr.mxu0 0.0
    %2117 = vmatpush2.msra.mxu0 0.0
    %2118 = vmatprep.subr.mxu0 0.0
    %2119 = vmatpush2.msra.mxu0 0.0
    %2120 = vmatprep.mubr.f32.mxu0 0.0
    %2121 = vmatmul.mubr.f32.gmra.mxu0 %v2054
    %v2122 = vpop.f32.mrf.mxu0
    %v2123 = vadd.f32 0.0, %v2122
    %v2124 = vpop.f32.mrf.mxu0
    %2125 = vdwg.mxu0
    %2126 = vrot.lane.b32.xlu0 %v1891, 114
    %v2127 = vpop.permute.xlu0 %2126
    %v2130 = vsel %vm345, %v2048, 0
    %2132 = vmatprep.subr.mxu0 0.0
    %2133 = vmatpush1.msra.mxu0 0.0
    %2134 = vmatprep.subr.mxu0 0.0
    %2135 = vmatpush1.msra.mxu0 0.0
    %2136 = vmatprep.subr.mxu0 0.0
    %2137 = vmatpush1.msra.mxu0 0.0
    %2138 = vmatprep.subr.mxu0 0.0
    %2139 = vmatpush1.msra.mxu0 0.0
    %2140 = vmatprep.subr.mxu0 0.0
    %2141 = vmatpush1.msra.mxu0 0.0
    %2142 = vmatprep.subr.mxu0 0.0
    %2143 = vmatpush1.msra.mxu0 0.0
    %2144 = vmatprep.subr.mxu0 0.0
    %2145 = vmatpush1.msra.mxu0 0.0
    %2146 = vmatprep.subr.mxu0 0.0
    %2147 = vmatpush1.msra.mxu0 0.0
    %2148 = vmatprep.subr.mxu0 0.0
    %2149 = vmatpush1.msra.mxu0 0.0
    %2150 = vmatprep.subr.mxu0 0.0
    %2151 = vmatpush1.msra.mxu0 0.0
    %2152 = vmatprep.subr.mxu0 0.0
    %2153 = vmatpush1.msra.mxu0 0.0
    %2154 = vmatprep.subr.mxu0 0.0
    %2155 = vmatpush1.msra.mxu0 0.0
    %2156 = vmatprep.subr.mxu0 0.0
    %2157 = vmatpush1.msra.mxu0 0.0
    %2158 = vmatprep.subr.mxu0 0.0
    %2159 = vmatpush1.msra.mxu0 0.0
    %2160 = vmatprep.subr.mxu0 0.0
    %2161 = vmatpush1.msra.mxu0 0.0
    %2162 = vmatprep.subr.mxu0 0.0
    %2163 = vmatpush1.msra.mxu0 %v2127
    %2164 = vmatprep.subr.mxu0 0.0
    %2165 = vmatpush2.msra.mxu0 0.0
    %2166 = vmatprep.subr.mxu0 0.0
    %2167 = vmatpush2.msra.mxu0 0.0
    %2168 = vmatprep.subr.mxu0 0.0
    %2169 = vmatpush2.msra.mxu0 0.0
    %2170 = vmatprep.subr.mxu0 0.0
    %2171 = vmatpush2.msra.mxu0 0.0
    %2172 = vmatprep.subr.mxu0 0.0
    %2173 = vmatpush2.msra.mxu0 0.0
    %2174 = vmatprep.subr.mxu0 0.0
    %2175 = vmatpush2.msra.mxu0 0.0
    %2176 = vmatprep.subr.mxu0 0.0
    %2177 = vmatpush2.msra.mxu0 0.0
    %2178 = vmatprep.subr.mxu0 0.0
    %2179 = vmatpush2.msra.mxu0 0.0
    %2180 = vmatprep.subr.mxu0 0.0
    %2181 = vmatpush2.msra.mxu0 0.0
    %2182 = vmatprep.subr.mxu0 0.0
    %2183 = vmatpush2.msra.mxu0 0.0
    %2184 = vmatprep.subr.mxu0 0.0
    %2185 = vmatpush2.msra.mxu0 0.0
    %2186 = vmatprep.subr.mxu0 0.0
    %2187 = vmatpush2.msra.mxu0 0.0
    %2188 = vmatprep.subr.mxu0 0.0
    %2189 = vmatpush2.msra.mxu0 0.0
    %2190 = vmatprep.subr.mxu0 0.0
    %2191 = vmatpush2.msra.mxu0 0.0
    %2192 = vmatprep.subr.mxu0 0.0
    %2193 = vmatpush2.msra.mxu0 0.0
    %2194 = vmatprep.subr.mxu0 0.0
    %2195 = vmatpush2.msra.mxu0 0.0
    %2196 = vmatprep.mubr.f32.mxu0 0.0
    %2197 = vmatmul.mubr.f32.gmra.mxu0 %v2130
    %v2198 = vpop.f32.mrf.mxu0
    %v2199 = vadd.f32 0.0, %v2198
    %v2200 = vpop.f32.mrf.mxu0
    %2201 = vdwg.mxu0
    %2202 = vrot.lane.b32.xlu0 %v1891, 107
    %v2203 = vpop.permute.xlu0 %2202
    %v2206 = vsel %vm345, %v2049, 0
    %2208 = vmatprep.subr.mxu0 0.0
    %2209 = vmatpush1.msra.mxu0 0.0
    %2210 = vmatprep.subr.mxu0 0.0
    %2211 = vmatpush1.msra.mxu0 0.0
    %2212 = vmatprep.subr.mxu0 0.0
    %2213 = vmatpush1.msra.mxu0 0.0
    %2214 = vmatprep.subr.mxu0 0.0
    %2215 = vmatpush1.msra.mxu0 0.0
    %2216 = vmatprep.subr.mxu0 0.0
    %2217 = vmatpush1.msra.mxu0 0.0
    %2218 = vmatprep.subr.mxu0 0.0
    %2219 = vmatpush1.msra.mxu0 0.0
    %2220 = vmatprep.subr.mxu0 0.0
    %2221 = vmatpush1.msra.mxu0 0.0
    %2222 = vmatprep.subr.mxu0 0.0
    %2223 = vmatpush1.msra.mxu0 0.0
    %2224 = vmatprep.subr.mxu0 0.0
    %2225 = vmatpush1.msra.mxu0 0.0
    %2226 = vmatprep.subr.mxu0 0.0
    %2227 = vmatpush1.msra.mxu0 0.0
    %2228 = vmatprep.subr.mxu0 0.0
    %2229 = vmatpush1.msra.mxu0 0.0
    %2230 = vmatprep.subr.mxu0 0.0
    %2231 = vmatpush1.msra.mxu0 0.0
    %2232 = vmatprep.subr.mxu0 0.0
    %2233 = vmatpush1.msra.mxu0 0.0
    %2234 = vmatprep.subr.mxu0 0.0
    %2235 = vmatpush1.msra.mxu0 0.0
    %2236 = vmatprep.subr.mxu0 0.0
    %2237 = vmatpush1.msra.mxu0 0.0
    %2238 = vmatprep.subr.mxu0 0.0
    %2239 = vmatpush1.msra.mxu0 %v2203
    %2240 = vmatprep.subr.mxu0 0.0
    %2241 = vmatpush2.msra.mxu0 0.0
    %2242 = vmatprep.subr.mxu0 0.0
    %2243 = vmatpush2.msra.mxu0 0.0
    %2244 = vmatprep.subr.mxu0 0.0
    %2245 = vmatpush2.msra.mxu0 0.0
    %2246 = vmatprep.subr.mxu0 0.0
    %2247 = vmatpush2.msra.mxu0 0.0
    %2248 = vmatprep.subr.mxu0 0.0
    %2249 = vmatpush2.msra.mxu0 0.0
    %2250 = vmatprep.subr.mxu0 0.0
    %2251 = vmatpush2.msra.mxu0 0.0
    %2252 = vmatprep.subr.mxu0 0.0
    %2253 = vmatpush2.msra.mxu0 0.0
    %2254 = vmatprep.subr.mxu0 0.0
    %2255 = vmatpush2.msra.mxu0 0.0
    %2256 = vmatprep.subr.mxu0 0.0
    %2257 = vmatpush2.msra.mxu0 0.0
    %2258 = vmatprep.subr.mxu0 0.0
    %2259 = vmatpush2.msra.mxu0 0.0
    %2260 = vmatprep.subr.mxu0 0.0
    %2261 = vmatpush2.msra.mxu0 0.0
    %2262 = vmatprep.subr.mxu0 0.0
    %2263 = vmatpush2.msra.mxu0 0.0
    %2264 = vmatprep.subr.mxu0 0.0
    %2265 = vmatpush2.msra.mxu0 0.0
    %2266 = vmatprep.subr.mxu0 0.0
    %2267 = vmatpush2.msra.mxu0 0.0
    %2268 = vmatprep.subr.mxu0 0.0
    %2269 = vmatpush2.msra.mxu0 0.0
    %2270 = vmatprep.subr.mxu0 0.0
    %2271 = vmatpush2.msra.mxu0 0.0
    %2272 = vmatprep.mubr.f32.mxu0 0.0
    %2273 = vmatmul.mubr.f32.gmra.mxu0 %v2206
    %v2274 = vpop.f32.mrf.mxu0
    %v2275 = vadd.f32 0.0, %v2274
    %v2276 = vpop.f32.mrf.mxu0
    %2277 = vdwg.mxu0
    %2278 = vrot.lane.b32.xlu0 %v1891, 100
    %v2279 = vpop.permute.xlu0 %2278
    %v2282 = vsel %vm345, %v2046, 0
    %2284 = vmatprep.subr.mxu0 0.0
    %2285 = vmatpush1.msra.mxu0 0.0
    %2286 = vmatprep.subr.mxu0 0.0
    %2287 = vmatpush1.msra.mxu0 0.0
    %2288 = vmatprep.subr.mxu0 0.0
    %2289 = vmatpush1.msra.mxu0 0.0
    %2290 = vmatprep.subr.mxu0 0.0
    %2291 = vmatpush1.msra.mxu0 0.0
    %2292 = vmatprep.subr.mxu0 0.0
    %2293 = vmatpush1.msra.mxu0 0.0
    %2294 = vmatprep.subr.mxu0 0.0
    %2295 = vmatpush1.msra.mxu0 0.0
    %2296 = vmatprep.subr.mxu0 0.0
    %2297 = vmatpush1.msra.mxu0 0.0
    %2298 = vmatprep.subr.mxu0 0.0
    %2299 = vmatpush1.msra.mxu0 0.0
    %2300 = vmatprep.subr.mxu0 0.0
    %2301 = vmatpush1.msra.mxu0 0.0
    %2302 = vmatprep.subr.mxu0 0.0
    %2303 = vmatpush1.msra.mxu0 0.0
    %2304 = vmatprep.subr.mxu0 0.0
    %2305 = vmatpush1.msra.mxu0 0.0
    %2306 = vmatprep.subr.mxu0 0.0
    %2307 = vmatpush1.msra.mxu0 0.0
    %2308 = vmatprep.subr.mxu0 0.0
    %2309 = vmatpush1.msra.mxu0 0.0
    %2310 = vmatprep.subr.mxu0 0.0
    %2311 = vmatpush1.msra.mxu0 0.0
    %2312 = vmatprep.subr.mxu0 0.0
    %2313 = vmatpush1.msra.mxu0 0.0
    %2314 = vmatprep.subr.mxu0 0.0
    %2315 = vmatpush1.msra.mxu0 %v1891
    %2316 = vmatprep.subr.mxu0 0.0
    %2317 = vmatpush2.msra.mxu0 0.0
    %2318 = vmatprep.subr.mxu0 0.0
    %2319 = vmatpush2.msra.mxu0 0.0
    %2320 = vmatprep.subr.mxu0 0.0
    %2321 = vmatpush2.msra.mxu0 0.0
    %2322 = vmatprep.subr.mxu0 0.0
    %2323 = vmatpush2.msra.mxu0 0.0
    %2324 = vmatprep.subr.mxu0 0.0
    %2325 = vmatpush2.msra.mxu0 0.0
    %2326 = vmatprep.subr.mxu0 0.0
    %2327 = vmatpush2.msra.mxu0 0.0
    %2328 = vmatprep.subr.mxu0 0.0
    %2329 = vmatpush2.msra.mxu0 0.0
    %2330 = vmatprep.subr.mxu0 0.0
    %2331 = vmatpush2.msra.mxu0 0.0
    %2332 = vmatprep.subr.mxu0 0.0
    %2333 = vmatpush2.msra.mxu0 0.0
    %2334 = vmatprep.subr.mxu0 0.0
    %2335 = vmatpush2.msra.mxu0 0.0
    %2336 = vmatprep.subr.mxu0 0.0
    %2337 = vmatpush2.msra.mxu0 0.0
    %2338 = vmatprep.subr.mxu0 0.0
    %2339 = vmatpush2.msra.mxu0 0.0
    %2340 = vmatprep.subr.mxu0 0.0
    %2341 = vmatpush2.msra.mxu0 0.0
    %2342 = vmatprep.subr.mxu0 0.0
    %2343 = vmatpush2.msra.mxu0 0.0
    %2344 = vmatprep.subr.mxu0 0.0
    %2345 = vmatpush2.msra.mxu0 0.0
    %2346 = vmatprep.subr.mxu0 0.0
    %2347 = vmatpush2.msra.mxu0 0.0
    %2348 = vmatprep.mubr.f32.mxu0 0.0
    %2349 = vmatmul.mubr.f32.gmra.mxu0 %v2282
    %v2350 = vpop.f32.mrf.mxu0
    %v2351 = vadd.f32 %v2279, %v2350
    %v2352 = vpop.f32.mrf.mxu0
    %2353 = vdwg.mxu0
    %v2354 = vadd.f32 %v2351, %v2123
    %2355 = vrot.lane.b32.xlu0 %v1891, 93
    %v2356 = vpop.permute.xlu0 %2355
    %v2358 = vadd.f32 %v2354, %v2356
    %v2359 = vadd.f32 %v2358, %v2199
    %2360 = vrot.lane.b32.xlu0 %v1891, 86
    %v2361 = vpop.permute.xlu0 %2360
    %v2363 = vadd.f32 %v2359, %v2361
    %v2364 = vadd.f32 %v2363, %v2275
    %2365 = vrot.lane.b32.xlu0 %v1891, 79
    %v2366 = vpop.permute.xlu0 %2365
    %v2368 = vadd.f32 %v2364, %v2366
    %v2369 = vmul.f32 %v2368, 0.25
    %v2371 = vlaneseq
    %v2372 = vshrl.u32 %v2371, 7
    %v2373 = vsub.s32 0, %v2372
    %v2374 = vrot.slane %v1814, %v2373
    %vm2376 = vcmask 56320
    %v2378 = vsel %vm2376, %v2369, 0
    %vm2380 = vcmask 1046528
    %v2382 = vsel %vm2380, %v1813, 0
    %2384 = vmatprep.subr.mxu0 0.0
    %2385 = vmatpush1.msra.mxu0 0.0
    %2386 = vmatprep.subr.mxu0 0.0
    %2387 = vmatpush1.msra.mxu0 0.0
    %2388 = vmatprep.subr.mxu0 0.0
    %2389 = vmatpush1.msra.mxu0 0.0
    %2390 = vmatprep.subr.mxu0 0.0
    %2391 = vmatpush1.msra.mxu0 0.0
    %2392 = vmatprep.subr.mxu0 0.0
    %2393 = vmatpush1.msra.mxu0 0.0
    %2394 = vmatprep.subr.mxu0 0.0
    %2395 = vmatpush1.msra.mxu0 0.0
    %2396 = vmatprep.subr.mxu0 0.0
    %2397 = vmatpush1.msra.mxu0 0.0
    %2398 = vmatprep.subr.mxu0 0.0
    %2399 = vmatpush1.msra.mxu0 0.0
    %2400 = vmatprep.subr.mxu0 0.0
    %2401 = vmatpush1.msra.mxu0 0.0
    %2402 = vmatprep.subr.mxu0 0.0
    %2403 = vmatpush1.msra.mxu0 0.0
    %2404 = vmatprep.subr.mxu0 0.0
    %2405 = vmatpush1.msra.mxu0 0.0
    %2406 = vmatprep.subr.mxu0 0.0
    %2407 = vmatpush1.msra.mxu0 0.0
    %2408 = vmatprep.subr.mxu0 0.0
    %2409 = vmatpush1.msra.mxu0 0.0
    %2410 = vmatprep.subr.mxu0 0.0
    %2411 = vmatpush1.msra.mxu0 0.0
    %2412 = vmatprep.subr.mxu0 0.0
    %2413 = vmatpush1.msra.mxu0 0.0
    %2414 = vmatprep.subr.mxu0 0.0
    %2415 = vmatpush1.msra.mxu0 %v2382
    %2416 = vmatprep.subr.mxu0 0.0
    %2417 = vmatpush2.msra.mxu0 0.0
    %2418 = vmatprep.subr.mxu0 0.0
    %2419 = vmatpush2.msra.mxu0 0.0
    %2420 = vmatprep.subr.mxu0 0.0
    %2421 = vmatpush2.msra.mxu0 0.0
    %2422 = vmatprep.subr.mxu0 0.0
    %2423 = vmatpush2.msra.mxu0 0.0
    %2424 = vmatprep.subr.mxu0 0.0
    %2425 = vmatpush2.msra.mxu0 0.0
    %2426 = vmatprep.subr.mxu0 0.0
    %2427 = vmatpush2.msra.mxu0 0.0
    %2428 = vmatprep.subr.mxu0 0.0
    %2429 = vmatpush2.msra.mxu0 0.0
    %2430 = vmatprep.subr.mxu0 0.0
    %2431 = vmatpush2.msra.mxu0 0.0
    %2432 = vmatprep.subr.mxu0 0.0
    %2433 = vmatpush2.msra.mxu0 0.0
    %2434 = vmatprep.subr.mxu0 0.0
    %2435 = vmatpush2.msra.mxu0 0.0
    %2436 = vmatprep.subr.mxu0 0.0
    %2437 = vmatpush2.msra.mxu0 0.0
    %2438 = vmatprep.subr.mxu0 0.0
    %2439 = vmatpush2.msra.mxu0 0.0
    %2440 = vmatprep.subr.mxu0 0.0
    %2441 = vmatpush2.msra.mxu0 0.0
    %2442 = vmatprep.subr.mxu0 0.0
    %2443 = vmatpush2.msra.mxu0 0.0
    %2444 = vmatprep.subr.mxu0 0.0
    %2445 = vmatpush2.msra.mxu0 0.0
    %2446 = vmatprep.subr.mxu0 0.0
    %2447 = vmatpush2.msra.mxu0 0.0
    %2448 = vmatprep.mubr.f32.mxu0 0.0
    %2449 = vmatmul.mubr.f32.gmra.mxu0 %v2378
    %v2450 = vpop.f32.mrf.mxu0
    %v2451 = vadd.f32 %v2374, %v2450
    %v2452 = vpop.f32.mrf.mxu0
    %2453 = vdwg.mxu0
    %v2454 = vsel %vm2376, %v2451, -inf
    %2455 = vmax.xlane.f32.xlu0 %v2454
    %v2456 = vpop.xlane.xlu0 %2455
    %v2457 = vsub.f32 %v2451, %v2456
    %v2458 = vmul.f32 %v2457, 1.442695
    %v2459 = vpow.pop %v2458
    %v2460 = vsel %vm2376, %v2459, 0.0
    %2461 = vadd.xlane.f32.xlu0 %v2460
    %v2462 = vpop.xlane.xlu0 %2461
    %v2463 = vrcp.pop %v2462
    %v2464 = vmul.f32 %v2459, %v2463
    %2465 = vst.msk [vmem:[#allocation2] sm:$0xff] %vm2376, %v2464
    // Predicated region
    $region58: #{gcnnet_forward.1} parent=1 // pred_check
      _
    $region59: #{gcnnet_forward.1} parent=1 // pred_check_branch
      %2467 = sbr.rel (0) target = $region61
    $region60: #{gcnnet_forward.1} parent=1 // pred_region
      %s2469 = ssub.s32 128, 128
      %2470 = vsyncadd [#allocation3], %s2469
      %s2472 = sshll.u32 [#allocation2], 4
      %s2473 = int_to_ptr.vmem [resolvable:$true] %s2472
      %2475 = dma.vmem_to_hbm [thread:$0]  %s2473, 128, %s14, [#allocation3]
    $region61: #{gcnnet_forward.1} parent=1 // pred_fallthru
      _
    // Predicated region
    $region62: #{gcnnet_forward.1} parent=1 // pred_check
      _
    $region63: #{gcnnet_forward.1} parent=1 // pred_check_branch
      %2477 = sbr.rel (0) target = $region65
    $region64: #{gcnnet_forward.1} parent=1 // pred_region
      %2478 = dma.done [#allocation3], 128
    $region65: #{gcnnet_forward.1} parent=1 // pred_fallthru
      _
    %2479 = vsyncpa [#allocation3], 1

</llo_original>
